<compile_context>
chip_gen: v5e
topology: v5e:2x2
jax: 0.10.0
libtpu: 0.0.40
codegen_flags: <defaults>
</compile_context>

<pallas_src>
import jax
import jax.numpy as jnp
from jax.experimental import pallas as pl
from jax.experimental.pallas import tpu as pltpu

_CMID_CHUNK = 256  # channel chunk of the BN'd intermediate (1024 -> 4 chunks)


def _block_kernel(x_ref, w1_ref, bias_ref, skip_ref, w2_ref, o_ref):
    # x_ref:    (Cin,  T)    f32  activation tile, channels-first
    # w1_ref:   (Cmid, Cin)  bf16 (BN scale folded into rows), VMEM-resident
    # bias_ref: (Cmid, 1)    f32  folded BN bias, VMEM-resident
    # skip_ref: (Cmid, T)    f32  residual tile
    # w2_ref:   (Cout, Cmid) bf16, VMEM-resident
    # o_ref:    (Cout, T)    f32
    x = x_ref[...].astype(jnp.bfloat16)
    cmid = w1_ref.shape[0]
    chunk = _CMID_CHUNK if cmid % _CMID_CHUNK == 0 else cmid
    acc = jnp.zeros(o_ref.shape, jnp.float32)
    for c in range(cmid // chunk):
        sl = slice(c * chunk, (c + 1) * chunk)
        # conv2d108 chunk: (chunk, Cin) bf16 @ (Cin, T) bf16 -> f32
        h = jnp.dot(w1_ref[sl, :], x, preferred_element_type=jnp.float32)
        # folded-BN bias + residual add + ReLU (f32 epilogue, exact residual)
        h = jnp.maximum(h + bias_ref[sl, :] + skip_ref[sl, :], 0.0)
        # conv2d109 chunk: (Cout, chunk) bf16 @ (chunk, T) bf16 -> f32 acc
        acc = acc + jnp.dot(w2_ref[:, sl], h.astype(jnp.bfloat16),
                            preferred_element_type=jnp.float32)
    o_ref[...] = acc.astype(o_ref.dtype)


def _round_up(x, m):
    return ((x + m - 1) // m) * m


def _pick_hw_tile(hw, target=512):
    """Spatial (lane) tile: multiple of 128, <= target, and giving >= 2 grid
    steps whenever the padded spatial extent spans more than one lane group."""
    cols = _round_up(hw, 128) // 128
    n_tiles = max(pl.cdiv(cols * 128, target), min(2, cols))
    return pl.cdiv(cols, n_tiles) * 128


def resnet_block(x356, x350, w1, gamma, beta, run_mean, run_var, w2, eps=1e-5):
    """x356: (N, 256, H, W), x350: (N, 1024, H, W) NCHW float32.
    w1: (1024, 256, 1, 1), w2: (256, 1024, 1, 1) (PyTorch conv weight layout).
    Returns conv2d109(relu(bn(conv2d108(x356)) + x350)): (N, 256, H, W) f32."""
    N, Cin, H, W = x356.shape
    Cmid = w1.shape[0]   # 1024
    Cout = w2.shape[0]   # 256
    HW = H * W

    t_hw = _pick_hw_tile(HW)
    HWp = _round_up(HW, t_hw)
    num_hw_tiles = HWp // t_hw

    # (N, C, H, W) -> (N, C, HW): layout-preserving; pad spatial axis if needed.
    x3 = x356.reshape(N, Cin, HW)
    s3 = x350.reshape(N, Cmid, HW)
    if HWp != HW:
        x3 = jnp.pad(x3, ((0, 0), (0, 0), (0, HWp - HW)))
        s3 = jnp.pad(s3, ((0, 0), (0, 0), (0, HWp - HW)))

    # Fold eval-mode BN into per-channel scale/bias; fold scale into w1's rows:
    # scale[o] * (W1 @ x)[o] == ((scale[:,None] * W1) @ x)[o].
    scale = gamma / jnp.sqrt(run_var + eps)                   # (Cmid,)
    bias = (beta - run_mean * scale).reshape(Cmid, 1)         # (Cmid, 1), stays f32
    w1m = (w1.reshape(Cmid, Cin) * scale[:, None]).astype(jnp.bfloat16)   # (1024, 256)
    w2m = w2.reshape(Cout, Cmid).astype(jnp.bfloat16)                      # (256, 1024)

    flops = 2 * N * HWp * Cmid * (Cin + Cout)
    bytes_accessed = (x3.size * 4 + s3.size * 4 + N * Cout * HWp * 4
                      + w1m.size * 2 + w2m.size * 2 + bias.size * 4)

    out = pl.pallas_call(
        _block_kernel,
        out_shape=jax.ShapeDtypeStruct((N, Cout, HWp), jnp.float32),
        grid_spec=pltpu.PrefetchScalarGridSpec(
            num_scalar_prefetch=0,
            grid=(N, num_hw_tiles),
            in_specs=[
                pl.BlockSpec((None, Cin, t_hw), lambda n, i: (n, 0, i)),   # x tile
                pl.BlockSpec((Cmid, Cin), lambda n, i: (0, 0)),            # w1 (BN-scaled), resident
                pl.BlockSpec((Cmid, 1), lambda n, i: (0, 0)),              # folded bias, resident
                pl.BlockSpec((None, Cmid, t_hw), lambda n, i: (n, 0, i)),  # skip tile
                pl.BlockSpec((Cout, Cmid), lambda n, i: (0, 0)),           # w2, resident
            ],
            out_specs=pl.BlockSpec((None, Cout, t_hw), lambda n, i: (n, 0, i)),
        ),
        compiler_params=pltpu.CompilerParams(
            dimension_semantics=("parallel", "parallel"),
            vmem_limit_bytes=32 * 1024 * 1024,
        ),
        cost_estimate=pl.CostEstimate(
            flops=flops, transcendentals=0, bytes_accessed=bytes_accessed),
    )(x3, w1m, bias, s3, w2m)

    if HWp != HW:
        out = out[..., :HW]       # drop padded spatial columns
    return out.reshape(N, Cout, H, W)


def _reference(x356, x350, w1, gamma, beta, run_mean, run_var, w2, eps=1e-5):
    Cmid, Cin = w1.shape[0], w1.shape[1]
    Cout = w2.shape[0]
    hi = jax.lax.Precision.HIGHEST
    h = jnp.einsum('oc,nchw->nohw', w1.reshape(Cmid, Cin), x356, precision=hi)
    inv_std = 1.0 / jnp.sqrt(run_var + eps)
    h = (h - run_mean[None, :, None, None]) * (gamma * inv_std)[None, :, None, None] \
        + beta[None, :, None, None]
    h = jnp.maximum(h + x350, 0.0)
    return jnp.einsum('oc,nchw->nohw', w2.reshape(Cout, Cmid), h, precision=hi)


if __name__ == "__main__":
    key = jax.random.PRNGKey(0)
    k = jax.random.split(key, 8)

    N, H, W = 1, 14, 14
    Cin, Cmid, Cout = 256, 1024, 256

    x356 = jax.random.normal(k[0], (N, Cin, H, W), dtype=jnp.float32)
    x350 = jax.random.normal(k[1], (N, Cmid, H, W), dtype=jnp.float32)

    # deterministic synthetic parameters (module __init__ shapes)
    w1 = 0.05 * jax.random.normal(k[2], (Cmid, Cin, 1, 1), dtype=jnp.float32)
    w2 = 0.05 * jax.random.normal(k[3], (Cout, Cmid, 1, 1), dtype=jnp.float32)
    gamma = 1.0 + 0.1 * jax.random.normal(k[4], (Cmid,), dtype=jnp.float32)
    beta = 0.1 * jax.random.normal(k[5], (Cmid,), dtype=jnp.float32)
    run_mean = 0.1 * jax.random.normal(k[6], (Cmid,), dtype=jnp.float32)
    run_var = jax.random.uniform(k[7], (Cmid,), dtype=jnp.float32, minval=0.5, maxval=1.5)

    out = jax.block_until_ready(
        resnet_block(x356, x350, w1, gamma, beta, run_mean, run_var, w2))
    assert out.shape == (N, Cout, H, W), out.shape

    ref = jax.block_until_ready(
        _reference(x356, x350, w1, gamma, beta, run_mean, run_var, w2))
    err = float(jnp.max(jnp.abs(out - ref)))
    # bf16 MXU operands with f32 accumulation / f32 residual -> loose-ish tolerance
    assert jnp.allclose(out, ref, rtol=2e-2, atol=2e-2), (
        "mismatch vs reference, max abs err = %f" % err)

    print("KERNEL_OK")
</pallas_src>

<mosaic_0001>
module attributes {stable_mosaic.version = 11 : i64} {
  func.func @_block_kernel(%arg0: i32, %arg1: i32, %arg2: memref<1x256x128xf32, #tpu.memory_space<vmem>>, %arg3: memref<1024x256xbf16, #tpu.memory_space<vmem>>, %arg4: memref<1024x1xf32, #tpu.memory_space<vmem>>, %arg5: memref<1x1024x128xf32, #tpu.memory_space<vmem>>, %arg6: memref<256x1024xbf16, #tpu.memory_space<vmem>>, %arg7: memref<1x256x128xf32, #tpu.memory_space<vmem>>) attributes {dimension_semantics = [#tpu.dimension_semantics<parallel>, #tpu.dimension_semantics<parallel>], iteration_bounds = array<i64: 1, 2>, scalar_prefetch = 0 : i64, scratch_operands = 0 : i64, tpu.core_type = #tpu.core_type<tc>, window_params = [{transform_indices = @transform_0, window_bounds = array<i64: 1, 256, 128>}, {pipeline_mode = #tpu.pipeline_mode<synchronous>, transform_indices = @transform_1, window_bounds = array<i64: 1024, 256>}, {pipeline_mode = #tpu.pipeline_mode<synchronous>, transform_indices = @transform_2, window_bounds = array<i64: 1024, 1>}, {transform_indices = @transform_3, window_bounds = array<i64: 1, 1024, 128>}, {pipeline_mode = #tpu.pipeline_mode<synchronous>, transform_indices = @transform_4, window_bounds = array<i64: 256, 1024>}, {transform_indices = @transform_5, window_bounds = array<i64: 1, 256, 128>}]} {
    %c0 = arith.constant 0 : index
    %c0_0 = arith.constant 0 : index
    %c0_1 = arith.constant 0 : index
    %0 = vector.load %arg2[%c0, %c0_0, %c0_1] : memref<1x256x128xf32, #tpu.memory_space<vmem>>, vector<1x256x128xf32>
    %1 = vector.shape_cast %0 : vector<1x256x128xf32> to vector<256x128xf32>
    %2 = arith.truncf %1 : vector<256x128xf32> to vector<256x128xbf16>
    %cst = arith.constant 0.000000e+00 : f32
    %3 = vector.broadcast %cst : f32 to vector<256x128xf32>
    %c0_2 = arith.constant 0 : index
    %c0_3 = arith.constant 0 : index
    %4 = vector.load %arg3[%c0_2, %c0_3] : memref<1024x256xbf16, #tpu.memory_space<vmem>>, vector<256x256xbf16>
    %cst_4 = arith.constant dense<0.000000e+00> : vector<256x128xf32>
    %5 = tpu.matmul %4, %2, %cst_4 {dimension_numbers = #tpu.dot_dimension_numbers<[1], [0], [0], [1], [0, 0, 1, 1], [], []>} : vector<256x256xbf16>, vector<256x128xbf16>, vector<256x128xf32> -> vector<256x128xf32>
    %c0_5 = arith.constant 0 : index
    %c0_6 = arith.constant 0 : index
    %6 = vector.load %arg4[%c0_5, %c0_6] : memref<1024x1xf32, #tpu.memory_space<vmem>>, vector<256x1xf32>
    %7 = vector.broadcast %6 : vector<256x1xf32> to vector<256x128xf32>
    %8 = arith.addf %5, %7 : vector<256x128xf32>
    %c0_7 = arith.constant 0 : index
    %c0_8 = arith.constant 0 : index
    %c0_9 = arith.constant 0 : index
    %9 = vector.load %arg5[%c0_7, %c0_8, %c0_9] : memref<1x1024x128xf32, #tpu.memory_space<vmem>>, vector<1x256x128xf32>
    %10 = vector.shape_cast %9 : vector<1x256x128xf32> to vector<256x128xf32>
    %11 = arith.addf %8, %10 : vector<256x128xf32>
    %cst_10 = arith.constant 0.000000e+00 : f32
    %12 = vector.broadcast %cst_10 : f32 to vector<256x128xf32>
    %13 = arith.maximumf %11, %12 : vector<256x128xf32>
    %c0_11 = arith.constant 0 : index
    %c0_12 = arith.constant 0 : index
    %14 = vector.load %arg6[%c0_11, %c0_12] : memref<256x1024xbf16, #tpu.memory_space<vmem>>, vector<256x256xbf16>
    %15 = arith.truncf %13 : vector<256x128xf32> to vector<256x128xbf16>
    %cst_13 = arith.constant dense<0.000000e+00> : vector<256x128xf32>
    %16 = tpu.matmul %14, %15, %cst_13 {dimension_numbers = #tpu.dot_dimension_numbers<[1], [0], [0], [1], [0, 0, 1, 1], [], []>} : vector<256x256xbf16>, vector<256x128xbf16>, vector<256x128xf32> -> vector<256x128xf32>
    %17 = arith.addf %3, %16 : vector<256x128xf32>
    %c256 = arith.constant 256 : index
    %c0_14 = arith.constant 0 : index
    %18 = vector.load %arg3[%c256, %c0_14] : memref<1024x256xbf16, #tpu.memory_space<vmem>>, vector<256x256xbf16>
    %cst_15 = arith.constant dense<0.000000e+00> : vector<256x128xf32>
    %19 = tpu.matmul %18, %2, %cst_15 {dimension_numbers = #tpu.dot_dimension_numbers<[1], [0], [0], [1], [0, 0, 1, 1], [], []>} : vector<256x256xbf16>, vector<256x128xbf16>, vector<256x128xf32> -> vector<256x128xf32>
    %c256_16 = arith.constant 256 : index
    %c0_17 = arith.constant 0 : index
    %20 = vector.load %arg4[%c256_16, %c0_17] : memref<1024x1xf32, #tpu.memory_space<vmem>>, vector<256x1xf32>
    %21 = vector.broadcast %20 : vector<256x1xf32> to vector<256x128xf32>
    %22 = arith.addf %19, %21 : vector<256x128xf32>
    %c0_18 = arith.constant 0 : index
    %c256_19 = arith.constant 256 : index
    %c0_20 = arith.constant 0 : index
    %23 = vector.load %arg5[%c0_18, %c256_19, %c0_20] : memref<1x1024x128xf32, #tpu.memory_space<vmem>>, vector<1x256x128xf32>
    %24 = vector.shape_cast %23 : vector<1x256x128xf32> to vector<256x128xf32>
    %25 = arith.addf %22, %24 : vector<256x128xf32>
    %cst_21 = arith.constant 0.000000e+00 : f32
    %26 = vector.broadcast %cst_21 : f32 to vector<256x128xf32>
    %27 = arith.maximumf %25, %26 : vector<256x128xf32>
    %c0_22 = arith.constant 0 : index
    %c256_23 = arith.constant 256 : index
    %28 = vector.load %arg6[%c0_22, %c256_23] : memref<256x1024xbf16, #tpu.memory_space<vmem>>, vector<256x256xbf16>
    %29 = arith.truncf %27 : vector<256x128xf32> to vector<256x128xbf16>
    %cst_24 = arith.constant dense<0.000000e+00> : vector<256x128xf32>
    %30 = tpu.matmul %28, %29, %cst_24 {dimension_numbers = #tpu.dot_dimension_numbers<[1], [0], [0], [1], [0, 0, 1, 1], [], []>} : vector<256x256xbf16>, vector<256x128xbf16>, vector<256x128xf32> -> vector<256x128xf32>
    %31 = arith.addf %17, %30 : vector<256x128xf32>
    %c512 = arith.constant 512 : index
    %c0_25 = arith.constant 0 : index
    %32 = vector.load %arg3[%c512, %c0_25] : memref<1024x256xbf16, #tpu.memory_space<vmem>>, vector<256x256xbf16>
    %cst_26 = arith.constant dense<0.000000e+00> : vector<256x128xf32>
    %33 = tpu.matmul %32, %2, %cst_26 {dimension_numbers = #tpu.dot_dimension_numbers<[1], [0], [0], [1], [0, 0, 1, 1], [], []>} : vector<256x256xbf16>, vector<256x128xbf16>, vector<256x128xf32> -> vector<256x128xf32>
    %c512_27 = arith.constant 512 : index
    %c0_28 = arith.constant 0 : index
    %34 = vector.load %arg4[%c512_27, %c0_28] : memref<1024x1xf32, #tpu.memory_space<vmem>>, vector<256x1xf32>
    %35 = vector.broadcast %34 : vector<256x1xf32> to vector<256x128xf32>
    %36 = arith.addf %33, %35 : vector<256x128xf32>
    %c0_29 = arith.constant 0 : index
    %c512_30 = arith.constant 512 : index
    %c0_31 = arith.constant 0 : index
    %37 = vector.load %arg5[%c0_29, %c512_30, %c0_31] : memref<1x1024x128xf32, #tpu.memory_space<vmem>>, vector<1x256x128xf32>
    %38 = vector.shape_cast %37 : vector<1x256x128xf32> to vector<256x128xf32>
    %39 = arith.addf %36, %38 : vector<256x128xf32>
    %cst_32 = arith.constant 0.000000e+00 : f32
    %40 = vector.broadcast %cst_32 : f32 to vector<256x128xf32>
    %41 = arith.maximumf %39, %40 : vector<256x128xf32>
    %c0_33 = arith.constant 0 : index
    %c512_34 = arith.constant 512 : index
    %42 = vector.load %arg6[%c0_33, %c512_34] : memref<256x1024xbf16, #tpu.memory_space<vmem>>, vector<256x256xbf16>
    %43 = arith.truncf %41 : vector<256x128xf32> to vector<256x128xbf16>
    %cst_35 = arith.constant dense<0.000000e+00> : vector<256x128xf32>
    %44 = tpu.matmul %42, %43, %cst_35 {dimension_numbers = #tpu.dot_dimension_numbers<[1], [0], [0], [1], [0, 0, 1, 1], [], []>} : vector<256x256xbf16>, vector<256x128xbf16>, vector<256x128xf32> -> vector<256x128xf32>
    %45 = arith.addf %31, %44 : vector<256x128xf32>
    %c768 = arith.constant 768 : index
    %c0_36 = arith.constant 0 : index
    %46 = vector.load %arg3[%c768, %c0_36] : memref<1024x256xbf16, #tpu.memory_space<vmem>>, vector<256x256xbf16>
    %cst_37 = arith.constant dense<0.000000e+00> : vector<256x128xf32>
    %47 = tpu.matmul %46, %2, %cst_37 {dimension_numbers = #tpu.dot_dimension_numbers<[1], [0], [0], [1], [0, 0, 1, 1], [], []>} : vector<256x256xbf16>, vector<256x128xbf16>, vector<256x128xf32> -> vector<256x128xf32>
    %c768_38 = arith.constant 768 : index
    %c0_39 = arith.constant 0 : index
    %48 = vector.load %arg4[%c768_38, %c0_39] : memref<1024x1xf32, #tpu.memory_space<vmem>>, vector<256x1xf32>
    %49 = vector.broadcast %48 : vector<256x1xf32> to vector<256x128xf32>
    %50 = arith.addf %47, %49 : vector<256x128xf32>
    %c0_40 = arith.constant 0 : index
    %c768_41 = arith.constant 768 : index
    %c0_42 = arith.constant 0 : index
    %51 = vector.load %arg5[%c0_40, %c768_41, %c0_42] : memref<1x1024x128xf32, #tpu.memory_space<vmem>>, vector<1x256x128xf32>
    %52 = vector.shape_cast %51 : vector<1x256x128xf32> to vector<256x128xf32>
    %53 = arith.addf %50, %52 : vector<256x128xf32>
    %cst_43 = arith.constant 0.000000e+00 : f32
    %54 = vector.broadcast %cst_43 : f32 to vector<256x128xf32>
    %55 = arith.maximumf %53, %54 : vector<256x128xf32>
    %c0_44 = arith.constant 0 : index
    %c768_45 = arith.constant 768 : index
    %56 = vector.load %arg6[%c0_44, %c768_45] : memref<256x1024xbf16, #tpu.memory_space<vmem>>, vector<256x256xbf16>
    %57 = arith.truncf %55 : vector<256x128xf32> to vector<256x128xbf16>
    %cst_46 = arith.constant dense<0.000000e+00> : vector<256x128xf32>
    %58 = tpu.matmul %56, %57, %cst_46 {dimension_numbers = #tpu.dot_dimension_numbers<[1], [0], [0], [1], [0, 0, 1, 1], [], []>} : vector<256x256xbf16>, vector<256x128xbf16>, vector<256x128xf32> -> vector<256x128xf32>
    %59 = arith.addf %45, %58 : vector<256x128xf32>
    %c0_47 = arith.constant 0 : index
    %c0_48 = arith.constant 0 : index
    %c0_49 = arith.constant 0 : index
    %60 = vector.load %arg7[%c0_47, %c0_48, %c0_49] : memref<1x256x128xf32, #tpu.memory_space<vmem>>, vector<1x256x128xf32>
    %61 = vector.shape_cast %60 : vector<1x256x128xf32> to vector<256x128xf32>
    %62 = vector.shape_cast %59 : vector<256x128xf32> to vector<1x256x128xf32>
    tpu.vector_store %arg7[%c0_47, %c0_48, %c0_49], %62 {strides = array<i32>} : memref<1x256x128xf32, #tpu.memory_space<vmem>>, vector<1x256x128xf32>,
    return
  }
  func.func @transform_0(%arg0: i32, %arg1: i32) -> (i32, i32, i32) {
    %c0_i32 = arith.constant 0 : i32
    %c0_i32_0 = arith.constant 0 : i32
    return %arg0, %c0_i32, %arg1 : i32, i32, i32
  }
  func.func @transform_1(%arg0: i32, %arg1: i32) -> (i32, i32) {
    %c0_i32 = arith.constant 0 : i32
    %c0_i32_0 = arith.constant 0 : i32
    %c0_i32_1 = arith.constant 0 : i32
    return %c0_i32, %c0_i32_0 : i32, i32
  }
  func.func @transform_2(%arg0: i32, %arg1: i32) -> (i32, i32) {
    %c0_i32 = arith.constant 0 : i32
    %c0_i32_0 = arith.constant 0 : i32
    %c0_i32_1 = arith.constant 0 : i32
    return %c0_i32, %c0_i32_0 : i32, i32
  }
  func.func @transform_3(%arg0: i32, %arg1: i32) -> (i32, i32, i32) {
    %c0_i32 = arith.constant 0 : i32
    %c0_i32_0 = arith.constant 0 : i32
    return %arg0, %c0_i32, %arg1 : i32, i32, i32
  }
  func.func @transform_4(%arg0: i32, %arg1: i32) -> (i32, i32) {
    %c0_i32 = arith.constant 0 : i32
    %c0_i32_0 = arith.constant 0 : i32
    %c0_i32_1 = arith.constant 0 : i32
    return %c0_i32, %c0_i32_0 : i32, i32
  }
  func.func @transform_5(%arg0: i32, %arg1: i32) -> (i32, i32, i32) {
    %c0_i32 = arith.constant 0 : i32
    %c0_i32_0 = arith.constant 0 : i32
    return %arg0, %c0_i32, %arg1 : i32, i32, i32
  }
}

</mosaic_0001>

<llo_original>
// kernel: tpu_custom_call.1
$region0: #{tpu_custom_call.1}
  #allocation0 [shape = 'u32[]', space=smem, size = 0x4, offset = 0x4, fixed_abs, tag = 'smem constant byte address 0x4 - core index']
  #allocation1 [shape = 'u32[72,128]{1,0:T(1,128)}', space=vmem, size = 0x9000, scoped, tag = 'internal scratch']
  %s0 = inlined_call_operand.hbm [shape: f32[1,256,256], index: 0, kind: input, shape index: {}]
  %s1 = inlined_call_operand.vmem [shape: bf16[1024,256], index: 1, kind: input, shape index: {}]
  %s2 = inlined_call_operand.vmem [shape: f32[1024,1], index: 2, kind: input, shape index: {}]
  %s3 = inlined_call_operand.hbm [shape: f32[1,1024,256], index: 3, kind: input, shape index: {}]
  %s4 = inlined_call_operand.hbm [shape: bf16[256,1024], index: 4, kind: input, shape index: {}]
  %s5 = inlined_call_operand.hbm [shape: f32[1,256,256], index: 5, kind: output, shape index: {}]
  %s6 = sld [smem:[#allocation0]]
  $region65: #{tpu_custom_call.1} parent=0
    _
  %s8 = ssub.s32 1, %s6
  %s9 = scalar_select 0, %s8, %s6
  $region1: #{tpu_custom_call.1} parent=0
    #allocation2 [shape = 'u8[262144]{0}', space=vmem, size = 0x40000, scoped, tag = 'input window, operand 0']
    #allocation3 [shape = 's32[2]{0}', space=sflag, size = 0x8, scoped, tag = 'scoped memory for tpu_custom_call.1']
    #allocation4 [shape = 's32[2]{0}', space=sflag, size = 0x8, scoped, tag = 'scoped memory for tpu_custom_call.1']
    #allocation5 [shape = 'u8[1048576]{0}', space=vmem, size = 0x100000, scoped, tag = 'input window, operand 3']
    #allocation6 [shape = 's32[2]{0}', space=sflag, size = 0x8, scoped, tag = 'scoped memory for tpu_custom_call.1']
    #allocation7 [shape = 'u8[524288]{0}', space=vmem, size = 0x80000, scoped, tag = 'input window, operand 4, single buffered']
    #allocation8 [shape = 'u8[262144]{0}', space=vmem, size = 0x40000, scoped, tag = 'output window, operand 0']
    %10 = vsyncpa [#allocation3], 0
    %s11 = scalar_lea.sflag [#allocation3], 1
    %12 = vsyncpa %s11, 0
    %13 = vsyncpa [#allocation6], 0
    %s14 = scalar_lea.sflag [#allocation6], 1
    %15 = vsyncpa %s14, 0
    %16 = vsyncpa [#allocation4], 0
    %s17 = scalar_lea.sflag [#allocation4], 1
    %18 = vsyncpa %s17, 0
    loop: start=0, step=1, limit=4
    $region2: #{tpu_custom_call.1} parent=1 // loop_pre_header
      _
    $region3: #{tpu_custom_call.1} parent=1 // loop_header
      %s20 = sphi 0, %s24
      %p21 = scmp.ge.s32.totalorder %s20, 4
      %s27 = sphi 0, %s39
      %s28 = sphi 0, %s35
      %s29 = sphi 0, %s27
      %s30 = sphi 0, %s28
      %s31 = sphi 0, %s29
      %s32 = sphi 0, %s30
      %s44 = sphi 0, %s46
      %s47 = sphi 0, %s44
      %s48 = sphi 0, %s47
      %s64 = sphi 0, %s48
      %s68 = sphi 0, %s68
      %s70 = sphi 0, %s68
      %s71 = sphi 0, %s70
      %s85 = sphi 0, %s71
      %s89 = sphi 0, %s89
      %s91 = sphi 0, %s89
      %s92 = sphi 0, %s91
      %s106 = sphi 0, %s92
      %s114 = sphi 0, %s116
      %s117 = sphi 0, %s114
      %s118 = sphi 0, %s117
      %s134 = sphi 0, %s118
      %s138 = sphi 0, %s138
      %s140 = sphi 0, %s138
      %s141 = sphi 0, %s140
      %s155 = sphi 0, %s141
      %s163 = sphi 0, %s165
      %s166 = sphi 0, %s163
      %s167 = sphi 0, %s166
      %s183 = sphi 0, %s167
    $region4: #{tpu_custom_call.1} parent=1 // loop_header_branch
      %23 = sbr.rel (%p21) target = $region8
    $region5: #{tpu_custom_call.1} parent=1 // loop_body
      %s25 = ssub.s32 %s20, 1
      %s26 = ssub.s32 %s20, 2
      %s33 = sadd.s32 1, %s28
      %p34 = scmp.ge.s32.totalorder %s33, 2
      %s35 = scalar_select %p34, 0, %s33
      %s36 = sadd.s32 1, %s27
      %s37 = scalar_select %p34, %s36, %s27
      %p38 = scmp.ge.s32.totalorder %s37, 1
      %s39 = scalar_select %p38, 0, %s37
      %s40 = ssub.s32 %s27, %s39
      %s41 = ssub.s32 %s28, %s35
      %s42 = sor.u32 %s40, %s41
      %p43 = scmp.eq.s32.totalorder %s42, 0
      %s45 = sadd.s32 %s44, 1
      %s46 = scalar_select %p43, %s44, %s45
      %p49 = pneg %p43
      %p50 = scmp.eq.s32.totalorder %s20, 1
      %p51 = por %p49, %p50
      %p52 = scmp.ne.s32.totalorder %s44, %s47
      %p53 = scmp.eq.s32.totalorder %s20, 0
      %p54 = por %p52, %p53
      %p55 = scmp.ne.s32.totalorder %s44, %s47
      %p56 = scmp.eq.s32.totalorder %s25, 1
      %p57 = por %p55, %p56
      %p58 = scmp.ne.s32.totalorder %s47, %s48
      %p59 = scmp.eq.s32.totalorder %s25, 0
      %p60 = por %p58, %p59
      %p61 = scmp.ne.s32.totalorder %s47, %s48
      %p62 = scmp.eq.s32.totalorder %s26, 1
      %p63 = por %p61, %p62
      %p65 = scmp.ne.s32.totalorder %s48, %s64
      %p66 = scmp.eq.s32.totalorder %s26, 0
      %p67 = por %p65, %p66
      %s69 = sadd.s32 %s68, 1
      %p72 = scmp.eq.s32.totalorder %s20, 1
      %p73 = scmp.ne.s32.totalorder %s68, %s70
      %p74 = scmp.eq.s32.totalorder %s20, 0
      %p75 = por %p73, %p74
      %p76 = scmp.ne.s32.totalorder %s68, %s70
      %p77 = scmp.eq.s32.totalorder %s25, 1
      %p78 = por %p76, %p77
      %p79 = scmp.ne.s32.totalorder %s70, %s71
      %p80 = scmp.eq.s32.totalorder %s25, 0
      %p81 = por %p79, %p80
      %p82 = scmp.ne.s32.totalorder %s70, %s71
      %p83 = scmp.eq.s32.totalorder %s26, 1
      %p84 = por %p82, %p83
      %p86 = scmp.ne.s32.totalorder %s71, %s85
      %p87 = scmp.eq.s32.totalorder %s26, 0
      %p88 = por %p86, %p87
      %s90 = sadd.s32 %s89, 1
      %p93 = scmp.eq.s32.totalorder %s20, 1
      %p94 = scmp.ne.s32.totalorder %s89, %s91
      %p95 = scmp.eq.s32.totalorder %s20, 0
      %p96 = por %p94, %p95
      %p97 = scmp.ne.s32.totalorder %s89, %s91
      %p98 = scmp.eq.s32.totalorder %s25, 1
      %p99 = por %p97, %p98
      %p100 = scmp.ne.s32.totalorder %s91, %s92
      %p101 = scmp.eq.s32.totalorder %s25, 0
      %p102 = por %p100, %p101
      %p103 = scmp.ne.s32.totalorder %s91, %s92
      %p104 = scmp.eq.s32.totalorder %s26, 1
      %p105 = por %p103, %p104
      %p107 = scmp.ne.s32.totalorder %s92, %s106
      %p108 = scmp.eq.s32.totalorder %s26, 0
      %p109 = por %p107, %p108
      %s110 = ssub.s32 %s27, %s39
      %s111 = ssub.s32 %s28, %s35
      %s112 = sor.u32 %s110, %s111
      %p113 = scmp.eq.s32.totalorder %s112, 0
      %s115 = sadd.s32 %s114, 1
      %s116 = scalar_select %p113, %s114, %s115
      %p119 = pneg %p113
      %p120 = scmp.eq.s32.totalorder %s20, 1
      %p121 = por %p119, %p120
      %p122 = scmp.ne.s32.totalorder %s114, %s117
      %p123 = scmp.eq.s32.totalorder %s20, 0
      %p124 = por %p122, %p123
      %p125 = scmp.ne.s32.totalorder %s114, %s117
      %p126 = scmp.eq.s32.totalorder %s25, 1
      %p127 = por %p125, %p126
      %p128 = scmp.ne.s32.totalorder %s117, %s118
      %p129 = scmp.eq.s32.totalorder %s25, 0
      %p130 = por %p128, %p129
      %p131 = scmp.ne.s32.totalorder %s117, %s118
      %p132 = scmp.eq.s32.totalorder %s26, 1
      %p133 = por %p131, %p132
      %p135 = scmp.ne.s32.totalorder %s118, %s134
      %p136 = scmp.eq.s32.totalorder %s26, 0
      %p137 = por %p135, %p136
      %s139 = sadd.s32 %s138, 1
      %p142 = scmp.eq.s32.totalorder %s20, 1
      %p143 = scmp.ne.s32.totalorder %s138, %s140
      %p144 = scmp.eq.s32.totalorder %s20, 0
      %p145 = por %p143, %p144
      %p146 = scmp.ne.s32.totalorder %s138, %s140
      %p147 = scmp.eq.s32.totalorder %s25, 1
      %p148 = por %p146, %p147
      %p149 = scmp.ne.s32.totalorder %s140, %s141
      %p150 = scmp.eq.s32.totalorder %s25, 0
      %p151 = por %p149, %p150
      %p152 = scmp.ne.s32.totalorder %s140, %s141
      %p153 = scmp.eq.s32.totalorder %s26, 1
      %p154 = por %p152, %p153
      %p156 = scmp.ne.s32.totalorder %s141, %s155
      %p157 = scmp.eq.s32.totalorder %s26, 0
      %p158 = por %p156, %p157
      %s159 = ssub.s32 %s27, %s39
      %s160 = ssub.s32 %s28, %s35
      %s161 = sor.u32 %s159, %s160
      %p162 = scmp.eq.s32.totalorder %s161, 0
      %s164 = sadd.s32 %s163, 1
      %s165 = scalar_select %p162, %s163, %s164
      %p168 = pneg %p162
      %p169 = scmp.eq.s32.totalorder %s20, 1
      %p170 = por %p168, %p169
      %p171 = scmp.ne.s32.totalorder %s163, %s166
      %p172 = scmp.eq.s32.totalorder %s20, 0
      %p173 = por %p171, %p172
      %p174 = scmp.ne.s32.totalorder %s163, %s166
      %p175 = scmp.eq.s32.totalorder %s25, 1
      %p176 = por %p174, %p175
      %p177 = scmp.ne.s32.totalorder %s166, %s167
      %p178 = scmp.eq.s32.totalorder %s25, 0
      %p179 = por %p177, %p178
      %p180 = scmp.ne.s32.totalorder %s166, %s167
      %p181 = scmp.eq.s32.totalorder %s26, 1
      %p182 = por %p180, %p181
      %p184 = scmp.ne.s32.totalorder %s167, %s183
      %p185 = scmp.eq.s32.totalorder %s26, 0
      %p186 = por %p184, %p185
      %p187 = scmp.le.s32.totalorder 1, %s20
      %p188 = scmp.lt.s32.totalorder %s20, 3
      %p189 = pnand %p187, %p188
      %p190 = pneg %p189
      // Predicated region
      $region9: #{tpu_custom_call.1} parent=5 // pred_check
        _
      $region10: #{tpu_custom_call.1} parent=5 // pred_check_branch
        %192 = sbr.rel (%p189) target = $region12
      $region11: #{tpu_custom_call.1} parent=5 // pred_region
        %s193 = ssub.s32 %s20, 1
        // Predicated region
        $region13: #{tpu_custom_call.1} parent=11 // pred_check
          %p194 = pneg %p81
        $region14: #{tpu_custom_call.1} parent=11 // pred_check_branch
          %196 = sbr.rel (%p194) target = $region16
        $region15: #{tpu_custom_call.1} parent=11 // pred_region
          _
        $region16: #{tpu_custom_call.1} parent=11 // pred_fallthru
          _
        // Predicated region
        $region17: #{tpu_custom_call.1} parent=11 // pred_check
          %p197 = pneg %p102
        $region18: #{tpu_custom_call.1} parent=11 // pred_check_branch
          %199 = sbr.rel (%p197) target = $region20
        $region19: #{tpu_custom_call.1} parent=11 // pred_region
          _
        $region20: #{tpu_custom_call.1} parent=11 // pred_fallthru
          _
        // Predicated region
        $region21: #{tpu_custom_call.1} parent=11 // pred_check
          %p200 = pneg %p151
        $region22: #{tpu_custom_call.1} parent=11 // pred_check_branch
          %202 = sbr.rel (%p200) target = $region24
        $region23: #{tpu_custom_call.1} parent=11 // pred_region
          %204 = vsyncadd [#allocation6], 0
          %s205 = sshll.u32 %s4, 4
          %s206 = int_to_ptr.hbm [resolvable:$true] %s205
          %s207 = sshll.u32 [#allocation7], 4
          %s208 = int_to_ptr.vmem [resolvable:$true] %s207
          %213 = dma.hbm_to_vmem [thread:$0]  %s206, 16384, %s208, [#allocation6], 512, 512, 32
        $region24: #{tpu_custom_call.1} parent=11 // pred_fallthru
          _
      $region12: #{tpu_custom_call.1} parent=5 // pred_fallthru
        _
      %p214 = scmp.lt.s32.totalorder %s20, 2
      // Predicated region
      $region25: #{tpu_custom_call.1} parent=5 // pred_check
        %p215 = pneg %p214
      $region26: #{tpu_custom_call.1} parent=5 // pred_check_branch
        %217 = sbr.rel (%p215) target = $region28
      $region27: #{tpu_custom_call.1} parent=5 // pred_region
        // Predicated region
        $region29: #{tpu_custom_call.1} parent=27 // pred_check
          %p218 = pneg %p54
        $region30: #{tpu_custom_call.1} parent=27 // pred_check_branch
          %220 = sbr.rel (%p218) target = $region32
        $region31: #{tpu_custom_call.1} parent=27 // pred_region
          %s221 = sand.u32 %s44, 1
          %s222 = scalar_lea.sflag [#allocation3], %s221
          %s223 = sand.u32 %s44, 1
          %s224 = smul.addr %s223, 256
          %s225 = scalar_lea.vmem [#allocation2], %s224
          %227 = vsyncadd %s222, 0
          %s228 = smul.addr %s27, 64
          %s229 = sadd.s32 %s28, %s228
          %s230 = smul.addr %s229, 8
          %s231 = scalar_lea.hbm %s0, %s230
          %s232 = sshll.u32 %s231, 4
          %s233 = int_to_ptr.hbm [resolvable:$true] %s232
          %s234 = sshll.u32 %s225, 4
          %s235 = int_to_ptr.vmem [resolvable:$true] %s234
          %240 = dma.hbm_to_vmem [thread:$0]  %s233, 4096, %s235, %s222, 256, 128, 8
        $region32: #{tpu_custom_call.1} parent=27 // pred_fallthru
          _
        // Predicated region
        $region33: #{tpu_custom_call.1} parent=27 // pred_check
          %p241 = pneg %p124
        $region34: #{tpu_custom_call.1} parent=27 // pred_check_branch
          %243 = sbr.rel (%p241) target = $region36
        $region35: #{tpu_custom_call.1} parent=27 // pred_region
          %s244 = sand.u32 %s20, 1
          %s245 = scalar_lea.sflag [#allocation6], %s244
          %s246 = sand.u32 %s114, 1
          %s247 = smul.addr %s246, 1024
          %s248 = scalar_lea.vmem [#allocation5], %s247
          %250 = vsyncadd %s245, 0
          %s251 = smul.addr %s27, 256
          %s252 = sadd.s32 %s28, %s251
          %s253 = smul.addr %s252, 8
          %s254 = scalar_lea.hbm %s3, %s253
          %s255 = sshll.u32 %s254, 4
          %s256 = int_to_ptr.hbm [resolvable:$true] %s255
          %s257 = sshll.u32 %s248, 4
          %s258 = int_to_ptr.vmem [resolvable:$true] %s257
          %263 = dma.hbm_to_vmem [thread:$0]  %s256, 16384, %s258, %s245, 256, 128, 8
        $region36: #{tpu_custom_call.1} parent=27 // pred_fallthru
          _
      $region28: #{tpu_custom_call.1} parent=5 // pred_fallthru
        _
      %p264 = scmp.le.s32.totalorder 1, %s20
      %p265 = scmp.lt.s32.totalorder %s20, 3
      %p266 = pnand %p264, %p265
      %p267 = pneg %p266
      // Predicated region
      $region37: #{tpu_custom_call.1} parent=5 // pred_check
        _
      $region38: #{tpu_custom_call.1} parent=5 // pred_check_branch
        %269 = sbr.rel (%p266) target = $region40
      $region39: #{tpu_custom_call.1} parent=5 // pred_region
        %s270 = ssub.s32 %s20, 1
        %s271 = sand.u32 %s47, 1
        %s272 = scalar_lea.sflag [#allocation3], %s271
        %s273 = sand.u32 %s47, 1
        %s274 = smul.addr %s273, 256
        %s275 = scalar_lea.vmem [#allocation2], %s274
        // Predicated region
        $region41: #{tpu_custom_call.1} parent=39 // pred_check
          %p276 = pneg %p60
        $region42: #{tpu_custom_call.1} parent=39 // pred_check_branch
          %278 = sbr.rel (%p276) target = $region44
        $region43: #{tpu_custom_call.1} parent=39 // pred_region
          %280 = dma.done %s272, 4096
        $region44: #{tpu_custom_call.1} parent=39 // pred_fallthru
          _
        %s281 = sand.u32 %s25, 1
        %s282 = scalar_lea.sflag [#allocation6], %s281
        %s283 = sand.u32 %s117, 1
        %s284 = smul.addr %s283, 1024
        %s285 = scalar_lea.vmem [#allocation5], %s284
        // Predicated region
        $region45: #{tpu_custom_call.1} parent=39 // pred_check
          %p286 = pneg %p130
        $region46: #{tpu_custom_call.1} parent=39 // pred_check_branch
          %288 = sbr.rel (%p286) target = $region48
        $region47: #{tpu_custom_call.1} parent=39 // pred_region
          %290 = dma.done %s282, 16384
        $region48: #{tpu_custom_call.1} parent=39 // pred_fallthru
          _
        // Predicated region
        $region49: #{tpu_custom_call.1} parent=39 // pred_check
          %p291 = pneg %p151
        $region50: #{tpu_custom_call.1} parent=39 // pred_check_branch
          %293 = sbr.rel (%p291) target = $region52
        $region51: #{tpu_custom_call.1} parent=39 // pred_region
          %295 = dma.done [#allocation6], 16384
        $region52: #{tpu_custom_call.1} parent=39 // pred_fallthru
          _
        %s296 = sand.u32 %s47, 1
        %s297 = scalar_lea.sflag [#allocation3], %s296
        %s298 = sand.u32 %s47, 1
        %s299 = smul.addr %s298, 256
        %s300 = scalar_lea.vmem [#allocation2], %s299
        %p301 = pneg %p60
        %p302 = pneg %p57
        %p303 = pneg %p81
        %p304 = pneg %p78
        %p305 = pneg %p102
        %p306 = pneg %p99
        %s307 = sand.u32 %s25, 1
        %s308 = scalar_lea.sflag [#allocation6], %s307
        %s309 = sand.u32 %s117, 1
        %s310 = smul.addr %s309, 1024
        %s311 = scalar_lea.vmem [#allocation5], %s310
        %p312 = pneg %p130
        %p313 = pneg %p127
        %p314 = pneg %p151
        %p315 = pneg %p148
        %p316 = pneg %p179
        %p317 = pneg %p176
        %s318 = sand.u32 %s166, 1
        %s319 = scalar_lea.sflag [#allocation4], %s318
        %s320 = sand.u32 %s166, 1
        %s321 = smul.addr %s320, 256
        %s322 = scalar_lea.vmem [#allocation8], %s321
        %v323 = vld [vmem:[%s275] sm:$0xff]
        %v324 = vld [vmem:[%s275 + $0x8] sm:$0xff]
        %v325 = vld [vmem:[%s275 + $0x10] sm:$0xff]
        %v326 = vld [vmem:[%s275 + $0x18] sm:$0xff]
        %v327 = vld [vmem:[%s275 + $0x20] sm:$0xff]
        %v328 = vld [vmem:[%s275 + $0x28] sm:$0xff]
        %v329 = vld [vmem:[%s275 + $0x30] sm:$0xff]
        %v330 = vld [vmem:[%s275 + $0x38] sm:$0xff]
        %v331 = vld [vmem:[%s275 + $0x40] sm:$0xff]
        %v332 = vld [vmem:[%s275 + $0x48] sm:$0xff]
        %v333 = vld [vmem:[%s275 + $0x50] sm:$0xff]
        %v334 = vld [vmem:[%s275 + $0x58] sm:$0xff]
        %v335 = vld [vmem:[%s275 + $0x60] sm:$0xff]
        %v336 = vld [vmem:[%s275 + $0x68] sm:$0xff]
        %v337 = vld [vmem:[%s275 + $0x70] sm:$0xff]
        %v338 = vld [vmem:[%s275 + $0x78] sm:$0xff]
        %v339 = vld [vmem:[%s275 + $0x80] sm:$0xff]
        %v340 = vld [vmem:[%s275 + $0x88] sm:$0xff]
        %v341 = vld [vmem:[%s275 + $0x90] sm:$0xff]
        %v342 = vld [vmem:[%s275 + $0x98] sm:$0xff]
        %v343 = vld [vmem:[%s275 + $0xa0] sm:$0xff]
        %v344 = vld [vmem:[%s275 + $0xa8] sm:$0xff]
        %v345 = vld [vmem:[%s275 + $0xb0] sm:$0xff]
        %v346 = vld [vmem:[%s275 + $0xb8] sm:$0xff]
        %v347 = vld [vmem:[%s275 + $0xc0] sm:$0xff]
        %v348 = vld [vmem:[%s275 + $0xc8] sm:$0xff]
        %v349 = vld [vmem:[%s275 + $0xd0] sm:$0xff]
        %v350 = vld [vmem:[%s275 + $0xd8] sm:$0xff]
        %v351 = vld [vmem:[%s275 + $0xe0] sm:$0xff]
        %v352 = vld [vmem:[%s275 + $0xe8] sm:$0xff]
        %v353 = vld [vmem:[%s275 + $0xf0] sm:$0xff]
        %v354 = vld [vmem:[%s275 + $0xf8] sm:$0xff]
        %v355 = vpack.c.bf16 %v324, %v323
        %v356 = vpack.c.bf16 %v326, %v325
        %v357 = vpack.c.bf16 %v328, %v327
        %v358 = vpack.c.bf16 %v330, %v329
        %v359 = vpack.c.bf16 %v332, %v331
        %v360 = vpack.c.bf16 %v334, %v333
        %v361 = vpack.c.bf16 %v336, %v335
        %v362 = vpack.c.bf16 %v338, %v337
        %v363 = vpack.c.bf16 %v340, %v339
        %v364 = vpack.c.bf16 %v342, %v341
        %v365 = vpack.c.bf16 %v344, %v343
        %v366 = vpack.c.bf16 %v346, %v345
        %v367 = vpack.c.bf16 %v348, %v347
        %v368 = vpack.c.bf16 %v350, %v349
        %v369 = vpack.c.bf16 %v352, %v351
        %v370 = vpack.c.bf16 %v354, %v353
        %v371 = vld [vmem:[%s1] sm:$0xff]
        %v372 = vld [vmem:[%s1 + $0x8] sm:$0xff]
        %v373 = vld [vmem:[%s1 + $0x10] sm:$0xff]
        %v374 = vld [vmem:[%s1 + $0x18] sm:$0xff]
        %v375 = vld [vmem:[%s1 + $0x20] sm:$0xff]
        %v376 = vld [vmem:[%s1 + $0x28] sm:$0xff]
        %v377 = vld [vmem:[%s1 + $0x30] sm:$0xff]
        %v378 = vld [vmem:[%s1 + $0x38] sm:$0xff]
        %v379 = vld [vmem:[%s1 + $0x40] sm:$0xff]
        %v380 = vld [vmem:[%s1 + $0x48] sm:$0xff]
        %v381 = vld [vmem:[%s1 + $0x50] sm:$0xff]
        %v382 = vld [vmem:[%s1 + $0x58] sm:$0xff]
        %v383 = vld [vmem:[%s1 + $0x60] sm:$0xff]
        %v384 = vld [vmem:[%s1 + $0x68] sm:$0xff]
        %v385 = vld [vmem:[%s1 + $0x70] sm:$0xff]
        %v386 = vld [vmem:[%s1 + $0x78] sm:$0xff]
        %v387 = vld [vmem:[%s1 + $0x80] sm:$0xff]
        %v388 = vld [vmem:[%s1 + $0x88] sm:$0xff]
        %v389 = vld [vmem:[%s1 + $0x90] sm:$0xff]
        %v390 = vld [vmem:[%s1 + $0x98] sm:$0xff]
        %v391 = vld [vmem:[%s1 + $0xa0] sm:$0xff]
        %v392 = vld [vmem:[%s1 + $0xa8] sm:$0xff]
        %v393 = vld [vmem:[%s1 + $0xb0] sm:$0xff]
        %v394 = vld [vmem:[%s1 + $0xb8] sm:$0xff]
        %v395 = vld [vmem:[%s1 + $0xc0] sm:$0xff]
        %v396 = vld [vmem:[%s1 + $0xc8] sm:$0xff]
        %v397 = vld [vmem:[%s1 + $0xd0] sm:$0xff]
        %v398 = vld [vmem:[%s1 + $0xd8] sm:$0xff]
        %v399 = vld [vmem:[%s1 + $0xe0] sm:$0xff]
        %v400 = vld [vmem:[%s1 + $0xe8] sm:$0xff]
        %v401 = vld [vmem:[%s1 + $0xf0] sm:$0xff]
        %v402 = vld [vmem:[%s1 + $0xf8] sm:$0xff]
        %v403 = vld [vmem:[%s2] sm:$0xff]
        %v404 = vld [vmem:[%s2 + $0x8] sm:$0xff]
        %v405 = vld [vmem:[%s2 + $0x10] sm:$0xff]
        %v406 = vld [vmem:[%s2 + $0x18] sm:$0xff]
        %v407 = vld [vmem:[%s2 + $0x20] sm:$0xff]
        %v408 = vld [vmem:[%s2 + $0x28] sm:$0xff]
        %v409 = vld [vmem:[%s2 + $0x30] sm:$0xff]
        %v410 = vld [vmem:[%s2 + $0x38] sm:$0xff]
        %v411 = vld [vmem:[%s2 + $0x40] sm:$0xff]
        %v412 = vld [vmem:[%s2 + $0x48] sm:$0xff]
        %v413 = vld [vmem:[%s2 + $0x50] sm:$0xff]
        %v414 = vld [vmem:[%s2 + $0x58] sm:$0xff]
        %v415 = vld [vmem:[%s2 + $0x60] sm:$0xff]
        %v416 = vld [vmem:[%s2 + $0x68] sm:$0xff]
        %v417 = vld [vmem:[%s2 + $0x70] sm:$0xff]
        %v418 = vld [vmem:[%s2 + $0x78] sm:$0xff]
        %v419 = vld [vmem:[%s2 + $0x80] sm:$0xff]
        %v420 = vld [vmem:[%s2 + $0x88] sm:$0xff]
        %v421 = vld [vmem:[%s2 + $0x90] sm:$0xff]
        %v422 = vld [vmem:[%s2 + $0x98] sm:$0xff]
        %v423 = vld [vmem:[%s2 + $0xa0] sm:$0xff]
        %v424 = vld [vmem:[%s2 + $0xa8] sm:$0xff]
        %v425 = vld [vmem:[%s2 + $0xb0] sm:$0xff]
        %v426 = vld [vmem:[%s2 + $0xb8] sm:$0xff]
        %v427 = vld [vmem:[%s2 + $0xc0] sm:$0xff]
        %v428 = vld [vmem:[%s2 + $0xc8] sm:$0xff]
        %v429 = vld [vmem:[%s2 + $0xd0] sm:$0xff]
        %v430 = vld [vmem:[%s2 + $0xd8] sm:$0xff]
        %v431 = vld [vmem:[%s2 + $0xe0] sm:$0xff]
        %v432 = vld [vmem:[%s2 + $0xe8] sm:$0xff]
        %v433 = vld [vmem:[%s2 + $0xf0] sm:$0xff]
        %v434 = vld [vmem:[%s2 + $0xf8] sm:$0xff]
        %436 = vset.pattern.permute.xlu0 0
        %437 = vperm.xlu0 %436, %v403
        %v438 = vpop.permute.xlu0 %437
        %441 = vset.pattern.permute.xlu0 0
        %442 = vperm.xlu0 %441, %v404
        %v443 = vpop.permute.xlu0 %442
        %446 = vset.pattern.permute.xlu0 0
        %447 = vperm.xlu0 %446, %v405
        %v448 = vpop.permute.xlu0 %447
        %451 = vset.pattern.permute.xlu0 0
        %452 = vperm.xlu0 %451, %v406
        %v453 = vpop.permute.xlu0 %452
        %456 = vset.pattern.permute.xlu0 0
        %457 = vperm.xlu0 %456, %v407
        %v458 = vpop.permute.xlu0 %457
        %461 = vset.pattern.permute.xlu0 0
        %462 = vperm.xlu0 %461, %v408
        %v463 = vpop.permute.xlu0 %462
        %466 = vset.pattern.permute.xlu0 0
        %467 = vperm.xlu0 %466, %v409
        %v468 = vpop.permute.xlu0 %467
        %471 = vset.pattern.permute.xlu0 0
        %472 = vperm.xlu0 %471, %v410
        %v473 = vpop.permute.xlu0 %472
        %476 = vset.pattern.permute.xlu0 0
        %477 = vperm.xlu0 %476, %v411
        %v478 = vpop.permute.xlu0 %477
        %481 = vset.pattern.permute.xlu0 0
        %482 = vperm.xlu0 %481, %v412
        %v483 = vpop.permute.xlu0 %482
        %486 = vset.pattern.permute.xlu0 0
        %487 = vperm.xlu0 %486, %v413
        %v488 = vpop.permute.xlu0 %487
        %491 = vset.pattern.permute.xlu0 0
        %492 = vperm.xlu0 %491, %v414
        %v493 = vpop.permute.xlu0 %492
        %496 = vset.pattern.permute.xlu0 0
        %497 = vperm.xlu0 %496, %v415
        %v498 = vpop.permute.xlu0 %497
        %501 = vset.pattern.permute.xlu0 0
        %502 = vperm.xlu0 %501, %v416
        %v503 = vpop.permute.xlu0 %502
        %506 = vset.pattern.permute.xlu0 0
        %507 = vperm.xlu0 %506, %v417
        %v508 = vpop.permute.xlu0 %507
        %511 = vset.pattern.permute.xlu0 0
        %512 = vperm.xlu0 %511, %v418
        %v513 = vpop.permute.xlu0 %512
        %516 = vset.pattern.permute.xlu0 0
        %517 = vperm.xlu0 %516, %v419
        %v518 = vpop.permute.xlu0 %517
        %521 = vset.pattern.permute.xlu0 0
        %522 = vperm.xlu0 %521, %v420
        %v523 = vpop.permute.xlu0 %522
        %526 = vset.pattern.permute.xlu0 0
        %527 = vperm.xlu0 %526, %v421
        %v528 = vpop.permute.xlu0 %527
        %531 = vset.pattern.permute.xlu0 0
        %532 = vperm.xlu0 %531, %v422
        %v533 = vpop.permute.xlu0 %532
        %536 = vset.pattern.permute.xlu0 0
        %537 = vperm.xlu0 %536, %v423
        %v538 = vpop.permute.xlu0 %537
        %541 = vset.pattern.permute.xlu0 0
        %542 = vperm.xlu0 %541, %v424
        %v543 = vpop.permute.xlu0 %542
        %546 = vset.pattern.permute.xlu0 0
        %547 = vperm.xlu0 %546, %v425
        %v548 = vpop.permute.xlu0 %547
        %551 = vset.pattern.permute.xlu0 0
        %552 = vperm.xlu0 %551, %v426
        %v553 = vpop.permute.xlu0 %552
        %556 = vset.pattern.permute.xlu0 0
        %557 = vperm.xlu0 %556, %v427
        %v558 = vpop.permute.xlu0 %557
        %561 = vset.pattern.permute.xlu0 0
        %562 = vperm.xlu0 %561, %v428
        %v563 = vpop.permute.xlu0 %562
        %566 = vset.pattern.permute.xlu0 0
        %567 = vperm.xlu0 %566, %v429
        %v568 = vpop.permute.xlu0 %567
        %571 = vset.pattern.permute.xlu0 0
        %572 = vperm.xlu0 %571, %v430
        %v573 = vpop.permute.xlu0 %572
        %576 = vset.pattern.permute.xlu0 0
        %577 = vperm.xlu0 %576, %v431
        %v578 = vpop.permute.xlu0 %577
        %581 = vset.pattern.permute.xlu0 0
        %582 = vperm.xlu0 %581, %v432
        %v583 = vpop.permute.xlu0 %582
        %586 = vset.pattern.permute.xlu0 0
        %587 = vperm.xlu0 %586, %v433
        %v588 = vpop.permute.xlu0 %587
        %591 = vset.pattern.permute.xlu0 0
        %592 = vperm.xlu0 %591, %v434
        %v593 = vpop.permute.xlu0 %592
        %v627 = vunpack.c.l.b16 %v371
        %v628 = vunpack.c.h.b16 %v371
        %v629 = vunpack.c.l.b16 %v372
        %v630 = vunpack.c.h.b16 %v372
        %v631 = vunpack.c.l.b16 %v373
        %v632 = vunpack.c.h.b16 %v373
        %v633 = vunpack.c.l.b16 %v374
        %v634 = vunpack.c.h.b16 %v374
        %v635 = vunpack.c.l.b16 %v375
        %v636 = vunpack.c.h.b16 %v375
        %v637 = vunpack.c.l.b16 %v376
        %v638 = vunpack.c.h.b16 %v376
        %v639 = vunpack.c.l.b16 %v377
        %v640 = vunpack.c.h.b16 %v377
        %v641 = vunpack.c.l.b16 %v378
        %v642 = vunpack.c.h.b16 %v378
        %v643 = vunpack.c.l.b16 %v379
        %v644 = vunpack.c.h.b16 %v379
        %v645 = vunpack.c.l.b16 %v380
        %v646 = vunpack.c.h.b16 %v380
        %v647 = vunpack.c.l.b16 %v381
        %v648 = vunpack.c.h.b16 %v381
        %v649 = vunpack.c.l.b16 %v382
        %v650 = vunpack.c.h.b16 %v382
        %v651 = vunpack.c.l.b16 %v383
        %v652 = vunpack.c.h.b16 %v383
        %v653 = vunpack.c.l.b16 %v384
        %v654 = vunpack.c.h.b16 %v384
        %v655 = vunpack.c.l.b16 %v385
        %v656 = vunpack.c.h.b16 %v385
        %v657 = vunpack.c.l.b16 %v386
        %v658 = vunpack.c.h.b16 %v386
        %v659 = vunpack.c.l.b16 %v387
        %v660 = vunpack.c.h.b16 %v387
        %v661 = vunpack.c.l.b16 %v388
        %v662 = vunpack.c.h.b16 %v388
        %v663 = vunpack.c.l.b16 %v389
        %v664 = vunpack.c.h.b16 %v389
        %v665 = vunpack.c.l.b16 %v390
        %v666 = vunpack.c.h.b16 %v390
        %v667 = vunpack.c.l.b16 %v391
        %v668 = vunpack.c.h.b16 %v391
        %v669 = vunpack.c.l.b16 %v392
        %v670 = vunpack.c.h.b16 %v392
        %v671 = vunpack.c.l.b16 %v393
        %v672 = vunpack.c.h.b16 %v393
        %v673 = vunpack.c.l.b16 %v394
        %v674 = vunpack.c.h.b16 %v394
        %v675 = vunpack.c.l.b16 %v395
        %v676 = vunpack.c.h.b16 %v395
        %v677 = vunpack.c.l.b16 %v396
        %v678 = vunpack.c.h.b16 %v396
        %v679 = vunpack.c.l.b16 %v397
        %v680 = vunpack.c.h.b16 %v397
        %v681 = vunpack.c.l.b16 %v398
        %v682 = vunpack.c.h.b16 %v398
        %v683 = vunpack.c.l.b16 %v399
        %v684 = vunpack.c.h.b16 %v399
        %v685 = vunpack.c.l.b16 %v400
        %v686 = vunpack.c.h.b16 %v400
        %v687 = vunpack.c.l.b16 %v401
        %v688 = vunpack.c.h.b16 %v401
        %v689 = vunpack.c.l.b16 %v402
        %v690 = vunpack.c.h.b16 %v402
        %v691 = vpack.c.b16 %v629, %v627
        %v692 = vpack.c.b16 %v630, %v628
        %v693 = vpack.c.b16 %v633, %v631
        %v694 = vpack.c.b16 %v634, %v632
        %v695 = vpack.c.b16 %v637, %v635
        %v696 = vpack.c.b16 %v638, %v636
        %v697 = vpack.c.b16 %v641, %v639
        %v698 = vpack.c.b16 %v642, %v640
        %v699 = vpack.c.b16 %v645, %v643
        %v700 = vpack.c.b16 %v646, %v644
        %v701 = vpack.c.b16 %v649, %v647
        %v702 = vpack.c.b16 %v650, %v648
        %v703 = vpack.c.b16 %v653, %v651
        %v704 = vpack.c.b16 %v654, %v652
        %v705 = vpack.c.b16 %v657, %v655
        %v706 = vpack.c.b16 %v658, %v656
        %v707 = vpack.c.b16 %v661, %v659
        %v708 = vpack.c.b16 %v662, %v660
        %v709 = vpack.c.b16 %v665, %v663
        %v710 = vpack.c.b16 %v666, %v664
        %v711 = vpack.c.b16 %v669, %v667
        %v712 = vpack.c.b16 %v670, %v668
        %v713 = vpack.c.b16 %v673, %v671
        %v714 = vpack.c.b16 %v674, %v672
        %v715 = vpack.c.b16 %v677, %v675
        %v716 = vpack.c.b16 %v678, %v676
        %v717 = vpack.c.b16 %v681, %v679
        %v718 = vpack.c.b16 %v682, %v680
        %v719 = vpack.c.b16 %v685, %v683
        %v720 = vpack.c.b16 %v686, %v684
        %v721 = vpack.c.b16 %v689, %v687
        %v722 = vpack.c.b16 %v690, %v688
        %755 = vmatpush.bf16.msra.mxu0 %v362
        %756 = vmatpush.bf16.msra.mxu0 %v361
        %757 = vmatpush.bf16.msra.mxu0 %v360
        %758 = vmatpush.bf16.msra.mxu0 %v359
        %759 = vmatpush.bf16.msra.mxu0 %v358
        %760 = vmatpush.bf16.msra.mxu0 %v357
        %761 = vmatpush.bf16.msra.mxu0 %v356
        %762 = vmatpush.bf16.msra.mxu0 %v355
        %763 = vmatmul.bf16.gmra.mxu0 %v691
        %v764 = vpop.f32.mrf.mxu0
        %v765 = vadd.f32 %v438, %v764
        %v766 = vpop.f32.mrf.mxu0
        %v767 = vadd.f32 %v443, %v766
        %768 = vmatmul.bf16.gmra.mxu0 %v693
        %v769 = vpop.f32.mrf.mxu0
        %v770 = vadd.f32 %v448, %v769
        %v771 = vpop.f32.mrf.mxu0
        %v772 = vadd.f32 %v453, %v771
        %773 = vmatmul.bf16.gmra.mxu0 %v695
        %v774 = vpop.f32.mrf.mxu0
        %v775 = vadd.f32 %v458, %v774
        %v776 = vpop.f32.mrf.mxu0
        %v777 = vadd.f32 %v463, %v776
        %778 = vmatmul.bf16.gmra.mxu0 %v697
        %v779 = vpop.f32.mrf.mxu0
        %v780 = vadd.f32 %v468, %v779
        %v781 = vpop.f32.mrf.mxu0
        %v782 = vadd.f32 %v473, %v781
        %783 = vmatmul.bf16.gmra.mxu0 %v699
        %v784 = vpop.f32.mrf.mxu0
        %v785 = vadd.f32 %v478, %v784
        %v786 = vpop.f32.mrf.mxu0
        %v787 = vadd.f32 %v483, %v786
        %788 = vmatmul.bf16.gmra.mxu0 %v701
        %v789 = vpop.f32.mrf.mxu0
        %v790 = vadd.f32 %v488, %v789
        %v791 = vpop.f32.mrf.mxu0
        %v792 = vadd.f32 %v493, %v791
        %793 = vmatmul.bf16.gmra.mxu0 %v703
        %v794 = vpop.f32.mrf.mxu0
        %v795 = vadd.f32 %v498, %v794
        %v796 = vpop.f32.mrf.mxu0
        %v797 = vadd.f32 %v503, %v796
        %798 = vmatmul.bf16.gmra.mxu0 %v705
        %v799 = vpop.f32.mrf.mxu0
        %v800 = vadd.f32 %v508, %v799
        %v801 = vpop.f32.mrf.mxu0
        %v802 = vadd.f32 %v513, %v801
        %803 = vmatmul.bf16.gmra.mxu0 %v707
        %v804 = vpop.f32.mrf.mxu0
        %v805 = vadd.f32 %v518, %v804
        %v806 = vpop.f32.mrf.mxu0
        %v807 = vadd.f32 %v523, %v806
        %808 = vmatmul.bf16.gmra.mxu0 %v709
        %v809 = vpop.f32.mrf.mxu0
        %v810 = vadd.f32 %v528, %v809
        %v811 = vpop.f32.mrf.mxu0
        %v812 = vadd.f32 %v533, %v811
        %813 = vmatmul.bf16.gmra.mxu0 %v711
        %v814 = vpop.f32.mrf.mxu0
        %v815 = vadd.f32 %v538, %v814
        %v816 = vpop.f32.mrf.mxu0
        %v817 = vadd.f32 %v543, %v816
        %818 = vmatmul.bf16.gmra.mxu0 %v713
        %v819 = vpop.f32.mrf.mxu0
        %v820 = vadd.f32 %v548, %v819
        %v821 = vpop.f32.mrf.mxu0
        %v822 = vadd.f32 %v553, %v821
        %823 = vmatmul.bf16.gmra.mxu0 %v715
        %v824 = vpop.f32.mrf.mxu0
        %v825 = vadd.f32 %v558, %v824
        %v826 = vpop.f32.mrf.mxu0
        %v827 = vadd.f32 %v563, %v826
        %828 = vmatmul.bf16.gmra.mxu0 %v717
        %v829 = vpop.f32.mrf.mxu0
        %v830 = vadd.f32 %v568, %v829
        %v831 = vpop.f32.mrf.mxu0
        %v832 = vadd.f32 %v573, %v831
        %833 = vmatmul.bf16.gmra.mxu0 %v719
        %v834 = vpop.f32.mrf.mxu0
        %v835 = vadd.f32 %v578, %v834
        %v836 = vpop.f32.mrf.mxu0
        %v837 = vadd.f32 %v583, %v836
        %838 = vmatmul.bf16.gmra.mxu0 %v721
        %v839 = vpop.f32.mrf.mxu0
        %v840 = vadd.f32 %v588, %v839
        %v841 = vpop.f32.mrf.mxu0
        %v842 = vadd.f32 %v593, %v841
        %843 = vdwg.mxu0
        %844 = vmatpush.bf16.msra.mxu0 %v370
        %845 = vmatpush.bf16.msra.mxu0 %v369
        %846 = vmatpush.bf16.msra.mxu0 %v368
        %847 = vmatpush.bf16.msra.mxu0 %v367
        %848 = vmatpush.bf16.msra.mxu0 %v366
        %849 = vmatpush.bf16.msra.mxu0 %v365
        %850 = vmatpush.bf16.msra.mxu0 %v364
        %851 = vmatpush.bf16.msra.mxu0 %v363
        %852 = vmatmul.bf16.gmra.mxu0 %v692
        %v853 = vpop.f32.mrf.mxu0
        %v854 = vadd.f32 %v765, %v853
        %v855 = vpop.f32.mrf.mxu0
        %v856 = vadd.f32 %v767, %v855
        %857 = vmatmul.bf16.gmra.mxu0 %v694
        %v858 = vpop.f32.mrf.mxu0
        %v859 = vadd.f32 %v770, %v858
        %v860 = vpop.f32.mrf.mxu0
        %v861 = vadd.f32 %v772, %v860
        %862 = vmatmul.bf16.gmra.mxu0 %v696
        %v863 = vpop.f32.mrf.mxu0
        %v864 = vadd.f32 %v775, %v863
        %v865 = vpop.f32.mrf.mxu0
        %v866 = vadd.f32 %v777, %v865
        %867 = vmatmul.bf16.gmra.mxu0 %v698
        %v868 = vpop.f32.mrf.mxu0
        %v869 = vadd.f32 %v780, %v868
        %v870 = vpop.f32.mrf.mxu0
        %v871 = vadd.f32 %v782, %v870
        %872 = vmatmul.bf16.gmra.mxu0 %v700
        %v873 = vpop.f32.mrf.mxu0
        %v874 = vadd.f32 %v785, %v873
        %v875 = vpop.f32.mrf.mxu0
        %v876 = vadd.f32 %v787, %v875
        %877 = vmatmul.bf16.gmra.mxu0 %v702
        %v878 = vpop.f32.mrf.mxu0
        %v879 = vadd.f32 %v790, %v878
        %v880 = vpop.f32.mrf.mxu0
        %v881 = vadd.f32 %v792, %v880
        %882 = vmatmul.bf16.gmra.mxu0 %v704
        %v883 = vpop.f32.mrf.mxu0
        %v884 = vadd.f32 %v795, %v883
        %v885 = vpop.f32.mrf.mxu0
        %v886 = vadd.f32 %v797, %v885
        %887 = vmatmul.bf16.gmra.mxu0 %v706
        %v888 = vpop.f32.mrf.mxu0
        %v889 = vadd.f32 %v800, %v888
        %v890 = vpop.f32.mrf.mxu0
        %v891 = vadd.f32 %v802, %v890
        %892 = vmatmul.bf16.gmra.mxu0 %v708
        %v893 = vpop.f32.mrf.mxu0
        %v894 = vadd.f32 %v805, %v893
        %v895 = vpop.f32.mrf.mxu0
        %v896 = vadd.f32 %v807, %v895
        %897 = vmatmul.bf16.gmra.mxu0 %v710
        %v898 = vpop.f32.mrf.mxu0
        %v899 = vadd.f32 %v810, %v898
        %v900 = vpop.f32.mrf.mxu0
        %v901 = vadd.f32 %v812, %v900
        %902 = vmatmul.bf16.gmra.mxu0 %v712
        %v903 = vpop.f32.mrf.mxu0
        %v904 = vadd.f32 %v815, %v903
        %v905 = vpop.f32.mrf.mxu0
        %v906 = vadd.f32 %v817, %v905
        %907 = vmatmul.bf16.gmra.mxu0 %v714
        %v908 = vpop.f32.mrf.mxu0
        %v909 = vadd.f32 %v820, %v908
        %v910 = vpop.f32.mrf.mxu0
        %v911 = vadd.f32 %v822, %v910
        %912 = vmatmul.bf16.gmra.mxu0 %v716
        %v913 = vpop.f32.mrf.mxu0
        %v914 = vadd.f32 %v825, %v913
        %v915 = vpop.f32.mrf.mxu0
        %v916 = vadd.f32 %v827, %v915
        %917 = vmatmul.bf16.gmra.mxu0 %v718
        %v918 = vpop.f32.mrf.mxu0
        %v919 = vadd.f32 %v830, %v918
        %v920 = vpop.f32.mrf.mxu0
        %v921 = vadd.f32 %v832, %v920
        %922 = vmatmul.bf16.gmra.mxu0 %v720
        %v923 = vpop.f32.mrf.mxu0
        %v924 = vadd.f32 %v835, %v923
        %v925 = vpop.f32.mrf.mxu0
        %v926 = vadd.f32 %v837, %v925
        %927 = vmatmul.bf16.gmra.mxu0 %v722
        %v928 = vpop.f32.mrf.mxu0
        %v929 = vadd.f32 %v840, %v928
        %v930 = vpop.f32.mrf.mxu0
        %v931 = vadd.f32 %v842, %v930
        %932 = vdwg.mxu0
        %v933 = vld [vmem:[%s285] sm:$0xff]
        %v934 = vld [vmem:[%s285 + $0x8] sm:$0xff]
        %v935 = vld [vmem:[%s285 + $0x10] sm:$0xff]
        %v936 = vld [vmem:[%s285 + $0x18] sm:$0xff]
        %v937 = vld [vmem:[%s285 + $0x20] sm:$0xff]
        %v938 = vld [vmem:[%s285 + $0x28] sm:$0xff]
        %v939 = vld [vmem:[%s285 + $0x30] sm:$0xff]
        %v940 = vld [vmem:[%s285 + $0x38] sm:$0xff]
        %v941 = vld [vmem:[%s285 + $0x40] sm:$0xff]
        %v942 = vld [vmem:[%s285 + $0x48] sm:$0xff]
        %v943 = vld [vmem:[%s285 + $0x50] sm:$0xff]
        %v944 = vld [vmem:[%s285 + $0x58] sm:$0xff]
        %v945 = vld [vmem:[%s285 + $0x60] sm:$0xff]
        %v946 = vld [vmem:[%s285 + $0x68] sm:$0xff]
        %v947 = vld [vmem:[%s285 + $0x70] sm:$0xff]
        %v948 = vld [vmem:[%s285 + $0x78] sm:$0xff]
        %v949 = vld [vmem:[%s285 + $0x80] sm:$0xff]
        %v950 = vld [vmem:[%s285 + $0x88] sm:$0xff]
        %v951 = vld [vmem:[%s285 + $0x90] sm:$0xff]
        %v952 = vld [vmem:[%s285 + $0x98] sm:$0xff]
        %v953 = vld [vmem:[%s285 + $0xa0] sm:$0xff]
        %v954 = vld [vmem:[%s285 + $0xa8] sm:$0xff]
        %v955 = vld [vmem:[%s285 + $0xb0] sm:$0xff]
        %v956 = vld [vmem:[%s285 + $0xb8] sm:$0xff]
        %v957 = vld [vmem:[%s285 + $0xc0] sm:$0xff]
        %v958 = vld [vmem:[%s285 + $0xc8] sm:$0xff]
        %v959 = vld [vmem:[%s285 + $0xd0] sm:$0xff]
        %v960 = vld [vmem:[%s285 + $0xd8] sm:$0xff]
        %v961 = vld [vmem:[%s285 + $0xe0] sm:$0xff]
        %v962 = vld [vmem:[%s285 + $0xe8] sm:$0xff]
        %v963 = vld [vmem:[%s285 + $0xf0] sm:$0xff]
        %v964 = vld [vmem:[%s285 + $0xf8] sm:$0xff]
        %v965 = vadd.f32 %v854, %v933
        %v966 = vadd.f32 %v856, %v934
        %v967 = vadd.f32 %v859, %v935
        %v968 = vadd.f32 %v861, %v936
        %v969 = vadd.f32 %v864, %v937
        %v970 = vadd.f32 %v866, %v938
        %v971 = vadd.f32 %v869, %v939
        %v972 = vadd.f32 %v871, %v940
        %v973 = vadd.f32 %v874, %v941
        %v974 = vadd.f32 %v876, %v942
        %v975 = vadd.f32 %v879, %v943
        %v976 = vadd.f32 %v881, %v944
        %v977 = vadd.f32 %v884, %v945
        %v978 = vadd.f32 %v886, %v946
        %v979 = vadd.f32 %v889, %v947
        %v980 = vadd.f32 %v891, %v948
        %v981 = vadd.f32 %v894, %v949
        %v982 = vadd.f32 %v896, %v950
        %v983 = vadd.f32 %v899, %v951
        %v984 = vadd.f32 %v901, %v952
        %v985 = vadd.f32 %v904, %v953
        %v986 = vadd.f32 %v906, %v954
        %v987 = vadd.f32 %v909, %v955
        %v988 = vadd.f32 %v911, %v956
        %v989 = vadd.f32 %v914, %v957
        %v990 = vadd.f32 %v916, %v958
        %v991 = vadd.f32 %v919, %v959
        %v992 = vadd.f32 %v921, %v960
        %v993 = vadd.f32 %v924, %v961
        %v994 = vadd.f32 %v926, %v962
        %v995 = vadd.f32 %v929, %v963
        %v996 = vadd.f32 %v931, %v964
        %v997 = vmax.f32 %v965, 0.0
        %v998 = vmax.f32 %v966, 0.0
        %v999 = vmax.f32 %v967, 0.0
        %v1000 = vmax.f32 %v968, 0.0
        %v1001 = vmax.f32 %v969, 0.0
        %v1002 = vmax.f32 %v970, 0.0
        %v1003 = vmax.f32 %v971, 0.0
        %v1004 = vmax.f32 %v972, 0.0
        %v1005 = vmax.f32 %v973, 0.0
        %v1006 = vmax.f32 %v974, 0.0
        %v1007 = vmax.f32 %v975, 0.0
        %v1008 = vmax.f32 %v976, 0.0
        %v1009 = vmax.f32 %v977, 0.0
        %v1010 = vmax.f32 %v978, 0.0
        %v1011 = vmax.f32 %v979, 0.0
        %v1012 = vmax.f32 %v980, 0.0
        %v1013 = vmax.f32 %v981, 0.0
        %v1014 = vmax.f32 %v982, 0.0
        %v1015 = vmax.f32 %v983, 0.0
        %v1016 = vmax.f32 %v984, 0.0
        %v1017 = vmax.f32 %v985, 0.0
        %v1018 = vmax.f32 %v986, 0.0
        %v1019 = vmax.f32 %v987, 0.0
        %v1020 = vmax.f32 %v988, 0.0
        %v1021 = vmax.f32 %v989, 0.0
        %v1022 = vmax.f32 %v990, 0.0
        %v1023 = vmax.f32 %v991, 0.0
        %v1024 = vmax.f32 %v992, 0.0
        %v1025 = vmax.f32 %v993, 0.0
        %v1026 = vmax.f32 %v994, 0.0
        %v1027 = vmax.f32 %v995, 0.0
        %v1028 = vmax.f32 %v996, 0.0
        %v1029 = vld [vmem:[#allocation7] sm:$0xff]
        %v1030 = vld [vmem:[#allocation7 + $0x20] sm:$0xff]
        %v1031 = vld [vmem:[#allocation7 + $0x40] sm:$0xff]
        %v1032 = vld [vmem:[#allocation7 + $0x60] sm:$0xff]
        %v1033 = vld [vmem:[#allocation7 + $0x80] sm:$0xff]
        %v1034 = vld [vmem:[#allocation7 + $0xa0] sm:$0xff]
        %v1035 = vld [vmem:[#allocation7 + $0xc0] sm:$0xff]
        %v1036 = vld [vmem:[#allocation7 + $0xe0] sm:$0xff]
        %v1037 = vld [vmem:[#allocation7 + $0x100] sm:$0xff]
        %v1038 = vld [vmem:[#allocation7 + $0x120] sm:$0xff]
        %v1039 = vld [vmem:[#allocation7 + $0x140] sm:$0xff]
        %v1040 = vld [vmem:[#allocation7 + $0x160] sm:$0xff]
        %v1041 = vld [vmem:[#allocation7 + $0x180] sm:$0xff]
        %v1042 = vld [vmem:[#allocation7 + $0x1a0] sm:$0xff]
        %v1043 = vld [vmem:[#allocation7 + $0x1c0] sm:$0xff]
        %v1044 = vld [vmem:[#allocation7 + $0x1e0] sm:$0xff]
        %v1045 = vld [vmem:[#allocation7 + $0x200] sm:$0xff]
        %v1046 = vld [vmem:[#allocation7 + $0x220] sm:$0xff]
        %v1047 = vld [vmem:[#allocation7 + $0x240] sm:$0xff]
        %v1048 = vld [vmem:[#allocation7 + $0x260] sm:$0xff]
        %v1049 = vld [vmem:[#allocation7 + $0x280] sm:$0xff]
        %v1050 = vld [vmem:[#allocation7 + $0x2a0] sm:$0xff]
        %v1051 = vld [vmem:[#allocation7 + $0x2c0] sm:$0xff]
        %v1052 = vld [vmem:[#allocation7 + $0x2e0] sm:$0xff]
        %v1053 = vld [vmem:[#allocation7 + $0x300] sm:$0xff]
        %v1054 = vld [vmem:[#allocation7 + $0x320] sm:$0xff]
        %v1055 = vld [vmem:[#allocation7 + $0x340] sm:$0xff]
        %v1056 = vld [vmem:[#allocation7 + $0x360] sm:$0xff]
        %v1057 = vld [vmem:[#allocation7 + $0x380] sm:$0xff]
        %v1058 = vld [vmem:[#allocation7 + $0x3a0] sm:$0xff]
        %v1059 = vld [vmem:[#allocation7 + $0x3c0] sm:$0xff]
        %v1060 = vld [vmem:[#allocation7 + $0x3e0] sm:$0xff]
        %v1061 = vpack.c.bf16 %v998, %v997
        %v1062 = vpack.c.bf16 %v1000, %v999
        %v1063 = vpack.c.bf16 %v1002, %v1001
        %v1064 = vpack.c.bf16 %v1004, %v1003
        %v1065 = vpack.c.bf16 %v1006, %v1005
        %v1066 = vpack.c.bf16 %v1008, %v1007
        %v1067 = vpack.c.bf16 %v1010, %v1009
        %v1068 = vpack.c.bf16 %v1012, %v1011
        %v1069 = vpack.c.bf16 %v1014, %v1013
        %v1070 = vpack.c.bf16 %v1016, %v1015
        %v1071 = vpack.c.bf16 %v1018, %v1017
        %v1072 = vpack.c.bf16 %v1020, %v1019
        %v1073 = vpack.c.bf16 %v1022, %v1021
        %v1074 = vpack.c.bf16 %v1024, %v1023
        %v1075 = vpack.c.bf16 %v1026, %v1025
        %v1076 = vpack.c.bf16 %v1028, %v1027
        %v1077 = vld [vmem:[%s1 + $0x100] sm:$0xff]
        %v1078 = vld [vmem:[%s1 + $0x108] sm:$0xff]
        %v1079 = vld [vmem:[%s1 + $0x110] sm:$0xff]
        %v1080 = vld [vmem:[%s1 + $0x118] sm:$0xff]
        %v1081 = vld [vmem:[%s1 + $0x120] sm:$0xff]
        %v1082 = vld [vmem:[%s1 + $0x128] sm:$0xff]
        %v1083 = vld [vmem:[%s1 + $0x130] sm:$0xff]
        %v1084 = vld [vmem:[%s1 + $0x138] sm:$0xff]
        %v1085 = vld [vmem:[%s1 + $0x140] sm:$0xff]
        %v1086 = vld [vmem:[%s1 + $0x148] sm:$0xff]
        %v1087 = vld [vmem:[%s1 + $0x150] sm:$0xff]
        %v1088 = vld [vmem:[%s1 + $0x158] sm:$0xff]
        %v1089 = vld [vmem:[%s1 + $0x160] sm:$0xff]
        %v1090 = vld [vmem:[%s1 + $0x168] sm:$0xff]
        %v1091 = vld [vmem:[%s1 + $0x170] sm:$0xff]
        %v1092 = vld [vmem:[%s1 + $0x178] sm:$0xff]
        %v1093 = vld [vmem:[%s1 + $0x180] sm:$0xff]
        %v1094 = vld [vmem:[%s1 + $0x188] sm:$0xff]
        %v1095 = vld [vmem:[%s1 + $0x190] sm:$0xff]
        %v1096 = vld [vmem:[%s1 + $0x198] sm:$0xff]
        %v1097 = vld [vmem:[%s1 + $0x1a0] sm:$0xff]
        %v1098 = vld [vmem:[%s1 + $0x1a8] sm:$0xff]
        %v1099 = vld [vmem:[%s1 + $0x1b0] sm:$0xff]
        %v1100 = vld [vmem:[%s1 + $0x1b8] sm:$0xff]
        %v1101 = vld [vmem:[%s1 + $0x1c0] sm:$0xff]
        %v1102 = vld [vmem:[%s1 + $0x1c8] sm:$0xff]
        %v1103 = vld [vmem:[%s1 + $0x1d0] sm:$0xff]
        %v1104 = vld [vmem:[%s1 + $0x1d8] sm:$0xff]
        %v1105 = vld [vmem:[%s1 + $0x1e0] sm:$0xff]
        %v1106 = vld [vmem:[%s1 + $0x1e8] sm:$0xff]
        %v1107 = vld [vmem:[%s1 + $0x1f0] sm:$0xff]
        %v1108 = vld [vmem:[%s1 + $0x1f8] sm:$0xff]
        %v1109 = vld [vmem:[%s2 + $0x100] sm:$0xff]
        %v1110 = vld [vmem:[%s2 + $0x108] sm:$0xff]
        %v1111 = vld [vmem:[%s2 + $0x110] sm:$0xff]
        %v1112 = vld [vmem:[%s2 + $0x118] sm:$0xff]
        %v1113 = vld [vmem:[%s2 + $0x120] sm:$0xff]
        %v1114 = vld [vmem:[%s2 + $0x128] sm:$0xff]
        %v1115 = vld [vmem:[%s2 + $0x130] sm:$0xff]
        %v1116 = vld [vmem:[%s2 + $0x138] sm:$0xff]
        %v1117 = vld [vmem:[%s2 + $0x140] sm:$0xff]
        %v1118 = vld [vmem:[%s2 + $0x148] sm:$0xff]
        %v1119 = vld [vmem:[%s2 + $0x150] sm:$0xff]
        %v1120 = vld [vmem:[%s2 + $0x158] sm:$0xff]
        %v1121 = vld [vmem:[%s2 + $0x160] sm:$0xff]
        %v1122 = vld [vmem:[%s2 + $0x168] sm:$0xff]
        %v1123 = vld [vmem:[%s2 + $0x170] sm:$0xff]
        %v1124 = vld [vmem:[%s2 + $0x178] sm:$0xff]
        %v1125 = vld [vmem:[%s2 + $0x180] sm:$0xff]
        %v1126 = vld [vmem:[%s2 + $0x188] sm:$0xff]
        %v1127 = vld [vmem:[%s2 + $0x190] sm:$0xff]
        %v1128 = vld [vmem:[%s2 + $0x198] sm:$0xff]
        %v1129 = vld [vmem:[%s2 + $0x1a0] sm:$0xff]
        %v1130 = vld [vmem:[%s2 + $0x1a8] sm:$0xff]
        %v1131 = vld [vmem:[%s2 + $0x1b0] sm:$0xff]
        %v1132 = vld [vmem:[%s2 + $0x1b8] sm:$0xff]
        %v1133 = vld [vmem:[%s2 + $0x1c0] sm:$0xff]
        %v1134 = vld [vmem:[%s2 + $0x1c8] sm:$0xff]
        %v1135 = vld [vmem:[%s2 + $0x1d0] sm:$0xff]
        %v1136 = vld [vmem:[%s2 + $0x1d8] sm:$0xff]
        %v1137 = vld [vmem:[%s2 + $0x1e0] sm:$0xff]
        %v1138 = vld [vmem:[%s2 + $0x1e8] sm:$0xff]
        %v1139 = vld [vmem:[%s2 + $0x1f0] sm:$0xff]
        %v1140 = vld [vmem:[%s2 + $0x1f8] sm:$0xff]
        %1142 = vset.pattern.permute.xlu0 0
        %1143 = vperm.xlu0 %1142, %v1109
        %v1144 = vpop.permute.xlu0 %1143
        %1147 = vset.pattern.permute.xlu0 0
        %1148 = vperm.xlu0 %1147, %v1110
        %v1149 = vpop.permute.xlu0 %1148
        %1152 = vset.pattern.permute.xlu0 0
        %1153 = vperm.xlu0 %1152, %v1111
        %v1154 = vpop.permute.xlu0 %1153
        %1157 = vset.pattern.permute.xlu0 0
        %1158 = vperm.xlu0 %1157, %v1112
        %v1159 = vpop.permute.xlu0 %1158
        %1162 = vset.pattern.permute.xlu0 0
        %1163 = vperm.xlu0 %1162, %v1113
        %v1164 = vpop.permute.xlu0 %1163
        %1167 = vset.pattern.permute.xlu0 0
        %1168 = vperm.xlu0 %1167, %v1114
        %v1169 = vpop.permute.xlu0 %1168
        %1172 = vset.pattern.permute.xlu0 0
        %1173 = vperm.xlu0 %1172, %v1115
        %v1174 = vpop.permute.xlu0 %1173
        %1177 = vset.pattern.permute.xlu0 0
        %1178 = vperm.xlu0 %1177, %v1116
        %v1179 = vpop.permute.xlu0 %1178
        %1182 = vset.pattern.permute.xlu0 0
        %1183 = vperm.xlu0 %1182, %v1117
        %v1184 = vpop.permute.xlu0 %1183
        %1187 = vset.pattern.permute.xlu0 0
        %1188 = vperm.xlu0 %1187, %v1118
        %v1189 = vpop.permute.xlu0 %1188
        %1192 = vset.pattern.permute.xlu0 0
        %1193 = vperm.xlu0 %1192, %v1119
        %v1194 = vpop.permute.xlu0 %1193
        %1197 = vset.pattern.permute.xlu0 0
        %1198 = vperm.xlu0 %1197, %v1120
        %v1199 = vpop.permute.xlu0 %1198
        %1202 = vset.pattern.permute.xlu0 0
        %1203 = vperm.xlu0 %1202, %v1121
        %v1204 = vpop.permute.xlu0 %1203
        %1207 = vset.pattern.permute.xlu0 0
        %1208 = vperm.xlu0 %1207, %v1122
        %v1209 = vpop.permute.xlu0 %1208
        %1212 = vset.pattern.permute.xlu0 0
        %1213 = vperm.xlu0 %1212, %v1123
        %v1214 = vpop.permute.xlu0 %1213
        %1217 = vset.pattern.permute.xlu0 0
        %1218 = vperm.xlu0 %1217, %v1124
        %v1219 = vpop.permute.xlu0 %1218
        %1222 = vset.pattern.permute.xlu0 0
        %1223 = vperm.xlu0 %1222, %v1125
        %v1224 = vpop.permute.xlu0 %1223
        %1227 = vset.pattern.permute.xlu0 0
        %1228 = vperm.xlu0 %1227, %v1126
        %v1229 = vpop.permute.xlu0 %1228
        %1232 = vset.pattern.permute.xlu0 0
        %1233 = vperm.xlu0 %1232, %v1127
        %v1234 = vpop.permute.xlu0 %1233
        %1237 = vset.pattern.permute.xlu0 0
        %1238 = vperm.xlu0 %1237, %v1128
        %v1239 = vpop.permute.xlu0 %1238
        %1242 = vset.pattern.permute.xlu0 0
        %1243 = vperm.xlu0 %1242, %v1129
        %v1244 = vpop.permute.xlu0 %1243
        %1247 = vset.pattern.permute.xlu0 0
        %1248 = vperm.xlu0 %1247, %v1130
        %v1249 = vpop.permute.xlu0 %1248
        %1252 = vset.pattern.permute.xlu0 0
        %1253 = vperm.xlu0 %1252, %v1131
        %v1254 = vpop.permute.xlu0 %1253
        %1257 = vset.pattern.permute.xlu0 0
        %1258 = vperm.xlu0 %1257, %v1132
        %v1259 = vpop.permute.xlu0 %1258
        %1262 = vset.pattern.permute.xlu0 0
        %1263 = vperm.xlu0 %1262, %v1133
        %v1264 = vpop.permute.xlu0 %1263
        %1267 = vset.pattern.permute.xlu0 0
        %1268 = vperm.xlu0 %1267, %v1134
        %v1269 = vpop.permute.xlu0 %1268
        %1272 = vset.pattern.permute.xlu0 0
        %1273 = vperm.xlu0 %1272, %v1135
        %v1274 = vpop.permute.xlu0 %1273
        %1277 = vset.pattern.permute.xlu0 0
        %1278 = vperm.xlu0 %1277, %v1136
        %v1279 = vpop.permute.xlu0 %1278
        %1282 = vset.pattern.permute.xlu0 0
        %1283 = vperm.xlu0 %1282, %v1137
        %v1284 = vpop.permute.xlu0 %1283
        %1287 = vset.pattern.permute.xlu0 0
        %1288 = vperm.xlu0 %1287, %v1138
        %v1289 = vpop.permute.xlu0 %1288
        %1292 = vset.pattern.permute.xlu0 0
        %1293 = vperm.xlu0 %1292, %v1139
        %v1294 = vpop.permute.xlu0 %1293
        %1297 = vset.pattern.permute.xlu0 0
        %1298 = vperm.xlu0 %1297, %v1140
        %v1299 = vpop.permute.xlu0 %1298
        %v1333 = vunpack.c.l.b16 %v1077
        %v1334 = vunpack.c.h.b16 %v1077
        %v1335 = vunpack.c.l.b16 %v1078
        %v1336 = vunpack.c.h.b16 %v1078
        %v1337 = vunpack.c.l.b16 %v1079
        %v1338 = vunpack.c.h.b16 %v1079
        %v1339 = vunpack.c.l.b16 %v1080
        %v1340 = vunpack.c.h.b16 %v1080
        %v1341 = vunpack.c.l.b16 %v1081
        %v1342 = vunpack.c.h.b16 %v1081
        %v1343 = vunpack.c.l.b16 %v1082
        %v1344 = vunpack.c.h.b16 %v1082
        %v1345 = vunpack.c.l.b16 %v1083
        %v1346 = vunpack.c.h.b16 %v1083
        %v1347 = vunpack.c.l.b16 %v1084
        %v1348 = vunpack.c.h.b16 %v1084
        %v1349 = vunpack.c.l.b16 %v1085
        %v1350 = vunpack.c.h.b16 %v1085
        %v1351 = vunpack.c.l.b16 %v1086
        %v1352 = vunpack.c.h.b16 %v1086
        %v1353 = vunpack.c.l.b16 %v1087
        %v1354 = vunpack.c.h.b16 %v1087
        %v1355 = vunpack.c.l.b16 %v1088
        %v1356 = vunpack.c.h.b16 %v1088
        %v1357 = vunpack.c.l.b16 %v1089
        %v1358 = vunpack.c.h.b16 %v1089
        %v1359 = vunpack.c.l.b16 %v1090
        %v1360 = vunpack.c.h.b16 %v1090
        %v1361 = vunpack.c.l.b16 %v1091
        %v1362 = vunpack.c.h.b16 %v1091
        %v1363 = vunpack.c.l.b16 %v1092
        %v1364 = vunpack.c.h.b16 %v1092
        %v1365 = vunpack.c.l.b16 %v1093
        %v1366 = vunpack.c.h.b16 %v1093
        %v1367 = vunpack.c.l.b16 %v1094
        %v1368 = vunpack.c.h.b16 %v1094
        %v1369 = vunpack.c.l.b16 %v1095
        %v1370 = vunpack.c.h.b16 %v1095
        %v1371 = vunpack.c.l.b16 %v1096
        %v1372 = vunpack.c.h.b16 %v1096
        %v1373 = vunpack.c.l.b16 %v1097
        %v1374 = vunpack.c.h.b16 %v1097
        %v1375 = vunpack.c.l.b16 %v1098
        %v1376 = vunpack.c.h.b16 %v1098
        %v1377 = vunpack.c.l.b16 %v1099
        %v1378 = vunpack.c.h.b16 %v1099
        %v1379 = vunpack.c.l.b16 %v1100
        %v1380 = vunpack.c.h.b16 %v1100
        %v1381 = vunpack.c.l.b16 %v1101
        %v1382 = vunpack.c.h.b16 %v1101
        %v1383 = vunpack.c.l.b16 %v1102
        %v1384 = vunpack.c.h.b16 %v1102
        %v1385 = vunpack.c.l.b16 %v1103
        %v1386 = vunpack.c.h.b16 %v1103
        %v1387 = vunpack.c.l.b16 %v1104
        %v1388 = vunpack.c.h.b16 %v1104
        %v1389 = vunpack.c.l.b16 %v1105
        %v1390 = vunpack.c.h.b16 %v1105
        %v1391 = vunpack.c.l.b16 %v1106
        %v1392 = vunpack.c.h.b16 %v1106
        %v1393 = vunpack.c.l.b16 %v1107
        %v1394 = vunpack.c.h.b16 %v1107
        %v1395 = vunpack.c.l.b16 %v1108
        %v1396 = vunpack.c.h.b16 %v1108
        %v1397 = vpack.c.b16 %v1335, %v1333
        %v1398 = vpack.c.b16 %v1336, %v1334
        %v1399 = vpack.c.b16 %v1339, %v1337
        %v1400 = vpack.c.b16 %v1340, %v1338
        %v1401 = vpack.c.b16 %v1343, %v1341
        %v1402 = vpack.c.b16 %v1344, %v1342
        %v1403 = vpack.c.b16 %v1347, %v1345
        %v1404 = vpack.c.b16 %v1348, %v1346
        %v1405 = vpack.c.b16 %v1351, %v1349
        %v1406 = vpack.c.b16 %v1352, %v1350
        %v1407 = vpack.c.b16 %v1355, %v1353
        %v1408 = vpack.c.b16 %v1356, %v1354
        %v1409 = vpack.c.b16 %v1359, %v1357
        %v1410 = vpack.c.b16 %v1360, %v1358
        %v1411 = vpack.c.b16 %v1363, %v1361
        %v1412 = vpack.c.b16 %v1364, %v1362
        %v1413 = vpack.c.b16 %v1367, %v1365
        %v1414 = vpack.c.b16 %v1368, %v1366
        %v1415 = vpack.c.b16 %v1371, %v1369
        %v1416 = vpack.c.b16 %v1372, %v1370
        %v1417 = vpack.c.b16 %v1375, %v1373
        %v1418 = vpack.c.b16 %v1376, %v1374
        %v1419 = vpack.c.b16 %v1379, %v1377
        %v1420 = vpack.c.b16 %v1380, %v1378
        %v1421 = vpack.c.b16 %v1383, %v1381
        %v1422 = vpack.c.b16 %v1384, %v1382
        %v1423 = vpack.c.b16 %v1387, %v1385
        %v1424 = vpack.c.b16 %v1388, %v1386
        %v1425 = vpack.c.b16 %v1391, %v1389
        %v1426 = vpack.c.b16 %v1392, %v1390
        %v1427 = vpack.c.b16 %v1395, %v1393
        %v1428 = vpack.c.b16 %v1396, %v1394
        %1461 = vmatpush.bf16.msra.mxu0 %v362
        %1462 = vmatpush.bf16.msra.mxu0 %v361
        %1463 = vmatpush.bf16.msra.mxu0 %v360
        %1464 = vmatpush.bf16.msra.mxu0 %v359
        %1465 = vmatpush.bf16.msra.mxu0 %v358
        %1466 = vmatpush.bf16.msra.mxu0 %v357
        %1467 = vmatpush.bf16.msra.mxu0 %v356
        %1468 = vmatpush.bf16.msra.mxu0 %v355
        %1469 = vmatmul.bf16.gmra.mxu0 %v1397
        %v1470 = vpop.f32.mrf.mxu0
        %v1471 = vadd.f32 %v1144, %v1470
        %v1472 = vpop.f32.mrf.mxu0
        %v1473 = vadd.f32 %v1149, %v1472
        %1474 = vmatmul.bf16.gmra.mxu0 %v1399
        %v1475 = vpop.f32.mrf.mxu0
        %v1476 = vadd.f32 %v1154, %v1475
        %v1477 = vpop.f32.mrf.mxu0
        %v1478 = vadd.f32 %v1159, %v1477
        %1479 = vmatmul.bf16.gmra.mxu0 %v1401
        %v1480 = vpop.f32.mrf.mxu0
        %v1481 = vadd.f32 %v1164, %v1480
        %v1482 = vpop.f32.mrf.mxu0
        %v1483 = vadd.f32 %v1169, %v1482
        %1484 = vmatmul.bf16.gmra.mxu0 %v1403
        %v1485 = vpop.f32.mrf.mxu0
        %v1486 = vadd.f32 %v1174, %v1485
        %v1487 = vpop.f32.mrf.mxu0
        %v1488 = vadd.f32 %v1179, %v1487
        %1489 = vmatmul.bf16.gmra.mxu0 %v1405
        %v1490 = vpop.f32.mrf.mxu0
        %v1491 = vadd.f32 %v1184, %v1490
        %v1492 = vpop.f32.mrf.mxu0
        %v1493 = vadd.f32 %v1189, %v1492
        %1494 = vmatmul.bf16.gmra.mxu0 %v1407
        %v1495 = vpop.f32.mrf.mxu0
        %v1496 = vadd.f32 %v1194, %v1495
        %v1497 = vpop.f32.mrf.mxu0
        %v1498 = vadd.f32 %v1199, %v1497
        %1499 = vmatmul.bf16.gmra.mxu0 %v1409
        %v1500 = vpop.f32.mrf.mxu0
        %v1501 = vadd.f32 %v1204, %v1500
        %v1502 = vpop.f32.mrf.mxu0
        %v1503 = vadd.f32 %v1209, %v1502
        %1504 = vmatmul.bf16.gmra.mxu0 %v1411
        %v1505 = vpop.f32.mrf.mxu0
        %v1506 = vadd.f32 %v1214, %v1505
        %v1507 = vpop.f32.mrf.mxu0
        %v1508 = vadd.f32 %v1219, %v1507
        %1509 = vmatmul.bf16.gmra.mxu0 %v1413
        %v1510 = vpop.f32.mrf.mxu0
        %v1511 = vadd.f32 %v1224, %v1510
        %v1512 = vpop.f32.mrf.mxu0
        %v1513 = vadd.f32 %v1229, %v1512
        %1514 = vmatmul.bf16.gmra.mxu0 %v1415
        %v1515 = vpop.f32.mrf.mxu0
        %v1516 = vadd.f32 %v1234, %v1515
        %v1517 = vpop.f32.mrf.mxu0
        %v1518 = vadd.f32 %v1239, %v1517
        %1519 = vmatmul.bf16.gmra.mxu0 %v1417
        %v1520 = vpop.f32.mrf.mxu0
        %v1521 = vadd.f32 %v1244, %v1520
        %v1522 = vpop.f32.mrf.mxu0
        %v1523 = vadd.f32 %v1249, %v1522
        %1524 = vmatmul.bf16.gmra.mxu0 %v1419
        %v1525 = vpop.f32.mrf.mxu0
        %v1526 = vadd.f32 %v1254, %v1525
        %v1527 = vpop.f32.mrf.mxu0
        %v1528 = vadd.f32 %v1259, %v1527
        %1529 = vmatmul.bf16.gmra.mxu0 %v1421
        %v1530 = vpop.f32.mrf.mxu0
        %v1531 = vadd.f32 %v1264, %v1530
        %v1532 = vpop.f32.mrf.mxu0
        %v1533 = vadd.f32 %v1269, %v1532
        %1534 = vmatmul.bf16.gmra.mxu0 %v1423
        %v1535 = vpop.f32.mrf.mxu0
        %v1536 = vadd.f32 %v1274, %v1535
        %v1537 = vpop.f32.mrf.mxu0
        %v1538 = vadd.f32 %v1279, %v1537
        %1539 = vmatmul.bf16.gmra.mxu0 %v1425
        %v1540 = vpop.f32.mrf.mxu0
        %v1541 = vadd.f32 %v1284, %v1540
        %v1542 = vpop.f32.mrf.mxu0
        %v1543 = vadd.f32 %v1289, %v1542
        %1544 = vmatmul.bf16.gmra.mxu0 %v1427
        %v1545 = vpop.f32.mrf.mxu0
        %v1546 = vadd.f32 %v1294, %v1545
        %v1547 = vpop.f32.mrf.mxu0
        %v1548 = vadd.f32 %v1299, %v1547
        %1549 = vdwg.mxu0
        %1550 = vmatpush.bf16.msra.mxu0 %v370
        %1551 = vmatpush.bf16.msra.mxu0 %v369
        %1552 = vmatpush.bf16.msra.mxu0 %v368
        %1553 = vmatpush.bf16.msra.mxu0 %v367
        %1554 = vmatpush.bf16.msra.mxu0 %v366
        %1555 = vmatpush.bf16.msra.mxu0 %v365
        %1556 = vmatpush.bf16.msra.mxu0 %v364
        %1557 = vmatpush.bf16.msra.mxu0 %v363
        %1558 = vmatmul.bf16.gmra.mxu0 %v1398
        %v1559 = vpop.f32.mrf.mxu0
        %v1560 = vadd.f32 %v1471, %v1559
        %v1561 = vpop.f32.mrf.mxu0
        %v1562 = vadd.f32 %v1473, %v1561
        %1563 = vmatmul.bf16.gmra.mxu0 %v1400
        %v1564 = vpop.f32.mrf.mxu0
        %v1565 = vadd.f32 %v1476, %v1564
        %v1566 = vpop.f32.mrf.mxu0
        %v1567 = vadd.f32 %v1478, %v1566
        %1568 = vmatmul.bf16.gmra.mxu0 %v1402
        %v1569 = vpop.f32.mrf.mxu0
        %v1570 = vadd.f32 %v1481, %v1569
        %v1571 = vpop.f32.mrf.mxu0
        %v1572 = vadd.f32 %v1483, %v1571
        %1573 = vmatmul.bf16.gmra.mxu0 %v1404
        %v1574 = vpop.f32.mrf.mxu0
        %v1575 = vadd.f32 %v1486, %v1574
        %v1576 = vpop.f32.mrf.mxu0
        %v1577 = vadd.f32 %v1488, %v1576
        %1578 = vmatmul.bf16.gmra.mxu0 %v1406
        %v1579 = vpop.f32.mrf.mxu0
        %v1580 = vadd.f32 %v1491, %v1579
        %v1581 = vpop.f32.mrf.mxu0
        %v1582 = vadd.f32 %v1493, %v1581
        %1583 = vmatmul.bf16.gmra.mxu0 %v1408
        %v1584 = vpop.f32.mrf.mxu0
        %v1585 = vadd.f32 %v1496, %v1584
        %v1586 = vpop.f32.mrf.mxu0
        %v1587 = vadd.f32 %v1498, %v1586
        %1588 = vmatmul.bf16.gmra.mxu0 %v1410
        %v1589 = vpop.f32.mrf.mxu0
        %v1590 = vadd.f32 %v1501, %v1589
        %v1591 = vpop.f32.mrf.mxu0
        %v1592 = vadd.f32 %v1503, %v1591
        %1593 = vmatmul.bf16.gmra.mxu0 %v1412
        %v1594 = vpop.f32.mrf.mxu0
        %v1595 = vadd.f32 %v1506, %v1594
        %v1596 = vpop.f32.mrf.mxu0
        %v1597 = vadd.f32 %v1508, %v1596
        %1598 = vmatmul.bf16.gmra.mxu0 %v1414
        %v1599 = vpop.f32.mrf.mxu0
        %v1600 = vadd.f32 %v1511, %v1599
        %v1601 = vpop.f32.mrf.mxu0
        %v1602 = vadd.f32 %v1513, %v1601
        %1603 = vmatmul.bf16.gmra.mxu0 %v1416
        %v1604 = vpop.f32.mrf.mxu0
        %v1605 = vadd.f32 %v1516, %v1604
        %v1606 = vpop.f32.mrf.mxu0
        %v1607 = vadd.f32 %v1518, %v1606
        %1608 = vmatmul.bf16.gmra.mxu0 %v1418
        %v1609 = vpop.f32.mrf.mxu0
        %v1610 = vadd.f32 %v1521, %v1609
        %v1611 = vpop.f32.mrf.mxu0
        %v1612 = vadd.f32 %v1523, %v1611
        %1613 = vmatmul.bf16.gmra.mxu0 %v1420
        %v1614 = vpop.f32.mrf.mxu0
        %v1615 = vadd.f32 %v1526, %v1614
        %v1616 = vpop.f32.mrf.mxu0
        %v1617 = vadd.f32 %v1528, %v1616
        %1618 = vmatmul.bf16.gmra.mxu0 %v1422
        %v1619 = vpop.f32.mrf.mxu0
        %v1620 = vadd.f32 %v1531, %v1619
        %v1621 = vpop.f32.mrf.mxu0
        %v1622 = vadd.f32 %v1533, %v1621
        %1623 = vmatmul.bf16.gmra.mxu0 %v1424
        %v1624 = vpop.f32.mrf.mxu0
        %v1625 = vadd.f32 %v1536, %v1624
        %v1626 = vpop.f32.mrf.mxu0
        %v1627 = vadd.f32 %v1538, %v1626
        %1628 = vmatmul.bf16.gmra.mxu0 %v1426
        %v1629 = vpop.f32.mrf.mxu0
        %v1630 = vadd.f32 %v1541, %v1629
        %v1631 = vpop.f32.mrf.mxu0
        %v1632 = vadd.f32 %v1543, %v1631
        %1633 = vmatmul.bf16.gmra.mxu0 %v1428
        %v1634 = vpop.f32.mrf.mxu0
        %v1635 = vadd.f32 %v1546, %v1634
        %v1636 = vpop.f32.mrf.mxu0
        %v1637 = vadd.f32 %v1548, %v1636
        %1638 = vdwg.mxu0
        %v1639 = vld [vmem:[%s285 + $0x100] sm:$0xff]
        %v1640 = vld [vmem:[%s285 + $0x108] sm:$0xff]
        %v1641 = vld [vmem:[%s285 + $0x110] sm:$0xff]
        %v1642 = vld [vmem:[%s285 + $0x118] sm:$0xff]
        %v1643 = vld [vmem:[%s285 + $0x120] sm:$0xff]
        %v1644 = vld [vmem:[%s285 + $0x128] sm:$0xff]
        %v1645 = vld [vmem:[%s285 + $0x130] sm:$0xff]
        %v1646 = vld [vmem:[%s285 + $0x138] sm:$0xff]
        %v1647 = vld [vmem:[%s285 + $0x140] sm:$0xff]
        %v1648 = vld [vmem:[%s285 + $0x148] sm:$0xff]
        %v1649 = vld [vmem:[%s285 + $0x150] sm:$0xff]
        %v1650 = vld [vmem:[%s285 + $0x158] sm:$0xff]
        %v1651 = vld [vmem:[%s285 + $0x160] sm:$0xff]
        %v1652 = vld [vmem:[%s285 + $0x168] sm:$0xff]
        %v1653 = vld [vmem:[%s285 + $0x170] sm:$0xff]
        %v1654 = vld [vmem:[%s285 + $0x178] sm:$0xff]
        %v1655 = vld [vmem:[%s285 + $0x180] sm:$0xff]
        %v1656 = vld [vmem:[%s285 + $0x188] sm:$0xff]
        %v1657 = vld [vmem:[%s285 + $0x190] sm:$0xff]
        %v1658 = vld [vmem:[%s285 + $0x198] sm:$0xff]
        %v1659 = vld [vmem:[%s285 + $0x1a0] sm:$0xff]
        %v1660 = vld [vmem:[%s285 + $0x1a8] sm:$0xff]
        %v1661 = vld [vmem:[%s285 + $0x1b0] sm:$0xff]
        %v1662 = vld [vmem:[%s285 + $0x1b8] sm:$0xff]
        %v1663 = vld [vmem:[%s285 + $0x1c0] sm:$0xff]
        %v1664 = vld [vmem:[%s285 + $0x1c8] sm:$0xff]
        %v1665 = vld [vmem:[%s285 + $0x1d0] sm:$0xff]
        %v1666 = vld [vmem:[%s285 + $0x1d8] sm:$0xff]
        %v1667 = vld [vmem:[%s285 + $0x1e0] sm:$0xff]
        %v1668 = vld [vmem:[%s285 + $0x1e8] sm:$0xff]
        %v1669 = vld [vmem:[%s285 + $0x1f0] sm:$0xff]
        %v1670 = vld [vmem:[%s285 + $0x1f8] sm:$0xff]
        %v1671 = vadd.f32 %v1560, %v1639
        %v1672 = vadd.f32 %v1562, %v1640
        %v1673 = vadd.f32 %v1565, %v1641
        %v1674 = vadd.f32 %v1567, %v1642
        %v1675 = vadd.f32 %v1570, %v1643
        %v1676 = vadd.f32 %v1572, %v1644
        %v1677 = vadd.f32 %v1575, %v1645
        %v1678 = vadd.f32 %v1577, %v1646
        %v1679 = vadd.f32 %v1580, %v1647
        %v1680 = vadd.f32 %v1582, %v1648
        %v1681 = vadd.f32 %v1585, %v1649
        %v1682 = vadd.f32 %v1587, %v1650
        %v1683 = vadd.f32 %v1590, %v1651
        %v1684 = vadd.f32 %v1592, %v1652
        %v1685 = vadd.f32 %v1595, %v1653
        %v1686 = vadd.f32 %v1597, %v1654
        %v1687 = vadd.f32 %v1600, %v1655
        %v1688 = vadd.f32 %v1602, %v1656
        %v1689 = vadd.f32 %v1605, %v1657
        %v1690 = vadd.f32 %v1607, %v1658
        %v1691 = vadd.f32 %v1610, %v1659
        %v1692 = vadd.f32 %v1612, %v1660
        %v1693 = vadd.f32 %v1615, %v1661
        %v1694 = vadd.f32 %v1617, %v1662
        %v1695 = vadd.f32 %v1620, %v1663
        %v1696 = vadd.f32 %v1622, %v1664
        %v1697 = vadd.f32 %v1625, %v1665
        %v1698 = vadd.f32 %v1627, %v1666
        %v1699 = vadd.f32 %v1630, %v1667
        %v1700 = vadd.f32 %v1632, %v1668
        %v1701 = vadd.f32 %v1635, %v1669
        %v1702 = vadd.f32 %v1637, %v1670
        %v1703 = vmax.f32 %v1671, 0.0
        %v1704 = vmax.f32 %v1672, 0.0
        %v1705 = vmax.f32 %v1673, 0.0
        %v1706 = vmax.f32 %v1674, 0.0
        %v1707 = vmax.f32 %v1675, 0.0
        %v1708 = vmax.f32 %v1676, 0.0
        %v1709 = vmax.f32 %v1677, 0.0
        %v1710 = vmax.f32 %v1678, 0.0
        %v1711 = vmax.f32 %v1679, 0.0
        %v1712 = vmax.f32 %v1680, 0.0
        %v1713 = vmax.f32 %v1681, 0.0
        %v1714 = vmax.f32 %v1682, 0.0
        %v1715 = vmax.f32 %v1683, 0.0
        %v1716 = vmax.f32 %v1684, 0.0
        %v1717 = vmax.f32 %v1685, 0.0
        %v1718 = vmax.f32 %v1686, 0.0
        %v1719 = vmax.f32 %v1687, 0.0
        %v1720 = vmax.f32 %v1688, 0.0
        %v1721 = vmax.f32 %v1689, 0.0
        %v1722 = vmax.f32 %v1690, 0.0
        %v1723 = vmax.f32 %v1691, 0.0
        %v1724 = vmax.f32 %v1692, 0.0
        %v1725 = vmax.f32 %v1693, 0.0
        %v1726 = vmax.f32 %v1694, 0.0
        %v1727 = vmax.f32 %v1695, 0.0
        %v1728 = vmax.f32 %v1696, 0.0
        %v1729 = vmax.f32 %v1697, 0.0
        %v1730 = vmax.f32 %v1698, 0.0
        %v1731 = vmax.f32 %v1699, 0.0
        %v1732 = vmax.f32 %v1700, 0.0
        %v1733 = vmax.f32 %v1701, 0.0
        %v1734 = vmax.f32 %v1702, 0.0
        %v1735 = vld [vmem:[#allocation7 + $0x8] sm:$0xff]
        %v1736 = vld [vmem:[#allocation7 + $0x28] sm:$0xff]
        %v1737 = vld [vmem:[#allocation7 + $0x48] sm:$0xff]
        %v1738 = vld [vmem:[#allocation7 + $0x68] sm:$0xff]
        %v1739 = vld [vmem:[#allocation7 + $0x88] sm:$0xff]
        %v1740 = vld [vmem:[#allocation7 + $0xa8] sm:$0xff]
        %v1741 = vld [vmem:[#allocation7 + $0xc8] sm:$0xff]
        %v1742 = vld [vmem:[#allocation7 + $0xe8] sm:$0xff]
        %v1743 = vld [vmem:[#allocation7 + $0x108] sm:$0xff]
        %v1744 = vld [vmem:[#allocation7 + $0x128] sm:$0xff]
        %v1745 = vld [vmem:[#allocation7 + $0x148] sm:$0xff]
        %v1746 = vld [vmem:[#allocation7 + $0x168] sm:$0xff]
        %v1747 = vld [vmem:[#allocation7 + $0x188] sm:$0xff]
        %v1748 = vld [vmem:[#allocation7 + $0x1a8] sm:$0xff]
        %v1749 = vld [vmem:[#allocation7 + $0x1c8] sm:$0xff]
        %v1750 = vld [vmem:[#allocation7 + $0x1e8] sm:$0xff]
        %v1751 = vld [vmem:[#allocation7 + $0x208] sm:$0xff]
        %v1752 = vld [vmem:[#allocation7 + $0x228] sm:$0xff]
        %v1753 = vld [vmem:[#allocation7 + $0x248] sm:$0xff]
        %v1754 = vld [vmem:[#allocation7 + $0x268] sm:$0xff]
        %v1755 = vld [vmem:[#allocation7 + $0x288] sm:$0xff]
        %v1756 = vld [vmem:[#allocation7 + $0x2a8] sm:$0xff]
        %v1757 = vld [vmem:[#allocation7 + $0x2c8] sm:$0xff]
        %v1758 = vld [vmem:[#allocation7 + $0x2e8] sm:$0xff]
        %v1759 = vld [vmem:[#allocation7 + $0x308] sm:$0xff]
        %v1760 = vld [vmem:[#allocation7 + $0x328] sm:$0xff]
        %v1761 = vld [vmem:[#allocation7 + $0x348] sm:$0xff]
        %v1762 = vld [vmem:[#allocation7 + $0x368] sm:$0xff]
        %v1763 = vld [vmem:[#allocation7 + $0x388] sm:$0xff]
        %v1764 = vld [vmem:[#allocation7 + $0x3a8] sm:$0xff]
        %v1765 = vld [vmem:[#allocation7 + $0x3c8] sm:$0xff]
        %v1766 = vld [vmem:[#allocation7 + $0x3e8] sm:$0xff]
        %v1767 = vpack.c.bf16 %v1704, %v1703
        %v1768 = vpack.c.bf16 %v1706, %v1705
        %v1769 = vpack.c.bf16 %v1708, %v1707
        %v1770 = vpack.c.bf16 %v1710, %v1709
        %v1771 = vpack.c.bf16 %v1712, %v1711
        %v1772 = vpack.c.bf16 %v1714, %v1713
        %v1773 = vpack.c.bf16 %v1716, %v1715
        %v1774 = vpack.c.bf16 %v1718, %v1717
        %v1775 = vpack.c.bf16 %v1720, %v1719
        %v1776 = vpack.c.bf16 %v1722, %v1721
        %v1777 = vpack.c.bf16 %v1724, %v1723
        %v1778 = vpack.c.bf16 %v1726, %v1725
        %v1779 = vpack.c.bf16 %v1728, %v1727
        %v1780 = vpack.c.bf16 %v1730, %v1729
        %v1781 = vpack.c.bf16 %v1732, %v1731
        %v1782 = vpack.c.bf16 %v1734, %v1733
        %v1815 = vunpack.c.l.b16 %v1735
        %v1816 = vunpack.c.h.b16 %v1735
        %v1817 = vunpack.c.l.b16 %v1736
        %v1818 = vunpack.c.h.b16 %v1736
        %v1819 = vunpack.c.l.b16 %v1737
        %v1820 = vunpack.c.h.b16 %v1737
        %v1821 = vunpack.c.l.b16 %v1738
        %v1822 = vunpack.c.h.b16 %v1738
        %v1823 = vunpack.c.l.b16 %v1739
        %v1824 = vunpack.c.h.b16 %v1739
        %v1825 = vunpack.c.l.b16 %v1740
        %v1826 = vunpack.c.h.b16 %v1740
        %v1827 = vunpack.c.l.b16 %v1741
        %v1828 = vunpack.c.h.b16 %v1741
        %v1829 = vunpack.c.l.b16 %v1742
        %v1830 = vunpack.c.h.b16 %v1742
        %v1831 = vunpack.c.l.b16 %v1743
        %v1832 = vunpack.c.h.b16 %v1743
        %v1833 = vunpack.c.l.b16 %v1744
        %v1834 = vunpack.c.h.b16 %v1744
        %v1835 = vunpack.c.l.b16 %v1745
        %v1836 = vunpack.c.h.b16 %v1745
        %v1837 = vunpack.c.l.b16 %v1746
        %v1838 = vunpack.c.h.b16 %v1746
        %v1839 = vunpack.c.l.b16 %v1747
        %v1840 = vunpack.c.h.b16 %v1747
        %v1841 = vunpack.c.l.b16 %v1748
        %v1842 = vunpack.c.h.b16 %v1748
        %v1843 = vunpack.c.l.b16 %v1749
        %v1844 = vunpack.c.h.b16 %v1749
        %v1845 = vunpack.c.l.b16 %v1750
        %v1846 = vunpack.c.h.b16 %v1750
        %v1847 = vunpack.c.l.b16 %v1751
        %v1848 = vunpack.c.h.b16 %v1751
        %v1849 = vunpack.c.l.b16 %v1752
        %v1850 = vunpack.c.h.b16 %v1752
        %v1851 = vunpack.c.l.b16 %v1753
        %v1852 = vunpack.c.h.b16 %v1753
        %v1853 = vunpack.c.l.b16 %v1754
        %v1854 = vunpack.c.h.b16 %v1754
        %v1855 = vunpack.c.l.b16 %v1755
        %v1856 = vunpack.c.h.b16 %v1755
        %v1857 = vunpack.c.l.b16 %v1756
        %v1858 = vunpack.c.h.b16 %v1756
        %v1859 = vunpack.c.l.b16 %v1757
        %v1860 = vunpack.c.h.b16 %v1757
        %v1861 = vunpack.c.l.b16 %v1758
        %v1862 = vunpack.c.h.b16 %v1758
        %v1863 = vunpack.c.l.b16 %v1759
        %v1864 = vunpack.c.h.b16 %v1759
        %v1865 = vunpack.c.l.b16 %v1760
        %v1866 = vunpack.c.h.b16 %v1760
        %v1867 = vunpack.c.l.b16 %v1761
        %v1868 = vunpack.c.h.b16 %v1761
        %v1869 = vunpack.c.l.b16 %v1762
        %v1870 = vunpack.c.h.b16 %v1762
        %v1871 = vunpack.c.l.b16 %v1763
        %v1872 = vunpack.c.h.b16 %v1763
        %v1873 = vunpack.c.l.b16 %v1764
        %v1874 = vunpack.c.h.b16 %v1764
        %v1875 = vunpack.c.l.b16 %v1765
        %v1876 = vunpack.c.h.b16 %v1765
        %v1877 = vunpack.c.l.b16 %v1766
        %v1878 = vunpack.c.h.b16 %v1766
        %v1879 = vpack.c.b16 %v1817, %v1815
        %v1880 = vpack.c.b16 %v1818, %v1816
        %v1881 = vpack.c.b16 %v1821, %v1819
        %v1882 = vpack.c.b16 %v1822, %v1820
        %v1883 = vpack.c.b16 %v1825, %v1823
        %v1884 = vpack.c.b16 %v1826, %v1824
        %v1885 = vpack.c.b16 %v1829, %v1827
        %v1886 = vpack.c.b16 %v1830, %v1828
        %v1887 = vpack.c.b16 %v1833, %v1831
        %v1888 = vpack.c.b16 %v1834, %v1832
        %v1889 = vpack.c.b16 %v1837, %v1835
        %v1890 = vpack.c.b16 %v1838, %v1836
        %v1891 = vpack.c.b16 %v1841, %v1839
        %v1892 = vpack.c.b16 %v1842, %v1840
        %v1893 = vpack.c.b16 %v1845, %v1843
        %v1894 = vpack.c.b16 %v1846, %v1844
        %v1895 = vpack.c.b16 %v1849, %v1847
        %v1896 = vpack.c.b16 %v1850, %v1848
        %v1897 = vpack.c.b16 %v1853, %v1851
        %v1898 = vpack.c.b16 %v1854, %v1852
        %v1899 = vpack.c.b16 %v1857, %v1855
        %v1900 = vpack.c.b16 %v1858, %v1856
        %v1901 = vpack.c.b16 %v1861, %v1859
        %v1902 = vpack.c.b16 %v1862, %v1860
        %v1903 = vpack.c.b16 %v1865, %v1863
        %v1904 = vpack.c.b16 %v1866, %v1864
        %v1905 = vpack.c.b16 %v1869, %v1867
        %v1906 = vpack.c.b16 %v1870, %v1868
        %v1907 = vpack.c.b16 %v1873, %v1871
        %v1908 = vpack.c.b16 %v1874, %v1872
        %v1909 = vpack.c.b16 %v1877, %v1875
        %v1910 = vpack.c.b16 %v1878, %v1876
        %1943 = vmatpush.bf16.msra.mxu0 %v1774
        %1944 = vmatpush.bf16.msra.mxu0 %v1773
        %1945 = vmatpush.bf16.msra.mxu0 %v1772
        %1946 = vmatpush.bf16.msra.mxu0 %v1771
        %1947 = vmatpush.bf16.msra.mxu0 %v1770
        %1948 = vmatpush.bf16.msra.mxu0 %v1769
        %1949 = vmatpush.bf16.msra.mxu0 %v1768
        %1950 = vmatpush.bf16.msra.mxu0 %v1767
        %1951 = vmatmul.bf16.gmra.mxu0 %v1879
        %v1952 = vpop.f32.mrf.mxu0
        %v1953 = vadd.f32 0.0, %v1952
        %v1954 = vpop.f32.mrf.mxu0
        %v1955 = vadd.f32 0.0, %v1954
        %1956 = vmatmul.bf16.gmra.mxu0 %v1881
        %v1957 = vpop.f32.mrf.mxu0
        %v1958 = vadd.f32 0.0, %v1957
        %v1959 = vpop.f32.mrf.mxu0
        %v1960 = vadd.f32 0.0, %v1959
        %1961 = vmatmul.bf16.gmra.mxu0 %v1883
        %v1962 = vpop.f32.mrf.mxu0
        %v1963 = vadd.f32 0.0, %v1962
        %v1964 = vpop.f32.mrf.mxu0
        %v1965 = vadd.f32 0.0, %v1964
        %1966 = vmatmul.bf16.gmra.mxu0 %v1885
        %v1967 = vpop.f32.mrf.mxu0
        %v1968 = vadd.f32 0.0, %v1967
        %v1969 = vpop.f32.mrf.mxu0
        %v1970 = vadd.f32 0.0, %v1969
        %1971 = vmatmul.bf16.gmra.mxu0 %v1887
        %v1972 = vpop.f32.mrf.mxu0
        %v1973 = vadd.f32 0.0, %v1972
        %v1974 = vpop.f32.mrf.mxu0
        %v1975 = vadd.f32 0.0, %v1974
        %1976 = vmatmul.bf16.gmra.mxu0 %v1889
        %v1977 = vpop.f32.mrf.mxu0
        %v1978 = vadd.f32 0.0, %v1977
        %v1979 = vpop.f32.mrf.mxu0
        %v1980 = vadd.f32 0.0, %v1979
        %1981 = vmatmul.bf16.gmra.mxu0 %v1891
        %v1982 = vpop.f32.mrf.mxu0
        %v1983 = vadd.f32 0.0, %v1982
        %v1984 = vpop.f32.mrf.mxu0
        %v1985 = vadd.f32 0.0, %v1984
        %1986 = vmatmul.bf16.gmra.mxu0 %v1893
        %v1987 = vpop.f32.mrf.mxu0
        %v1988 = vadd.f32 0.0, %v1987
        %v1989 = vpop.f32.mrf.mxu0
        %v1990 = vadd.f32 0.0, %v1989
        %1991 = vmatmul.bf16.gmra.mxu0 %v1895
        %v1992 = vpop.f32.mrf.mxu0
        %v1993 = vadd.f32 0.0, %v1992
        %v1994 = vpop.f32.mrf.mxu0
        %v1995 = vadd.f32 0.0, %v1994
        %1996 = vmatmul.bf16.gmra.mxu0 %v1897
        %v1997 = vpop.f32.mrf.mxu0
        %v1998 = vadd.f32 0.0, %v1997
        %v1999 = vpop.f32.mrf.mxu0
        %v2000 = vadd.f32 0.0, %v1999
        %2001 = vmatmul.bf16.gmra.mxu0 %v1899
        %v2002 = vpop.f32.mrf.mxu0
        %v2003 = vadd.f32 0.0, %v2002
        %v2004 = vpop.f32.mrf.mxu0
        %v2005 = vadd.f32 0.0, %v2004
        %2006 = vmatmul.bf16.gmra.mxu0 %v1901
        %v2007 = vpop.f32.mrf.mxu0
        %v2008 = vadd.f32 0.0, %v2007
        %v2009 = vpop.f32.mrf.mxu0
        %v2010 = vadd.f32 0.0, %v2009
        %2011 = vmatmul.bf16.gmra.mxu0 %v1903
        %v2012 = vpop.f32.mrf.mxu0
        %v2013 = vadd.f32 0.0, %v2012
        %v2014 = vpop.f32.mrf.mxu0
        %v2015 = vadd.f32 0.0, %v2014
        %2016 = vmatmul.bf16.gmra.mxu0 %v1905
        %v2017 = vpop.f32.mrf.mxu0
        %v2018 = vadd.f32 0.0, %v2017
        %v2019 = vpop.f32.mrf.mxu0
        %v2020 = vadd.f32 0.0, %v2019
        %2021 = vmatmul.bf16.gmra.mxu0 %v1907
        %v2022 = vpop.f32.mrf.mxu0
        %v2023 = vadd.f32 0.0, %v2022
        %v2024 = vpop.f32.mrf.mxu0
        %v2025 = vadd.f32 0.0, %v2024
        %2026 = vmatmul.bf16.gmra.mxu0 %v1909
        %v2027 = vpop.f32.mrf.mxu0
        %v2028 = vadd.f32 0.0, %v2027
        %v2029 = vpop.f32.mrf.mxu0
        %v2030 = vadd.f32 0.0, %v2029
        %2031 = vdwg.mxu0
        %2032 = vmatpush.bf16.msra.mxu0 %v1782
        %2033 = vmatpush.bf16.msra.mxu0 %v1781
        %2034 = vmatpush.bf16.msra.mxu0 %v1780
        %2035 = vmatpush.bf16.msra.mxu0 %v1779
        %2036 = vmatpush.bf16.msra.mxu0 %v1778
        %2037 = vmatpush.bf16.msra.mxu0 %v1777
        %2038 = vmatpush.bf16.msra.mxu0 %v1776
        %2039 = vmatpush.bf16.msra.mxu0 %v1775
        %2040 = vmatmul.bf16.gmra.mxu0 %v1880
        %v2041 = vpop.f32.mrf.mxu0
        %v2042 = vadd.f32 %v1953, %v2041
        %v2043 = vpop.f32.mrf.mxu0
        %v2044 = vadd.f32 %v1955, %v2043
        %2045 = vmatmul.bf16.gmra.mxu0 %v1882
        %v2046 = vpop.f32.mrf.mxu0
        %v2047 = vadd.f32 %v1958, %v2046
        %v2048 = vpop.f32.mrf.mxu0
        %v2049 = vadd.f32 %v1960, %v2048
        %2050 = vmatmul.bf16.gmra.mxu0 %v1884
        %v2051 = vpop.f32.mrf.mxu0
        %v2052 = vadd.f32 %v1963, %v2051
        %v2053 = vpop.f32.mrf.mxu0
        %v2054 = vadd.f32 %v1965, %v2053
        %2055 = vmatmul.bf16.gmra.mxu0 %v1886
        %v2056 = vpop.f32.mrf.mxu0
        %v2057 = vadd.f32 %v1968, %v2056
        %v2058 = vpop.f32.mrf.mxu0
        %v2059 = vadd.f32 %v1970, %v2058
        %2060 = vmatmul.bf16.gmra.mxu0 %v1888
        %v2061 = vpop.f32.mrf.mxu0
        %v2062 = vadd.f32 %v1973, %v2061
        %v2063 = vpop.f32.mrf.mxu0
        %v2064 = vadd.f32 %v1975, %v2063
        %2065 = vmatmul.bf16.gmra.mxu0 %v1890
        %v2066 = vpop.f32.mrf.mxu0
        %v2067 = vadd.f32 %v1978, %v2066
        %v2068 = vpop.f32.mrf.mxu0
        %v2069 = vadd.f32 %v1980, %v2068
        %2070 = vmatmul.bf16.gmra.mxu0 %v1892
        %v2071 = vpop.f32.mrf.mxu0
        %v2072 = vadd.f32 %v1983, %v2071
        %v2073 = vpop.f32.mrf.mxu0
        %v2074 = vadd.f32 %v1985, %v2073
        %2075 = vmatmul.bf16.gmra.mxu0 %v1894
        %v2076 = vpop.f32.mrf.mxu0
        %v2077 = vadd.f32 %v1988, %v2076
        %v2078 = vpop.f32.mrf.mxu0
        %v2079 = vadd.f32 %v1990, %v2078
        %2080 = vmatmul.bf16.gmra.mxu0 %v1896
        %v2081 = vpop.f32.mrf.mxu0
        %v2082 = vadd.f32 %v1993, %v2081
        %v2083 = vpop.f32.mrf.mxu0
        %v2084 = vadd.f32 %v1995, %v2083
        %2085 = vmatmul.bf16.gmra.mxu0 %v1898
        %v2086 = vpop.f32.mrf.mxu0
        %v2087 = vadd.f32 %v1998, %v2086
        %v2088 = vpop.f32.mrf.mxu0
        %v2089 = vadd.f32 %v2000, %v2088
        %2090 = vmatmul.bf16.gmra.mxu0 %v1900
        %v2091 = vpop.f32.mrf.mxu0
        %v2092 = vadd.f32 %v2003, %v2091
        %v2093 = vpop.f32.mrf.mxu0
        %v2094 = vadd.f32 %v2005, %v2093
        %2095 = vmatmul.bf16.gmra.mxu0 %v1902
        %v2096 = vpop.f32.mrf.mxu0
        %v2097 = vadd.f32 %v2008, %v2096
        %v2098 = vpop.f32.mrf.mxu0
        %v2099 = vadd.f32 %v2010, %v2098
        %2100 = vmatmul.bf16.gmra.mxu0 %v1904
        %v2101 = vpop.f32.mrf.mxu0
        %v2102 = vadd.f32 %v2013, %v2101
        %v2103 = vpop.f32.mrf.mxu0
        %v2104 = vadd.f32 %v2015, %v2103
        %2105 = vmatmul.bf16.gmra.mxu0 %v1906
        %v2106 = vpop.f32.mrf.mxu0
        %v2107 = vadd.f32 %v2018, %v2106
        %v2108 = vpop.f32.mrf.mxu0
        %v2109 = vadd.f32 %v2020, %v2108
        %2110 = vmatmul.bf16.gmra.mxu0 %v1908
        %v2111 = vpop.f32.mrf.mxu0
        %v2112 = vadd.f32 %v2023, %v2111
        %v2113 = vpop.f32.mrf.mxu0
        %v2114 = vadd.f32 %v2025, %v2113
        %2115 = vmatmul.bf16.gmra.mxu0 %v1910
        %v2116 = vpop.f32.mrf.mxu0
        %v2117 = vadd.f32 %v2028, %v2116
        %v2118 = vpop.f32.mrf.mxu0
        %v2119 = vadd.f32 %v2030, %v2118
        %2120 = vdwg.mxu0
        %v2153 = vunpack.c.l.b16 %v1029
        %v2154 = vunpack.c.h.b16 %v1029
        %v2155 = vunpack.c.l.b16 %v1030
        %v2156 = vunpack.c.h.b16 %v1030
        %v2157 = vunpack.c.l.b16 %v1031
        %v2158 = vunpack.c.h.b16 %v1031
        %v2159 = vunpack.c.l.b16 %v1032
        %v2160 = vunpack.c.h.b16 %v1032
        %v2161 = vunpack.c.l.b16 %v1033
        %v2162 = vunpack.c.h.b16 %v1033
        %v2163 = vunpack.c.l.b16 %v1034
        %v2164 = vunpack.c.h.b16 %v1034
        %v2165 = vunpack.c.l.b16 %v1035
        %v2166 = vunpack.c.h.b16 %v1035
        %v2167 = vunpack.c.l.b16 %v1036
        %v2168 = vunpack.c.h.b16 %v1036
        %v2169 = vunpack.c.l.b16 %v1037
        %v2170 = vunpack.c.h.b16 %v1037
        %v2171 = vunpack.c.l.b16 %v1038
        %v2172 = vunpack.c.h.b16 %v1038
        %v2173 = vunpack.c.l.b16 %v1039
        %v2174 = vunpack.c.h.b16 %v1039
        %v2175 = vunpack.c.l.b16 %v1040
        %v2176 = vunpack.c.h.b16 %v1040
        %v2177 = vunpack.c.l.b16 %v1041
        %v2178 = vunpack.c.h.b16 %v1041
        %v2179 = vunpack.c.l.b16 %v1042
        %v2180 = vunpack.c.h.b16 %v1042
        %v2181 = vunpack.c.l.b16 %v1043
        %v2182 = vunpack.c.h.b16 %v1043
        %v2183 = vunpack.c.l.b16 %v1044
        %v2184 = vunpack.c.h.b16 %v1044
        %v2185 = vunpack.c.l.b16 %v1045
        %v2186 = vunpack.c.h.b16 %v1045
        %v2187 = vunpack.c.l.b16 %v1046
        %v2188 = vunpack.c.h.b16 %v1046
        %v2189 = vunpack.c.l.b16 %v1047
        %v2190 = vunpack.c.h.b16 %v1047
        %v2191 = vunpack.c.l.b16 %v1048
        %v2192 = vunpack.c.h.b16 %v1048
        %v2193 = vunpack.c.l.b16 %v1049
        %v2194 = vunpack.c.h.b16 %v1049
        %v2195 = vunpack.c.l.b16 %v1050
        %v2196 = vunpack.c.h.b16 %v1050
        %v2197 = vunpack.c.l.b16 %v1051
        %v2198 = vunpack.c.h.b16 %v1051
        %v2199 = vunpack.c.l.b16 %v1052
        %v2200 = vunpack.c.h.b16 %v1052
        %v2201 = vunpack.c.l.b16 %v1053
        %v2202 = vunpack.c.h.b16 %v1053
        %v2203 = vunpack.c.l.b16 %v1054
        %v2204 = vunpack.c.h.b16 %v1054
        %v2205 = vunpack.c.l.b16 %v1055
        %v2206 = vunpack.c.h.b16 %v1055
        %v2207 = vunpack.c.l.b16 %v1056
        %v2208 = vunpack.c.h.b16 %v1056
        %v2209 = vunpack.c.l.b16 %v1057
        %v2210 = vunpack.c.h.b16 %v1057
        %v2211 = vunpack.c.l.b16 %v1058
        %v2212 = vunpack.c.h.b16 %v1058
        %v2213 = vunpack.c.l.b16 %v1059
        %v2214 = vunpack.c.h.b16 %v1059
        %v2215 = vunpack.c.l.b16 %v1060
        %v2216 = vunpack.c.h.b16 %v1060
        %v2217 = vpack.c.b16 %v2155, %v2153
        %v2218 = vpack.c.b16 %v2156, %v2154
        %v2219 = vpack.c.b16 %v2159, %v2157
        %v2220 = vpack.c.b16 %v2160, %v2158
        %v2221 = vpack.c.b16 %v2163, %v2161
        %v2222 = vpack.c.b16 %v2164, %v2162
        %v2223 = vpack.c.b16 %v2167, %v2165
        %v2224 = vpack.c.b16 %v2168, %v2166
        %v2225 = vpack.c.b16 %v2171, %v2169
        %v2226 = vpack.c.b16 %v2172, %v2170
        %v2227 = vpack.c.b16 %v2175, %v2173
        %v2228 = vpack.c.b16 %v2176, %v2174
        %v2229 = vpack.c.b16 %v2179, %v2177
        %v2230 = vpack.c.b16 %v2180, %v2178
        %v2231 = vpack.c.b16 %v2183, %v2181
        %v2232 = vpack.c.b16 %v2184, %v2182
        %v2233 = vpack.c.b16 %v2187, %v2185
        %v2234 = vpack.c.b16 %v2188, %v2186
        %v2235 = vpack.c.b16 %v2191, %v2189
        %v2236 = vpack.c.b16 %v2192, %v2190
        %v2237 = vpack.c.b16 %v2195, %v2193
        %v2238 = vpack.c.b16 %v2196, %v2194
        %v2239 = vpack.c.b16 %v2199, %v2197
        %v2240 = vpack.c.b16 %v2200, %v2198
        %v2241 = vpack.c.b16 %v2203, %v2201
        %v2242 = vpack.c.b16 %v2204, %v2202
        %v2243 = vpack.c.b16 %v2207, %v2205
        %v2244 = vpack.c.b16 %v2208, %v2206
        %v2245 = vpack.c.b16 %v2211, %v2209
        %v2246 = vpack.c.b16 %v2212, %v2210
        %v2247 = vpack.c.b16 %v2215, %v2213
        %v2248 = vpack.c.b16 %v2216, %v2214
        %2281 = vmatpush.bf16.msra.mxu0 %v1068
        %2282 = vmatpush.bf16.msra.mxu0 %v1067
        %2283 = vmatpush.bf16.msra.mxu0 %v1066
        %2284 = vmatpush.bf16.msra.mxu0 %v1065
        %2285 = vmatpush.bf16.msra.mxu0 %v1064
        %2286 = vmatpush.bf16.msra.mxu0 %v1063
        %2287 = vmatpush.bf16.msra.mxu0 %v1062
        %2288 = vmatpush.bf16.msra.mxu0 %v1061
        %2289 = vmatmul.bf16.gmra.mxu0 %v2217
        %v2290 = vpop.f32.mrf.mxu0
        %v2291 = vadd.f32 %v2042, %v2290
        %v2292 = vpop.f32.mrf.mxu0
        %v2293 = vadd.f32 %v2044, %v2292
        %2294 = vmatmul.bf16.gmra.mxu0 %v2219
        %v2295 = vpop.f32.mrf.mxu0
        %v2296 = vadd.f32 %v2047, %v2295
        %v2297 = vpop.f32.mrf.mxu0
        %v2298 = vadd.f32 %v2049, %v2297
        %2299 = vmatmul.bf16.gmra.mxu0 %v2221
        %v2300 = vpop.f32.mrf.mxu0
        %v2301 = vadd.f32 %v2052, %v2300
        %v2302 = vpop.f32.mrf.mxu0
        %v2303 = vadd.f32 %v2054, %v2302
        %2304 = vmatmul.bf16.gmra.mxu0 %v2223
        %v2305 = vpop.f32.mrf.mxu0
        %v2306 = vadd.f32 %v2057, %v2305
        %v2307 = vpop.f32.mrf.mxu0
        %v2308 = vadd.f32 %v2059, %v2307
        %2309 = vmatmul.bf16.gmra.mxu0 %v2225
        %v2310 = vpop.f32.mrf.mxu0
        %v2311 = vadd.f32 %v2062, %v2310
        %v2312 = vpop.f32.mrf.mxu0
        %v2313 = vadd.f32 %v2064, %v2312
        %2314 = vmatmul.bf16.gmra.mxu0 %v2227
        %v2315 = vpop.f32.mrf.mxu0
        %v2316 = vadd.f32 %v2067, %v2315
        %v2317 = vpop.f32.mrf.mxu0
        %v2318 = vadd.f32 %v2069, %v2317
        %2319 = vmatmul.bf16.gmra.mxu0 %v2229
        %v2320 = vpop.f32.mrf.mxu0
        %v2321 = vadd.f32 %v2072, %v2320
        %v2322 = vpop.f32.mrf.mxu0
        %v2323 = vadd.f32 %v2074, %v2322
        %2324 = vmatmul.bf16.gmra.mxu0 %v2231
        %v2325 = vpop.f32.mrf.mxu0
        %v2326 = vadd.f32 %v2077, %v2325
        %v2327 = vpop.f32.mrf.mxu0
        %v2328 = vadd.f32 %v2079, %v2327
        %2329 = vmatmul.bf16.gmra.mxu0 %v2233
        %v2330 = vpop.f32.mrf.mxu0
        %v2331 = vadd.f32 %v2082, %v2330
        %v2332 = vpop.f32.mrf.mxu0
        %v2333 = vadd.f32 %v2084, %v2332
        %2334 = vmatmul.bf16.gmra.mxu0 %v2235
        %v2335 = vpop.f32.mrf.mxu0
        %v2336 = vadd.f32 %v2087, %v2335
        %v2337 = vpop.f32.mrf.mxu0
        %v2338 = vadd.f32 %v2089, %v2337
        %2339 = vmatmul.bf16.gmra.mxu0 %v2237
        %v2340 = vpop.f32.mrf.mxu0
        %v2341 = vadd.f32 %v2092, %v2340
        %v2342 = vpop.f32.mrf.mxu0
        %v2343 = vadd.f32 %v2094, %v2342
        %2344 = vmatmul.bf16.gmra.mxu0 %v2239
        %v2345 = vpop.f32.mrf.mxu0
        %v2346 = vadd.f32 %v2097, %v2345
        %v2347 = vpop.f32.mrf.mxu0
        %v2348 = vadd.f32 %v2099, %v2347
        %2349 = vmatmul.bf16.gmra.mxu0 %v2241
        %v2350 = vpop.f32.mrf.mxu0
        %v2351 = vadd.f32 %v2102, %v2350
        %v2352 = vpop.f32.mrf.mxu0
        %v2353 = vadd.f32 %v2104, %v2352
        %2354 = vmatmul.bf16.gmra.mxu0 %v2243
        %v2355 = vpop.f32.mrf.mxu0
        %v2356 = vadd.f32 %v2107, %v2355
        %v2357 = vpop.f32.mrf.mxu0
        %v2358 = vadd.f32 %v2109, %v2357
        %2359 = vmatmul.bf16.gmra.mxu0 %v2245
        %v2360 = vpop.f32.mrf.mxu0
        %v2361 = vadd.f32 %v2112, %v2360
        %v2362 = vpop.f32.mrf.mxu0
        %v2363 = vadd.f32 %v2114, %v2362
        %2364 = vmatmul.bf16.gmra.mxu0 %v2247
        %v2365 = vpop.f32.mrf.mxu0
        %v2366 = vadd.f32 %v2117, %v2365
        %v2367 = vpop.f32.mrf.mxu0
        %v2368 = vadd.f32 %v2119, %v2367
        %2369 = vdwg.mxu0
        %2370 = vmatpush.bf16.msra.mxu0 %v1076
        %2371 = vmatpush.bf16.msra.mxu0 %v1075
        %2372 = vmatpush.bf16.msra.mxu0 %v1074
        %2373 = vmatpush.bf16.msra.mxu0 %v1073
        %2374 = vmatpush.bf16.msra.mxu0 %v1072
        %2375 = vmatpush.bf16.msra.mxu0 %v1071
        %2376 = vmatpush.bf16.msra.mxu0 %v1070
        %2377 = vmatpush.bf16.msra.mxu0 %v1069
        %2378 = vmatmul.bf16.gmra.mxu0 %v2218
        %v2379 = vpop.f32.mrf.mxu0
        %v2380 = vadd.f32 %v2291, %v2379
        %v2381 = vpop.f32.mrf.mxu0
        %v2382 = vadd.f32 %v2293, %v2381
        %2383 = vmatmul.bf16.gmra.mxu0 %v2220
        %v2384 = vpop.f32.mrf.mxu0
        %v2385 = vadd.f32 %v2296, %v2384
        %v2386 = vpop.f32.mrf.mxu0
        %v2387 = vadd.f32 %v2298, %v2386
        %2388 = vmatmul.bf16.gmra.mxu0 %v2222
        %v2389 = vpop.f32.mrf.mxu0
        %v2390 = vadd.f32 %v2301, %v2389
        %v2391 = vpop.f32.mrf.mxu0
        %v2392 = vadd.f32 %v2303, %v2391
        %2393 = vmatmul.bf16.gmra.mxu0 %v2224
        %v2394 = vpop.f32.mrf.mxu0
        %v2395 = vadd.f32 %v2306, %v2394
        %v2396 = vpop.f32.mrf.mxu0
        %v2397 = vadd.f32 %v2308, %v2396
        %2398 = vmatmul.bf16.gmra.mxu0 %v2226
        %v2399 = vpop.f32.mrf.mxu0
        %v2400 = vadd.f32 %v2311, %v2399
        %v2401 = vpop.f32.mrf.mxu0
        %v2402 = vadd.f32 %v2313, %v2401
        %2403 = vmatmul.bf16.gmra.mxu0 %v2228
        %v2404 = vpop.f32.mrf.mxu0
        %v2405 = vadd.f32 %v2316, %v2404
        %v2406 = vpop.f32.mrf.mxu0
        %v2407 = vadd.f32 %v2318, %v2406
        %2408 = vmatmul.bf16.gmra.mxu0 %v2230
        %v2409 = vpop.f32.mrf.mxu0
        %v2410 = vadd.f32 %v2321, %v2409
        %v2411 = vpop.f32.mrf.mxu0
        %v2412 = vadd.f32 %v2323, %v2411
        %2413 = vmatmul.bf16.gmra.mxu0 %v2232
        %v2414 = vpop.f32.mrf.mxu0
        %v2415 = vadd.f32 %v2326, %v2414
        %v2416 = vpop.f32.mrf.mxu0
        %v2417 = vadd.f32 %v2328, %v2416
        %2418 = vmatmul.bf16.gmra.mxu0 %v2234
        %v2419 = vpop.f32.mrf.mxu0
        %v2420 = vadd.f32 %v2331, %v2419
        %v2421 = vpop.f32.mrf.mxu0
        %v2422 = vadd.f32 %v2333, %v2421
        %2423 = vmatmul.bf16.gmra.mxu0 %v2236
        %v2424 = vpop.f32.mrf.mxu0
        %v2425 = vadd.f32 %v2336, %v2424
        %v2426 = vpop.f32.mrf.mxu0
        %v2427 = vadd.f32 %v2338, %v2426
        %2428 = vmatmul.bf16.gmra.mxu0 %v2238
        %v2429 = vpop.f32.mrf.mxu0
        %v2430 = vadd.f32 %v2341, %v2429
        %v2431 = vpop.f32.mrf.mxu0
        %v2432 = vadd.f32 %v2343, %v2431
        %2433 = vmatmul.bf16.gmra.mxu0 %v2240
        %v2434 = vpop.f32.mrf.mxu0
        %v2435 = vadd.f32 %v2346, %v2434
        %v2436 = vpop.f32.mrf.mxu0
        %v2437 = vadd.f32 %v2348, %v2436
        %2438 = vmatmul.bf16.gmra.mxu0 %v2242
        %v2439 = vpop.f32.mrf.mxu0
        %v2440 = vadd.f32 %v2351, %v2439
        %v2441 = vpop.f32.mrf.mxu0
        %v2442 = vadd.f32 %v2353, %v2441
        %2443 = vmatmul.bf16.gmra.mxu0 %v2244
        %v2444 = vpop.f32.mrf.mxu0
        %v2445 = vadd.f32 %v2356, %v2444
        %v2446 = vpop.f32.mrf.mxu0
        %v2447 = vadd.f32 %v2358, %v2446
        %2448 = vmatmul.bf16.gmra.mxu0 %v2246
        %v2449 = vpop.f32.mrf.mxu0
        %v2450 = vadd.f32 %v2361, %v2449
        %v2451 = vpop.f32.mrf.mxu0
        %v2452 = vadd.f32 %v2363, %v2451
        %2453 = vmatmul.bf16.gmra.mxu0 %v2248
        %v2454 = vpop.f32.mrf.mxu0
        %v2455 = vadd.f32 %v2366, %v2454
        %v2456 = vpop.f32.mrf.mxu0
        %v2457 = vadd.f32 %v2368, %v2456
        %2458 = vdwg.mxu0
        %v2459 = vld [vmem:[%s1 + $0x200] sm:$0xff]
        %v2460 = vld [vmem:[%s1 + $0x208] sm:$0xff]
        %v2461 = vld [vmem:[%s1 + $0x210] sm:$0xff]
        %v2462 = vld [vmem:[%s1 + $0x218] sm:$0xff]
        %v2463 = vld [vmem:[%s1 + $0x220] sm:$0xff]
        %v2464 = vld [vmem:[%s1 + $0x228] sm:$0xff]
        %v2465 = vld [vmem:[%s1 + $0x230] sm:$0xff]
        %v2466 = vld [vmem:[%s1 + $0x238] sm:$0xff]
        %v2467 = vld [vmem:[%s1 + $0x240] sm:$0xff]
        %v2468 = vld [vmem:[%s1 + $0x248] sm:$0xff]
        %v2469 = vld [vmem:[%s1 + $0x250] sm:$0xff]
        %v2470 = vld [vmem:[%s1 + $0x258] sm:$0xff]
        %v2471 = vld [vmem:[%s1 + $0x260] sm:$0xff]
        %v2472 = vld [vmem:[%s1 + $0x268] sm:$0xff]
        %v2473 = vld [vmem:[%s1 + $0x270] sm:$0xff]
        %v2474 = vld [vmem:[%s1 + $0x278] sm:$0xff]
        %v2475 = vld [vmem:[%s1 + $0x280] sm:$0xff]
        %v2476 = vld [vmem:[%s1 + $0x288] sm:$0xff]
        %v2477 = vld [vmem:[%s1 + $0x290] sm:$0xff]
        %v2478 = vld [vmem:[%s1 + $0x298] sm:$0xff]
        %v2479 = vld [vmem:[%s1 + $0x2a0] sm:$0xff]
        %v2480 = vld [vmem:[%s1 + $0x2a8] sm:$0xff]
        %v2481 = vld [vmem:[%s1 + $0x2b0] sm:$0xff]
        %v2482 = vld [vmem:[%s1 + $0x2b8] sm:$0xff]
        %v2483 = vld [vmem:[%s1 + $0x2c0] sm:$0xff]
        %v2484 = vld [vmem:[%s1 + $0x2c8] sm:$0xff]
        %v2485 = vld [vmem:[%s1 + $0x2d0] sm:$0xff]
        %v2486 = vld [vmem:[%s1 + $0x2d8] sm:$0xff]
        %v2487 = vld [vmem:[%s1 + $0x2e0] sm:$0xff]
        %v2488 = vld [vmem:[%s1 + $0x2e8] sm:$0xff]
        %v2489 = vld [vmem:[%s1 + $0x2f0] sm:$0xff]
        %v2490 = vld [vmem:[%s1 + $0x2f8] sm:$0xff]
        %v2491 = vld [vmem:[%s2 + $0x200] sm:$0xff]
        %v2492 = vld [vmem:[%s2 + $0x208] sm:$0xff]
        %v2493 = vld [vmem:[%s2 + $0x210] sm:$0xff]
        %v2494 = vld [vmem:[%s2 + $0x218] sm:$0xff]
        %v2495 = vld [vmem:[%s2 + $0x220] sm:$0xff]
        %v2496 = vld [vmem:[%s2 + $0x228] sm:$0xff]
        %v2497 = vld [vmem:[%s2 + $0x230] sm:$0xff]
        %v2498 = vld [vmem:[%s2 + $0x238] sm:$0xff]
        %v2499 = vld [vmem:[%s2 + $0x240] sm:$0xff]
        %v2500 = vld [vmem:[%s2 + $0x248] sm:$0xff]
        %v2501 = vld [vmem:[%s2 + $0x250] sm:$0xff]
        %v2502 = vld [vmem:[%s2 + $0x258] sm:$0xff]
        %v2503 = vld [vmem:[%s2 + $0x260] sm:$0xff]
        %v2504 = vld [vmem:[%s2 + $0x268] sm:$0xff]
        %v2505 = vld [vmem:[%s2 + $0x270] sm:$0xff]
        %v2506 = vld [vmem:[%s2 + $0x278] sm:$0xff]
        %v2507 = vld [vmem:[%s2 + $0x280] sm:$0xff]
        %v2508 = vld [vmem:[%s2 + $0x288] sm:$0xff]
        %v2509 = vld [vmem:[%s2 + $0x290] sm:$0xff]
        %v2510 = vld [vmem:[%s2 + $0x298] sm:$0xff]
        %v2511 = vld [vmem:[%s2 + $0x2a0] sm:$0xff]
        %v2512 = vld [vmem:[%s2 + $0x2a8] sm:$0xff]
        %v2513 = vld [vmem:[%s2 + $0x2b0] sm:$0xff]
        %v2514 = vld [vmem:[%s2 + $0x2b8] sm:$0xff]
        %v2515 = vld [vmem:[%s2 + $0x2c0] sm:$0xff]
        %v2516 = vld [vmem:[%s2 + $0x2c8] sm:$0xff]
        %v2517 = vld [vmem:[%s2 + $0x2d0] sm:$0xff]
        %v2518 = vld [vmem:[%s2 + $0x2d8] sm:$0xff]
        %v2519 = vld [vmem:[%s2 + $0x2e0] sm:$0xff]
        %v2520 = vld [vmem:[%s2 + $0x2e8] sm:$0xff]
        %v2521 = vld [vmem:[%s2 + $0x2f0] sm:$0xff]
        %v2522 = vld [vmem:[%s2 + $0x2f8] sm:$0xff]
        %2524 = vset.pattern.permute.xlu0 0
        %2525 = vperm.xlu0 %2524, %v2491
        %v2526 = vpop.permute.xlu0 %2525
        %2529 = vset.pattern.permute.xlu0 0
        %2530 = vperm.xlu0 %2529, %v2492
        %v2531 = vpop.permute.xlu0 %2530
        %2534 = vset.pattern.permute.xlu0 0
        %2535 = vperm.xlu0 %2534, %v2493
        %v2536 = vpop.permute.xlu0 %2535
        %2539 = vset.pattern.permute.xlu0 0
        %2540 = vperm.xlu0 %2539, %v2494
        %v2541 = vpop.permute.xlu0 %2540
        %2544 = vset.pattern.permute.xlu0 0
        %2545 = vperm.xlu0 %2544, %v2495
        %v2546 = vpop.permute.xlu0 %2545
        %2549 = vset.pattern.permute.xlu0 0
        %2550 = vperm.xlu0 %2549, %v2496
        %v2551 = vpop.permute.xlu0 %2550
        %2554 = vset.pattern.permute.xlu0 0
        %2555 = vperm.xlu0 %2554, %v2497
        %v2556 = vpop.permute.xlu0 %2555
        %2559 = vset.pattern.permute.xlu0 0
        %2560 = vperm.xlu0 %2559, %v2498
        %v2561 = vpop.permute.xlu0 %2560
        %2564 = vset.pattern.permute.xlu0 0
        %2565 = vperm.xlu0 %2564, %v2499
        %v2566 = vpop.permute.xlu0 %2565
        %2569 = vset.pattern.permute.xlu0 0
        %2570 = vperm.xlu0 %2569, %v2500
        %v2571 = vpop.permute.xlu0 %2570
        %2574 = vset.pattern.permute.xlu0 0
        %2575 = vperm.xlu0 %2574, %v2501
        %v2576 = vpop.permute.xlu0 %2575
        %2579 = vset.pattern.permute.xlu0 0
        %2580 = vperm.xlu0 %2579, %v2502
        %v2581 = vpop.permute.xlu0 %2580
        %2584 = vset.pattern.permute.xlu0 0
        %2585 = vperm.xlu0 %2584, %v2503
        %v2586 = vpop.permute.xlu0 %2585
        %2589 = vset.pattern.permute.xlu0 0
        %2590 = vperm.xlu0 %2589, %v2504
        %v2591 = vpop.permute.xlu0 %2590
        %2594 = vset.pattern.permute.xlu0 0
        %2595 = vperm.xlu0 %2594, %v2505
        %v2596 = vpop.permute.xlu0 %2595
        %2599 = vset.pattern.permute.xlu0 0
        %2600 = vperm.xlu0 %2599, %v2506
        %v2601 = vpop.permute.xlu0 %2600
        %2604 = vset.pattern.permute.xlu0 0
        %2605 = vperm.xlu0 %2604, %v2507
        %v2606 = vpop.permute.xlu0 %2605
        %2609 = vset.pattern.permute.xlu0 0
        %2610 = vperm.xlu0 %2609, %v2508
        %v2611 = vpop.permute.xlu0 %2610
        %2614 = vset.pattern.permute.xlu0 0
        %2615 = vperm.xlu0 %2614, %v2509
        %v2616 = vpop.permute.xlu0 %2615
        %2619 = vset.pattern.permute.xlu0 0
        %2620 = vperm.xlu0 %2619, %v2510
        %v2621 = vpop.permute.xlu0 %2620
        %2624 = vset.pattern.permute.xlu0 0
        %2625 = vperm.xlu0 %2624, %v2511
        %v2626 = vpop.permute.xlu0 %2625
        %2629 = vset.pattern.permute.xlu0 0
        %2630 = vperm.xlu0 %2629, %v2512
        %v2631 = vpop.permute.xlu0 %2630
        %2634 = vset.pattern.permute.xlu0 0
        %2635 = vperm.xlu0 %2634, %v2513
        %v2636 = vpop.permute.xlu0 %2635
        %2639 = vset.pattern.permute.xlu0 0
        %2640 = vperm.xlu0 %2639, %v2514
        %v2641 = vpop.permute.xlu0 %2640
        %2644 = vset.pattern.permute.xlu0 0
        %2645 = vperm.xlu0 %2644, %v2515
        %v2646 = vpop.permute.xlu0 %2645
        %2649 = vset.pattern.permute.xlu0 0
        %2650 = vperm.xlu0 %2649, %v2516
        %v2651 = vpop.permute.xlu0 %2650
        %2654 = vset.pattern.permute.xlu0 0
        %2655 = vperm.xlu0 %2654, %v2517
        %v2656 = vpop.permute.xlu0 %2655
        %2659 = vset.pattern.permute.xlu0 0
        %2660 = vperm.xlu0 %2659, %v2518
        %v2661 = vpop.permute.xlu0 %2660
        %2664 = vset.pattern.permute.xlu0 0
        %2665 = vperm.xlu0 %2664, %v2519
        %v2666 = vpop.permute.xlu0 %2665
        %2669 = vset.pattern.permute.xlu0 0
        %2670 = vperm.xlu0 %2669, %v2520
        %v2671 = vpop.permute.xlu0 %2670
        %2674 = vset.pattern.permute.xlu0 0
        %2675 = vperm.xlu0 %2674, %v2521
        %v2676 = vpop.permute.xlu0 %2675
        %2679 = vset.pattern.permute.xlu0 0
        %2680 = vperm.xlu0 %2679, %v2522
        %v2681 = vpop.permute.xlu0 %2680
        %v2715 = vunpack.c.l.b16 %v2459
        %v2716 = vunpack.c.h.b16 %v2459
        %v2717 = vunpack.c.l.b16 %v2460
        %v2718 = vunpack.c.h.b16 %v2460
        %v2719 = vunpack.c.l.b16 %v2461
        %v2720 = vunpack.c.h.b16 %v2461
        %v2721 = vunpack.c.l.b16 %v2462
        %v2722 = vunpack.c.h.b16 %v2462
        %v2723 = vunpack.c.l.b16 %v2463
        %v2724 = vunpack.c.h.b16 %v2463
        %v2725 = vunpack.c.l.b16 %v2464
        %v2726 = vunpack.c.h.b16 %v2464
        %v2727 = vunpack.c.l.b16 %v2465
        %v2728 = vunpack.c.h.b16 %v2465
        %v2729 = vunpack.c.l.b16 %v2466
        %v2730 = vunpack.c.h.b16 %v2466
        %v2731 = vunpack.c.l.b16 %v2467
        %v2732 = vunpack.c.h.b16 %v2467
        %v2733 = vunpack.c.l.b16 %v2468
        %v2734 = vunpack.c.h.b16 %v2468
        %v2735 = vunpack.c.l.b16 %v2469
        %v2736 = vunpack.c.h.b16 %v2469
        %v2737 = vunpack.c.l.b16 %v2470
        %v2738 = vunpack.c.h.b16 %v2470
        %v2739 = vunpack.c.l.b16 %v2471
        %v2740 = vunpack.c.h.b16 %v2471
        %v2741 = vunpack.c.l.b16 %v2472
        %v2742 = vunpack.c.h.b16 %v2472
        %v2743 = vunpack.c.l.b16 %v2473
        %v2744 = vunpack.c.h.b16 %v2473
        %v2745 = vunpack.c.l.b16 %v2474
        %v2746 = vunpack.c.h.b16 %v2474
        %v2747 = vunpack.c.l.b16 %v2475
        %v2748 = vunpack.c.h.b16 %v2475
        %v2749 = vunpack.c.l.b16 %v2476
        %v2750 = vunpack.c.h.b16 %v2476
        %v2751 = vunpack.c.l.b16 %v2477
        %v2752 = vunpack.c.h.b16 %v2477
        %v2753 = vunpack.c.l.b16 %v2478
        %v2754 = vunpack.c.h.b16 %v2478
        %v2755 = vunpack.c.l.b16 %v2479
        %v2756 = vunpack.c.h.b16 %v2479
        %v2757 = vunpack.c.l.b16 %v2480
        %v2758 = vunpack.c.h.b16 %v2480
        %v2759 = vunpack.c.l.b16 %v2481
        %v2760 = vunpack.c.h.b16 %v2481
        %v2761 = vunpack.c.l.b16 %v2482
        %v2762 = vunpack.c.h.b16 %v2482
        %v2763 = vunpack.c.l.b16 %v2483
        %v2764 = vunpack.c.h.b16 %v2483
        %v2765 = vunpack.c.l.b16 %v2484
        %v2766 = vunpack.c.h.b16 %v2484
        %v2767 = vunpack.c.l.b16 %v2485
        %v2768 = vunpack.c.h.b16 %v2485
        %v2769 = vunpack.c.l.b16 %v2486
        %v2770 = vunpack.c.h.b16 %v2486
        %v2771 = vunpack.c.l.b16 %v2487
        %v2772 = vunpack.c.h.b16 %v2487
        %v2773 = vunpack.c.l.b16 %v2488
        %v2774 = vunpack.c.h.b16 %v2488
        %v2775 = vunpack.c.l.b16 %v2489
        %v2776 = vunpack.c.h.b16 %v2489
        %v2777 = vunpack.c.l.b16 %v2490
        %v2778 = vunpack.c.h.b16 %v2490
        %v2779 = vpack.c.b16 %v2717, %v2715
        %v2780 = vpack.c.b16 %v2718, %v2716
        %v2781 = vpack.c.b16 %v2721, %v2719
        %v2782 = vpack.c.b16 %v2722, %v2720
        %v2783 = vpack.c.b16 %v2725, %v2723
        %v2784 = vpack.c.b16 %v2726, %v2724
        %v2785 = vpack.c.b16 %v2729, %v2727
        %v2786 = vpack.c.b16 %v2730, %v2728
        %v2787 = vpack.c.b16 %v2733, %v2731
        %v2788 = vpack.c.b16 %v2734, %v2732
        %v2789 = vpack.c.b16 %v2737, %v2735
        %v2790 = vpack.c.b16 %v2738, %v2736
        %v2791 = vpack.c.b16 %v2741, %v2739
        %v2792 = vpack.c.b16 %v2742, %v2740
        %v2793 = vpack.c.b16 %v2745, %v2743
        %v2794 = vpack.c.b16 %v2746, %v2744
        %v2795 = vpack.c.b16 %v2749, %v2747
        %v2796 = vpack.c.b16 %v2750, %v2748
        %v2797 = vpack.c.b16 %v2753, %v2751
        %v2798 = vpack.c.b16 %v2754, %v2752
        %v2799 = vpack.c.b16 %v2757, %v2755
        %v2800 = vpack.c.b16 %v2758, %v2756
        %v2801 = vpack.c.b16 %v2761, %v2759
        %v2802 = vpack.c.b16 %v2762, %v2760
        %v2803 = vpack.c.b16 %v2765, %v2763
        %v2804 = vpack.c.b16 %v2766, %v2764
        %v2805 = vpack.c.b16 %v2769, %v2767
        %v2806 = vpack.c.b16 %v2770, %v2768
        %v2807 = vpack.c.b16 %v2773, %v2771
        %v2808 = vpack.c.b16 %v2774, %v2772
        %v2809 = vpack.c.b16 %v2777, %v2775
        %v2810 = vpack.c.b16 %v2778, %v2776
        %2843 = vmatpush.bf16.msra.mxu0 %v362
        %2844 = vmatpush.bf16.msra.mxu0 %v361
        %2845 = vmatpush.bf16.msra.mxu0 %v360
        %2846 = vmatpush.bf16.msra.mxu0 %v359
        %2847 = vmatpush.bf16.msra.mxu0 %v358
        %2848 = vmatpush.bf16.msra.mxu0 %v357
        %2849 = vmatpush.bf16.msra.mxu0 %v356
        %2850 = vmatpush.bf16.msra.mxu0 %v355
        %2851 = vmatmul.bf16.gmra.mxu0 %v2779
        %v2852 = vpop.f32.mrf.mxu0
        %v2853 = vadd.f32 %v2526, %v2852
        %v2854 = vpop.f32.mrf.mxu0
        %v2855 = vadd.f32 %v2531, %v2854
        %2856 = vmatmul.bf16.gmra.mxu0 %v2781
        %v2857 = vpop.f32.mrf.mxu0
        %v2858 = vadd.f32 %v2536, %v2857
        %v2859 = vpop.f32.mrf.mxu0
        %v2860 = vadd.f32 %v2541, %v2859
        %2861 = vmatmul.bf16.gmra.mxu0 %v2783
        %v2862 = vpop.f32.mrf.mxu0
        %v2863 = vadd.f32 %v2546, %v2862
        %v2864 = vpop.f32.mrf.mxu0
        %v2865 = vadd.f32 %v2551, %v2864
        %2866 = vmatmul.bf16.gmra.mxu0 %v2785
        %v2867 = vpop.f32.mrf.mxu0
        %v2868 = vadd.f32 %v2556, %v2867
        %v2869 = vpop.f32.mrf.mxu0
        %v2870 = vadd.f32 %v2561, %v2869
        %2871 = vmatmul.bf16.gmra.mxu0 %v2787
        %v2872 = vpop.f32.mrf.mxu0
        %v2873 = vadd.f32 %v2566, %v2872
        %v2874 = vpop.f32.mrf.mxu0
        %v2875 = vadd.f32 %v2571, %v2874
        %2876 = vmatmul.bf16.gmra.mxu0 %v2789
        %v2877 = vpop.f32.mrf.mxu0
        %v2878 = vadd.f32 %v2576, %v2877
        %v2879 = vpop.f32.mrf.mxu0
        %v2880 = vadd.f32 %v2581, %v2879
        %2881 = vmatmul.bf16.gmra.mxu0 %v2791
        %v2882 = vpop.f32.mrf.mxu0
        %v2883 = vadd.f32 %v2586, %v2882
        %v2884 = vpop.f32.mrf.mxu0
        %v2885 = vadd.f32 %v2591, %v2884
        %2886 = vmatmul.bf16.gmra.mxu0 %v2793
        %v2887 = vpop.f32.mrf.mxu0
        %v2888 = vadd.f32 %v2596, %v2887
        %v2889 = vpop.f32.mrf.mxu0
        %v2890 = vadd.f32 %v2601, %v2889
        %2891 = vmatmul.bf16.gmra.mxu0 %v2795
        %v2892 = vpop.f32.mrf.mxu0
        %v2893 = vadd.f32 %v2606, %v2892
        %v2894 = vpop.f32.mrf.mxu0
        %v2895 = vadd.f32 %v2611, %v2894
        %2896 = vmatmul.bf16.gmra.mxu0 %v2797
        %v2897 = vpop.f32.mrf.mxu0
        %v2898 = vadd.f32 %v2616, %v2897
        %v2899 = vpop.f32.mrf.mxu0
        %v2900 = vadd.f32 %v2621, %v2899
        %2901 = vmatmul.bf16.gmra.mxu0 %v2799
        %v2902 = vpop.f32.mrf.mxu0
        %v2903 = vadd.f32 %v2626, %v2902
        %v2904 = vpop.f32.mrf.mxu0
        %v2905 = vadd.f32 %v2631, %v2904
        %2906 = vmatmul.bf16.gmra.mxu0 %v2801
        %v2907 = vpop.f32.mrf.mxu0
        %v2908 = vadd.f32 %v2636, %v2907
        %v2909 = vpop.f32.mrf.mxu0
        %v2910 = vadd.f32 %v2641, %v2909
        %2911 = vmatmul.bf16.gmra.mxu0 %v2803
        %v2912 = vpop.f32.mrf.mxu0
        %v2913 = vadd.f32 %v2646, %v2912
        %v2914 = vpop.f32.mrf.mxu0
        %v2915 = vadd.f32 %v2651, %v2914
        %2916 = vmatmul.bf16.gmra.mxu0 %v2805
        %v2917 = vpop.f32.mrf.mxu0
        %v2918 = vadd.f32 %v2656, %v2917
        %v2919 = vpop.f32.mrf.mxu0
        %v2920 = vadd.f32 %v2661, %v2919
        %2921 = vmatmul.bf16.gmra.mxu0 %v2807
        %v2922 = vpop.f32.mrf.mxu0
        %v2923 = vadd.f32 %v2666, %v2922
        %v2924 = vpop.f32.mrf.mxu0
        %v2925 = vadd.f32 %v2671, %v2924
        %2926 = vmatmul.bf16.gmra.mxu0 %v2809
        %v2927 = vpop.f32.mrf.mxu0
        %v2928 = vadd.f32 %v2676, %v2927
        %v2929 = vpop.f32.mrf.mxu0
        %v2930 = vadd.f32 %v2681, %v2929
        %2931 = vdwg.mxu0
        %2932 = vmatpush.bf16.msra.mxu0 %v370
        %2933 = vmatpush.bf16.msra.mxu0 %v369
        %2934 = vmatpush.bf16.msra.mxu0 %v368
        %2935 = vmatpush.bf16.msra.mxu0 %v367
        %2936 = vmatpush.bf16.msra.mxu0 %v366
        %2937 = vmatpush.bf16.msra.mxu0 %v365
        %2938 = vmatpush.bf16.msra.mxu0 %v364
        %2939 = vmatpush.bf16.msra.mxu0 %v363
        %2940 = vmatmul.bf16.gmra.mxu0 %v2780
        %v2941 = vpop.f32.mrf.mxu0
        %v2942 = vadd.f32 %v2853, %v2941
        %v2943 = vpop.f32.mrf.mxu0
        %v2944 = vadd.f32 %v2855, %v2943
        %2945 = vmatmul.bf16.gmra.mxu0 %v2782
        %v2946 = vpop.f32.mrf.mxu0
        %v2947 = vadd.f32 %v2858, %v2946
        %v2948 = vpop.f32.mrf.mxu0
        %v2949 = vadd.f32 %v2860, %v2948
        %2950 = vmatmul.bf16.gmra.mxu0 %v2784
        %v2951 = vpop.f32.mrf.mxu0
        %v2952 = vadd.f32 %v2863, %v2951
        %v2953 = vpop.f32.mrf.mxu0
        %v2954 = vadd.f32 %v2865, %v2953
        %2955 = vmatmul.bf16.gmra.mxu0 %v2786
        %v2956 = vpop.f32.mrf.mxu0
        %v2957 = vadd.f32 %v2868, %v2956
        %v2958 = vpop.f32.mrf.mxu0
        %v2959 = vadd.f32 %v2870, %v2958
        %2960 = vmatmul.bf16.gmra.mxu0 %v2788
        %v2961 = vpop.f32.mrf.mxu0
        %v2962 = vadd.f32 %v2873, %v2961
        %v2963 = vpop.f32.mrf.mxu0
        %v2964 = vadd.f32 %v2875, %v2963
        %2965 = vmatmul.bf16.gmra.mxu0 %v2790
        %v2966 = vpop.f32.mrf.mxu0
        %v2967 = vadd.f32 %v2878, %v2966
        %v2968 = vpop.f32.mrf.mxu0
        %v2969 = vadd.f32 %v2880, %v2968
        %2970 = vmatmul.bf16.gmra.mxu0 %v2792
        %v2971 = vpop.f32.mrf.mxu0
        %v2972 = vadd.f32 %v2883, %v2971
        %v2973 = vpop.f32.mrf.mxu0
        %v2974 = vadd.f32 %v2885, %v2973
        %2975 = vmatmul.bf16.gmra.mxu0 %v2794
        %v2976 = vpop.f32.mrf.mxu0
        %v2977 = vadd.f32 %v2888, %v2976
        %v2978 = vpop.f32.mrf.mxu0
        %v2979 = vadd.f32 %v2890, %v2978
        %2980 = vmatmul.bf16.gmra.mxu0 %v2796
        %v2981 = vpop.f32.mrf.mxu0
        %v2982 = vadd.f32 %v2893, %v2981
        %v2983 = vpop.f32.mrf.mxu0
        %v2984 = vadd.f32 %v2895, %v2983
        %2985 = vmatmul.bf16.gmra.mxu0 %v2798
        %v2986 = vpop.f32.mrf.mxu0
        %v2987 = vadd.f32 %v2898, %v2986
        %v2988 = vpop.f32.mrf.mxu0
        %v2989 = vadd.f32 %v2900, %v2988
        %2990 = vmatmul.bf16.gmra.mxu0 %v2800
        %v2991 = vpop.f32.mrf.mxu0
        %v2992 = vadd.f32 %v2903, %v2991
        %v2993 = vpop.f32.mrf.mxu0
        %v2994 = vadd.f32 %v2905, %v2993
        %2995 = vmatmul.bf16.gmra.mxu0 %v2802
        %v2996 = vpop.f32.mrf.mxu0
        %v2997 = vadd.f32 %v2908, %v2996
        %v2998 = vpop.f32.mrf.mxu0
        %v2999 = vadd.f32 %v2910, %v2998
        %3000 = vmatmul.bf16.gmra.mxu0 %v2804
        %v3001 = vpop.f32.mrf.mxu0
        %v3002 = vadd.f32 %v2913, %v3001
        %v3003 = vpop.f32.mrf.mxu0
        %v3004 = vadd.f32 %v2915, %v3003
        %3005 = vmatmul.bf16.gmra.mxu0 %v2806
        %v3006 = vpop.f32.mrf.mxu0
        %v3007 = vadd.f32 %v2918, %v3006
        %v3008 = vpop.f32.mrf.mxu0
        %v3009 = vadd.f32 %v2920, %v3008
        %3010 = vmatmul.bf16.gmra.mxu0 %v2808
        %v3011 = vpop.f32.mrf.mxu0
        %v3012 = vadd.f32 %v2923, %v3011
        %v3013 = vpop.f32.mrf.mxu0
        %v3014 = vadd.f32 %v2925, %v3013
        %3015 = vmatmul.bf16.gmra.mxu0 %v2810
        %v3016 = vpop.f32.mrf.mxu0
        %v3017 = vadd.f32 %v2928, %v3016
        %v3018 = vpop.f32.mrf.mxu0
        %v3019 = vadd.f32 %v2930, %v3018
        %3020 = vdwg.mxu0
        %v3021 = vld [vmem:[%s285 + $0x200] sm:$0xff]
        %v3022 = vld [vmem:[%s285 + $0x208] sm:$0xff]
        %v3023 = vld [vmem:[%s285 + $0x210] sm:$0xff]
        %v3024 = vld [vmem:[%s285 + $0x218] sm:$0xff]
        %v3025 = vld [vmem:[%s285 + $0x220] sm:$0xff]
        %v3026 = vld [vmem:[%s285 + $0x228] sm:$0xff]
        %v3027 = vld [vmem:[%s285 + $0x230] sm:$0xff]
        %v3028 = vld [vmem:[%s285 + $0x238] sm:$0xff]
        %v3029 = vld [vmem:[%s285 + $0x240] sm:$0xff]
        %v3030 = vld [vmem:[%s285 + $0x248] sm:$0xff]
        %v3031 = vld [vmem:[%s285 + $0x250] sm:$0xff]
        %v3032 = vld [vmem:[%s285 + $0x258] sm:$0xff]
        %v3033 = vld [vmem:[%s285 + $0x260] sm:$0xff]
        %v3034 = vld [vmem:[%s285 + $0x268] sm:$0xff]
        %v3035 = vld [vmem:[%s285 + $0x270] sm:$0xff]
        %v3036 = vld [vmem:[%s285 + $0x278] sm:$0xff]
        %v3037 = vld [vmem:[%s285 + $0x280] sm:$0xff]
        %v3038 = vld [vmem:[%s285 + $0x288] sm:$0xff]
        %v3039 = vld [vmem:[%s285 + $0x290] sm:$0xff]
        %v3040 = vld [vmem:[%s285 + $0x298] sm:$0xff]
        %v3041 = vld [vmem:[%s285 + $0x2a0] sm:$0xff]
        %v3042 = vld [vmem:[%s285 + $0x2a8] sm:$0xff]
        %v3043 = vld [vmem:[%s285 + $0x2b0] sm:$0xff]
        %v3044 = vld [vmem:[%s285 + $0x2b8] sm:$0xff]
        %v3045 = vld [vmem:[%s285 + $0x2c0] sm:$0xff]
        %v3046 = vld [vmem:[%s285 + $0x2c8] sm:$0xff]
        %v3047 = vld [vmem:[%s285 + $0x2d0] sm:$0xff]
        %v3048 = vld [vmem:[%s285 + $0x2d8] sm:$0xff]
        %v3049 = vld [vmem:[%s285 + $0x2e0] sm:$0xff]
        %v3050 = vld [vmem:[%s285 + $0x2e8] sm:$0xff]
        %v3051 = vld [vmem:[%s285 + $0x2f0] sm:$0xff]
        %v3052 = vld [vmem:[%s285 + $0x2f8] sm:$0xff]
        %v3053 = vadd.f32 %v2942, %v3021
        %v3054 = vadd.f32 %v2944, %v3022
        %v3055 = vadd.f32 %v2947, %v3023
        %v3056 = vadd.f32 %v2949, %v3024
        %v3057 = vadd.f32 %v2952, %v3025
        %v3058 = vadd.f32 %v2954, %v3026
        %v3059 = vadd.f32 %v2957, %v3027
        %v3060 = vadd.f32 %v2959, %v3028
        %v3061 = vadd.f32 %v2962, %v3029
        %v3062 = vadd.f32 %v2964, %v3030
        %v3063 = vadd.f32 %v2967, %v3031
        %v3064 = vadd.f32 %v2969, %v3032
        %v3065 = vadd.f32 %v2972, %v3033
        %v3066 = vadd.f32 %v2974, %v3034
        %v3067 = vadd.f32 %v2977, %v3035
        %v3068 = vadd.f32 %v2979, %v3036
        %v3069 = vadd.f32 %v2982, %v3037
        %v3070 = vadd.f32 %v2984, %v3038
        %v3071 = vadd.f32 %v2987, %v3039
        %v3072 = vadd.f32 %v2989, %v3040
        %v3073 = vadd.f32 %v2992, %v3041
        %v3074 = vadd.f32 %v2994, %v3042
        %v3075 = vadd.f32 %v2997, %v3043
        %v3076 = vadd.f32 %v2999, %v3044
        %v3077 = vadd.f32 %v3002, %v3045
        %v3078 = vadd.f32 %v3004, %v3046
        %v3079 = vadd.f32 %v3007, %v3047
        %v3080 = vadd.f32 %v3009, %v3048
        %v3081 = vadd.f32 %v3012, %v3049
        %v3082 = vadd.f32 %v3014, %v3050
        %v3083 = vadd.f32 %v3017, %v3051
        %v3084 = vadd.f32 %v3019, %v3052
        %v3085 = vmax.f32 %v3053, 0.0
        %v3086 = vmax.f32 %v3054, 0.0
        %v3087 = vmax.f32 %v3055, 0.0
        %v3088 = vmax.f32 %v3056, 0.0
        %v3089 = vmax.f32 %v3057, 0.0
        %v3090 = vmax.f32 %v3058, 0.0
        %v3091 = vmax.f32 %v3059, 0.0
        %v3092 = vmax.f32 %v3060, 0.0
        %v3093 = vmax.f32 %v3061, 0.0
        %v3094 = vmax.f32 %v3062, 0.0
        %v3095 = vmax.f32 %v3063, 0.0
        %v3096 = vmax.f32 %v3064, 0.0
        %v3097 = vmax.f32 %v3065, 0.0
        %v3098 = vmax.f32 %v3066, 0.0
        %v3099 = vmax.f32 %v3067, 0.0
        %v3100 = vmax.f32 %v3068, 0.0
        %v3101 = vmax.f32 %v3069, 0.0
        %v3102 = vmax.f32 %v3070, 0.0
        %v3103 = vmax.f32 %v3071, 0.0
        %v3104 = vmax.f32 %v3072, 0.0
        %v3105 = vmax.f32 %v3073, 0.0
        %v3106 = vmax.f32 %v3074, 0.0
        %v3107 = vmax.f32 %v3075, 0.0
        %v3108 = vmax.f32 %v3076, 0.0
        %v3109 = vmax.f32 %v3077, 0.0
        %v3110 = vmax.f32 %v3078, 0.0
        %v3111 = vmax.f32 %v3079, 0.0
        %v3112 = vmax.f32 %v3080, 0.0
        %v3113 = vmax.f32 %v3081, 0.0
        %v3114 = vmax.f32 %v3082, 0.0
        %v3115 = vmax.f32 %v3083, 0.0
        %v3116 = vmax.f32 %v3084, 0.0
        %v3117 = vld [vmem:[#allocation7 + $0x10] sm:$0xff]
        %v3118 = vld [vmem:[#allocation7 + $0x30] sm:$0xff]
        %v3119 = vld [vmem:[#allocation7 + $0x50] sm:$0xff]
        %v3120 = vld [vmem:[#allocation7 + $0x70] sm:$0xff]
        %v3121 = vld [vmem:[#allocation7 + $0x90] sm:$0xff]
        %v3122 = vld [vmem:[#allocation7 + $0xb0] sm:$0xff]
        %v3123 = vld [vmem:[#allocation7 + $0xd0] sm:$0xff]
        %v3124 = vld [vmem:[#allocation7 + $0xf0] sm:$0xff]
        %v3125 = vld [vmem:[#allocation7 + $0x110] sm:$0xff]
        %v3126 = vld [vmem:[#allocation7 + $0x130] sm:$0xff]
        %v3127 = vld [vmem:[#allocation7 + $0x150] sm:$0xff]
        %v3128 = vld [vmem:[#allocation7 + $0x170] sm:$0xff]
        %v3129 = vld [vmem:[#allocation7 + $0x190] sm:$0xff]
        %v3130 = vld [vmem:[#allocation7 + $0x1b0] sm:$0xff]
        %v3131 = vld [vmem:[#allocation7 + $0x1d0] sm:$0xff]
        %v3132 = vld [vmem:[#allocation7 + $0x1f0] sm:$0xff]
        %v3133 = vld [vmem:[#allocation7 + $0x210] sm:$0xff]
        %v3134 = vld [vmem:[#allocation7 + $0x230] sm:$0xff]
        %v3135 = vld [vmem:[#allocation7 + $0x250] sm:$0xff]
        %v3136 = vld [vmem:[#allocation7 + $0x270] sm:$0xff]
        %v3137 = vld [vmem:[#allocation7 + $0x290] sm:$0xff]
        %v3138 = vld [vmem:[#allocation7 + $0x2b0] sm:$0xff]
        %v3139 = vld [vmem:[#allocation7 + $0x2d0] sm:$0xff]
        %v3140 = vld [vmem:[#allocation7 + $0x2f0] sm:$0xff]
        %v3141 = vld [vmem:[#allocation7 + $0x310] sm:$0xff]
        %v3142 = vld [vmem:[#allocation7 + $0x330] sm:$0xff]
        %v3143 = vld [vmem:[#allocation7 + $0x350] sm:$0xff]
        %v3144 = vld [vmem:[#allocation7 + $0x370] sm:$0xff]
        %v3145 = vld [vmem:[#allocation7 + $0x390] sm:$0xff]
        %v3146 = vld [vmem:[#allocation7 + $0x3b0] sm:$0xff]
        %v3147 = vld [vmem:[#allocation7 + $0x3d0] sm:$0xff]
        %v3148 = vld [vmem:[#allocation7 + $0x3f0] sm:$0xff]
        %v3149 = vpack.c.bf16 %v3086, %v3085
        %v3150 = vpack.c.bf16 %v3088, %v3087
        %v3151 = vpack.c.bf16 %v3090, %v3089
        %v3152 = vpack.c.bf16 %v3092, %v3091
        %v3153 = vpack.c.bf16 %v3094, %v3093
        %v3154 = vpack.c.bf16 %v3096, %v3095
        %v3155 = vpack.c.bf16 %v3098, %v3097
        %v3156 = vpack.c.bf16 %v3100, %v3099
        %v3157 = vpack.c.bf16 %v3102, %v3101
        %v3158 = vpack.c.bf16 %v3104, %v3103
        %v3159 = vpack.c.bf16 %v3106, %v3105
        %v3160 = vpack.c.bf16 %v3108, %v3107
        %v3161 = vpack.c.bf16 %v3110, %v3109
        %v3162 = vpack.c.bf16 %v3112, %v3111
        %v3163 = vpack.c.bf16 %v3114, %v3113
        %v3164 = vpack.c.bf16 %v3116, %v3115
        %v3197 = vunpack.c.l.b16 %v3117
        %v3198 = vunpack.c.h.b16 %v3117
        %v3199 = vunpack.c.l.b16 %v3118
        %v3200 = vunpack.c.h.b16 %v3118
        %v3201 = vunpack.c.l.b16 %v3119
        %v3202 = vunpack.c.h.b16 %v3119
        %v3203 = vunpack.c.l.b16 %v3120
        %v3204 = vunpack.c.h.b16 %v3120
        %v3205 = vunpack.c.l.b16 %v3121
        %v3206 = vunpack.c.h.b16 %v3121
        %v3207 = vunpack.c.l.b16 %v3122
        %v3208 = vunpack.c.h.b16 %v3122
        %v3209 = vunpack.c.l.b16 %v3123
        %v3210 = vunpack.c.h.b16 %v3123
        %v3211 = vunpack.c.l.b16 %v3124
        %v3212 = vunpack.c.h.b16 %v3124
        %v3213 = vunpack.c.l.b16 %v3125
        %v3214 = vunpack.c.h.b16 %v3125
        %v3215 = vunpack.c.l.b16 %v3126
        %v3216 = vunpack.c.h.b16 %v3126
        %v3217 = vunpack.c.l.b16 %v3127
        %v3218 = vunpack.c.h.b16 %v3127
        %v3219 = vunpack.c.l.b16 %v3128
        %v3220 = vunpack.c.h.b16 %v3128
        %v3221 = vunpack.c.l.b16 %v3129
        %v3222 = vunpack.c.h.b16 %v3129
        %v3223 = vunpack.c.l.b16 %v3130
        %v3224 = vunpack.c.h.b16 %v3130
        %v3225 = vunpack.c.l.b16 %v3131
        %v3226 = vunpack.c.h.b16 %v3131
        %v3227 = vunpack.c.l.b16 %v3132
        %v3228 = vunpack.c.h.b16 %v3132
        %v3229 = vunpack.c.l.b16 %v3133
        %v3230 = vunpack.c.h.b16 %v3133
        %v3231 = vunpack.c.l.b16 %v3134
        %v3232 = vunpack.c.h.b16 %v3134
        %v3233 = vunpack.c.l.b16 %v3135
        %v3234 = vunpack.c.h.b16 %v3135
        %v3235 = vunpack.c.l.b16 %v3136
        %v3236 = vunpack.c.h.b16 %v3136
        %v3237 = vunpack.c.l.b16 %v3137
        %v3238 = vunpack.c.h.b16 %v3137
        %v3239 = vunpack.c.l.b16 %v3138
        %v3240 = vunpack.c.h.b16 %v3138
        %v3241 = vunpack.c.l.b16 %v3139
        %v3242 = vunpack.c.h.b16 %v3139
        %v3243 = vunpack.c.l.b16 %v3140
        %v3244 = vunpack.c.h.b16 %v3140
        %v3245 = vunpack.c.l.b16 %v3141
        %v3246 = vunpack.c.h.b16 %v3141
        %v3247 = vunpack.c.l.b16 %v3142
        %v3248 = vunpack.c.h.b16 %v3142
        %v3249 = vunpack.c.l.b16 %v3143
        %v3250 = vunpack.c.h.b16 %v3143
        %v3251 = vunpack.c.l.b16 %v3144
        %v3252 = vunpack.c.h.b16 %v3144
        %v3253 = vunpack.c.l.b16 %v3145
        %v3254 = vunpack.c.h.b16 %v3145
        %v3255 = vunpack.c.l.b16 %v3146
        %v3256 = vunpack.c.h.b16 %v3146
        %v3257 = vunpack.c.l.b16 %v3147
        %v3258 = vunpack.c.h.b16 %v3147
        %v3259 = vunpack.c.l.b16 %v3148
        %v3260 = vunpack.c.h.b16 %v3148
        %v3261 = vpack.c.b16 %v3199, %v3197
        %v3262 = vpack.c.b16 %v3200, %v3198
        %v3263 = vpack.c.b16 %v3203, %v3201
        %v3264 = vpack.c.b16 %v3204, %v3202
        %v3265 = vpack.c.b16 %v3207, %v3205
        %v3266 = vpack.c.b16 %v3208, %v3206
        %v3267 = vpack.c.b16 %v3211, %v3209
        %v3268 = vpack.c.b16 %v3212, %v3210
        %v3269 = vpack.c.b16 %v3215, %v3213
        %v3270 = vpack.c.b16 %v3216, %v3214
        %v3271 = vpack.c.b16 %v3219, %v3217
        %v3272 = vpack.c.b16 %v3220, %v3218
        %v3273 = vpack.c.b16 %v3223, %v3221
        %v3274 = vpack.c.b16 %v3224, %v3222
        %v3275 = vpack.c.b16 %v3227, %v3225
        %v3276 = vpack.c.b16 %v3228, %v3226
        %v3277 = vpack.c.b16 %v3231, %v3229
        %v3278 = vpack.c.b16 %v3232, %v3230
        %v3279 = vpack.c.b16 %v3235, %v3233
        %v3280 = vpack.c.b16 %v3236, %v3234
        %v3281 = vpack.c.b16 %v3239, %v3237
        %v3282 = vpack.c.b16 %v3240, %v3238
        %v3283 = vpack.c.b16 %v3243, %v3241
        %v3284 = vpack.c.b16 %v3244, %v3242
        %v3285 = vpack.c.b16 %v3247, %v3245
        %v3286 = vpack.c.b16 %v3248, %v3246
        %v3287 = vpack.c.b16 %v3251, %v3249
        %v3288 = vpack.c.b16 %v3252, %v3250
        %v3289 = vpack.c.b16 %v3255, %v3253
        %v3290 = vpack.c.b16 %v3256, %v3254
        %v3291 = vpack.c.b16 %v3259, %v3257
        %v3292 = vpack.c.b16 %v3260, %v3258
        %3325 = vmatpush.bf16.msra.mxu0 %v3156
        %3326 = vmatpush.bf16.msra.mxu0 %v3155
        %3327 = vmatpush.bf16.msra.mxu0 %v3154
        %3328 = vmatpush.bf16.msra.mxu0 %v3153
        %3329 = vmatpush.bf16.msra.mxu0 %v3152
        %3330 = vmatpush.bf16.msra.mxu0 %v3151
        %3331 = vmatpush.bf16.msra.mxu0 %v3150
        %3332 = vmatpush.bf16.msra.mxu0 %v3149
        %3333 = vmatmul.bf16.gmra.mxu0 %v3261
        %v3334 = vpop.f32.mrf.mxu0
        %v3335 = vadd.f32 0.0, %v3334
        %v3336 = vpop.f32.mrf.mxu0
        %v3337 = vadd.f32 0.0, %v3336
        %3338 = vmatmul.bf16.gmra.mxu0 %v3263
        %v3339 = vpop.f32.mrf.mxu0
        %v3340 = vadd.f32 0.0, %v3339
        %v3341 = vpop.f32.mrf.mxu0
        %v3342 = vadd.f32 0.0, %v3341
        %3343 = vmatmul.bf16.gmra.mxu0 %v3265
        %v3344 = vpop.f32.mrf.mxu0
        %v3345 = vadd.f32 0.0, %v3344
        %v3346 = vpop.f32.mrf.mxu0
        %v3347 = vadd.f32 0.0, %v3346
        %3348 = vmatmul.bf16.gmra.mxu0 %v3267
        %v3349 = vpop.f32.mrf.mxu0
        %v3350 = vadd.f32 0.0, %v3349
        %v3351 = vpop.f32.mrf.mxu0
        %v3352 = vadd.f32 0.0, %v3351
        %3353 = vmatmul.bf16.gmra.mxu0 %v3269
        %v3354 = vpop.f32.mrf.mxu0
        %v3355 = vadd.f32 0.0, %v3354
        %v3356 = vpop.f32.mrf.mxu0
        %v3357 = vadd.f32 0.0, %v3356
        %3358 = vmatmul.bf16.gmra.mxu0 %v3271
        %v3359 = vpop.f32.mrf.mxu0
        %v3360 = vadd.f32 0.0, %v3359
        %v3361 = vpop.f32.mrf.mxu0
        %v3362 = vadd.f32 0.0, %v3361
        %3363 = vmatmul.bf16.gmra.mxu0 %v3273
        %v3364 = vpop.f32.mrf.mxu0
        %v3365 = vadd.f32 0.0, %v3364
        %v3366 = vpop.f32.mrf.mxu0
        %v3367 = vadd.f32 0.0, %v3366
        %3368 = vmatmul.bf16.gmra.mxu0 %v3275
        %v3369 = vpop.f32.mrf.mxu0
        %v3370 = vadd.f32 0.0, %v3369
        %v3371 = vpop.f32.mrf.mxu0
        %v3372 = vadd.f32 0.0, %v3371
        %3373 = vmatmul.bf16.gmra.mxu0 %v3277
        %v3374 = vpop.f32.mrf.mxu0
        %v3375 = vadd.f32 0.0, %v3374
        %v3376 = vpop.f32.mrf.mxu0
        %v3377 = vadd.f32 0.0, %v3376
        %3378 = vmatmul.bf16.gmra.mxu0 %v3279
        %v3379 = vpop.f32.mrf.mxu0
        %v3380 = vadd.f32 0.0, %v3379
        %v3381 = vpop.f32.mrf.mxu0
        %v3382 = vadd.f32 0.0, %v3381
        %3383 = vmatmul.bf16.gmra.mxu0 %v3281
        %v3384 = vpop.f32.mrf.mxu0
        %v3385 = vadd.f32 0.0, %v3384
        %v3386 = vpop.f32.mrf.mxu0
        %v3387 = vadd.f32 0.0, %v3386
        %3388 = vmatmul.bf16.gmra.mxu0 %v3283
        %v3389 = vpop.f32.mrf.mxu0
        %v3390 = vadd.f32 0.0, %v3389
        %v3391 = vpop.f32.mrf.mxu0
        %v3392 = vadd.f32 0.0, %v3391
        %3393 = vmatmul.bf16.gmra.mxu0 %v3285
        %v3394 = vpop.f32.mrf.mxu0
        %v3395 = vadd.f32 0.0, %v3394
        %v3396 = vpop.f32.mrf.mxu0
        %v3397 = vadd.f32 0.0, %v3396
        %3398 = vmatmul.bf16.gmra.mxu0 %v3287
        %v3399 = vpop.f32.mrf.mxu0
        %v3400 = vadd.f32 0.0, %v3399
        %v3401 = vpop.f32.mrf.mxu0
        %v3402 = vadd.f32 0.0, %v3401
        %3403 = vmatmul.bf16.gmra.mxu0 %v3289
        %v3404 = vpop.f32.mrf.mxu0
        %v3405 = vadd.f32 0.0, %v3404
        %v3406 = vpop.f32.mrf.mxu0
        %v3407 = vadd.f32 0.0, %v3406
        %3408 = vmatmul.bf16.gmra.mxu0 %v3291
        %v3409 = vpop.f32.mrf.mxu0
        %v3410 = vadd.f32 0.0, %v3409
        %v3411 = vpop.f32.mrf.mxu0
        %v3412 = vadd.f32 0.0, %v3411
        %3413 = vdwg.mxu0
        %3414 = vmatpush.bf16.msra.mxu0 %v3164
        %3415 = vmatpush.bf16.msra.mxu0 %v3163
        %3416 = vmatpush.bf16.msra.mxu0 %v3162
        %3417 = vmatpush.bf16.msra.mxu0 %v3161
        %3418 = vmatpush.bf16.msra.mxu0 %v3160
        %3419 = vmatpush.bf16.msra.mxu0 %v3159
        %3420 = vmatpush.bf16.msra.mxu0 %v3158
        %3421 = vmatpush.bf16.msra.mxu0 %v3157
        %3422 = vmatmul.bf16.gmra.mxu0 %v3262
        %v3423 = vpop.f32.mrf.mxu0
        %v3424 = vadd.f32 %v3335, %v3423
        %v3425 = vpop.f32.mrf.mxu0
        %v3426 = vadd.f32 %v3337, %v3425
        %3427 = vmatmul.bf16.gmra.mxu0 %v3264
        %v3428 = vpop.f32.mrf.mxu0
        %v3429 = vadd.f32 %v3340, %v3428
        %v3430 = vpop.f32.mrf.mxu0
        %v3431 = vadd.f32 %v3342, %v3430
        %3432 = vmatmul.bf16.gmra.mxu0 %v3266
        %v3433 = vpop.f32.mrf.mxu0
        %v3434 = vadd.f32 %v3345, %v3433
        %v3435 = vpop.f32.mrf.mxu0
        %v3436 = vadd.f32 %v3347, %v3435
        %3437 = vmatmul.bf16.gmra.mxu0 %v3268
        %v3438 = vpop.f32.mrf.mxu0
        %v3439 = vadd.f32 %v3350, %v3438
        %v3440 = vpop.f32.mrf.mxu0
        %v3441 = vadd.f32 %v3352, %v3440
        %3442 = vmatmul.bf16.gmra.mxu0 %v3270
        %v3443 = vpop.f32.mrf.mxu0
        %v3444 = vadd.f32 %v3355, %v3443
        %v3445 = vpop.f32.mrf.mxu0
        %v3446 = vadd.f32 %v3357, %v3445
        %3447 = vmatmul.bf16.gmra.mxu0 %v3272
        %v3448 = vpop.f32.mrf.mxu0
        %v3449 = vadd.f32 %v3360, %v3448
        %v3450 = vpop.f32.mrf.mxu0
        %v3451 = vadd.f32 %v3362, %v3450
        %3452 = vmatmul.bf16.gmra.mxu0 %v3274
        %v3453 = vpop.f32.mrf.mxu0
        %v3454 = vadd.f32 %v3365, %v3453
        %v3455 = vpop.f32.mrf.mxu0
        %v3456 = vadd.f32 %v3367, %v3455
        %3457 = vmatmul.bf16.gmra.mxu0 %v3276
        %v3458 = vpop.f32.mrf.mxu0
        %v3459 = vadd.f32 %v3370, %v3458
        %v3460 = vpop.f32.mrf.mxu0
        %v3461 = vadd.f32 %v3372, %v3460
        %3462 = vmatmul.bf16.gmra.mxu0 %v3278
        %v3463 = vpop.f32.mrf.mxu0
        %v3464 = vadd.f32 %v3375, %v3463
        %v3465 = vpop.f32.mrf.mxu0
        %v3466 = vadd.f32 %v3377, %v3465
        %3467 = vmatmul.bf16.gmra.mxu0 %v3280
        %v3468 = vpop.f32.mrf.mxu0
        %v3469 = vadd.f32 %v3380, %v3468
        %v3470 = vpop.f32.mrf.mxu0
        %v3471 = vadd.f32 %v3382, %v3470
        %3472 = vmatmul.bf16.gmra.mxu0 %v3282
        %v3473 = vpop.f32.mrf.mxu0
        %v3474 = vadd.f32 %v3385, %v3473
        %v3475 = vpop.f32.mrf.mxu0
        %v3476 = vadd.f32 %v3387, %v3475
        %3477 = vmatmul.bf16.gmra.mxu0 %v3284
        %v3478 = vpop.f32.mrf.mxu0
        %v3479 = vadd.f32 %v3390, %v3478
        %v3480 = vpop.f32.mrf.mxu0
        %v3481 = vadd.f32 %v3392, %v3480
        %3482 = vmatmul.bf16.gmra.mxu0 %v3286
        %v3483 = vpop.f32.mrf.mxu0
        %v3484 = vadd.f32 %v3395, %v3483
        %v3485 = vpop.f32.mrf.mxu0
        %v3486 = vadd.f32 %v3397, %v3485
        %3487 = vmatmul.bf16.gmra.mxu0 %v3288
        %v3488 = vpop.f32.mrf.mxu0
        %v3489 = vadd.f32 %v3400, %v3488
        %v3490 = vpop.f32.mrf.mxu0
        %v3491 = vadd.f32 %v3402, %v3490
        %3492 = vmatmul.bf16.gmra.mxu0 %v3290
        %v3493 = vpop.f32.mrf.mxu0
        %v3494 = vadd.f32 %v3405, %v3493
        %v3495 = vpop.f32.mrf.mxu0
        %v3496 = vadd.f32 %v3407, %v3495
        %3497 = vmatmul.bf16.gmra.mxu0 %v3292
        %v3498 = vpop.f32.mrf.mxu0
        %v3499 = vadd.f32 %v3410, %v3498
        %v3500 = vpop.f32.mrf.mxu0
        %v3501 = vadd.f32 %v3412, %v3500
        %3502 = vdwg.mxu0
        %v3503 = vadd.f32 %v2380, %v3424
        %v3504 = vadd.f32 %v2382, %v3426
        %v3505 = vadd.f32 %v2385, %v3429
        %v3506 = vadd.f32 %v2387, %v3431
        %v3507 = vadd.f32 %v2390, %v3434
        %v3508 = vadd.f32 %v2392, %v3436
        %v3509 = vadd.f32 %v2395, %v3439
        %v3510 = vadd.f32 %v2397, %v3441
        %v3511 = vadd.f32 %v2400, %v3444
        %v3512 = vadd.f32 %v2402, %v3446
        %v3513 = vadd.f32 %v2405, %v3449
        %v3514 = vadd.f32 %v2407, %v3451
        %v3515 = vadd.f32 %v2410, %v3454
        %v3516 = vadd.f32 %v2412, %v3456
        %v3517 = vadd.f32 %v2415, %v3459
        %v3518 = vadd.f32 %v2417, %v3461
        %v3519 = vadd.f32 %v2420, %v3464
        %v3520 = vadd.f32 %v2422, %v3466
        %v3521 = vadd.f32 %v2425, %v3469
        %v3522 = vadd.f32 %v2427, %v3471
        %v3523 = vadd.f32 %v2430, %v3474
        %v3524 = vadd.f32 %v2432, %v3476
        %v3525 = vadd.f32 %v2435, %v3479
        %v3526 = vadd.f32 %v2437, %v3481
        %v3527 = vadd.f32 %v2440, %v3484
        %v3528 = vadd.f32 %v2442, %v3486
        %v3529 = vadd.f32 %v2445, %v3489
        %v3530 = vadd.f32 %v2447, %v3491
        %v3531 = vadd.f32 %v2450, %v3494
        %v3532 = vadd.f32 %v2452, %v3496
        %v3533 = vadd.f32 %v2455, %v3499
        %v3534 = vadd.f32 %v2457, %v3501
        %v3535 = vld [vmem:[%s1 + $0x300] sm:$0xff]
        %v3536 = vld [vmem:[%s1 + $0x308] sm:$0xff]
        %v3537 = vld [vmem:[%s1 + $0x310] sm:$0xff]
        %v3538 = vld [vmem:[%s1 + $0x318] sm:$0xff]
        %v3539 = vld [vmem:[%s1 + $0x320] sm:$0xff]
        %v3540 = vld [vmem:[%s1 + $0x328] sm:$0xff]
        %v3541 = vld [vmem:[%s1 + $0x330] sm:$0xff]
        %v3542 = vld [vmem:[%s1 + $0x338] sm:$0xff]
        %v3543 = vld [vmem:[%s1 + $0x340] sm:$0xff]
        %v3544 = vld [vmem:[%s1 + $0x348] sm:$0xff]
        %v3545 = vld [vmem:[%s1 + $0x350] sm:$0xff]
        %v3546 = vld [vmem:[%s1 + $0x358] sm:$0xff]
        %v3547 = vld [vmem:[%s1 + $0x360] sm:$0xff]
        %v3548 = vld [vmem:[%s1 + $0x368] sm:$0xff]
        %v3549 = vld [vmem:[%s1 + $0x370] sm:$0xff]
        %v3550 = vld [vmem:[%s1 + $0x378] sm:$0xff]
        %v3551 = vld [vmem:[%s1 + $0x380] sm:$0xff]
        %v3552 = vld [vmem:[%s1 + $0x388] sm:$0xff]
        %v3553 = vld [vmem:[%s1 + $0x390] sm:$0xff]
        %v3554 = vld [vmem:[%s1 + $0x398] sm:$0xff]
        %v3555 = vld [vmem:[%s1 + $0x3a0] sm:$0xff]
        %v3556 = vld [vmem:[%s1 + $0x3a8] sm:$0xff]
        %v3557 = vld [vmem:[%s1 + $0x3b0] sm:$0xff]
        %v3558 = vld [vmem:[%s1 + $0x3b8] sm:$0xff]
        %v3559 = vld [vmem:[%s1 + $0x3c0] sm:$0xff]
        %v3560 = vld [vmem:[%s1 + $0x3c8] sm:$0xff]
        %v3561 = vld [vmem:[%s1 + $0x3d0] sm:$0xff]
        %v3562 = vld [vmem:[%s1 + $0x3d8] sm:$0xff]
        %v3563 = vld [vmem:[%s1 + $0x3e0] sm:$0xff]
        %v3564 = vld [vmem:[%s1 + $0x3e8] sm:$0xff]
        %v3565 = vld [vmem:[%s1 + $0x3f0] sm:$0xff]
        %v3566 = vld [vmem:[%s1 + $0x3f8] sm:$0xff]
        %v3567 = vld [vmem:[%s2 + $0x300] sm:$0xff]
        %v3568 = vld [vmem:[%s2 + $0x308] sm:$0xff]
        %v3569 = vld [vmem:[%s2 + $0x310] sm:$0xff]
        %v3570 = vld [vmem:[%s2 + $0x318] sm:$0xff]
        %v3571 = vld [vmem:[%s2 + $0x320] sm:$0xff]
        %v3572 = vld [vmem:[%s2 + $0x328] sm:$0xff]
        %v3573 = vld [vmem:[%s2 + $0x330] sm:$0xff]
        %v3574 = vld [vmem:[%s2 + $0x338] sm:$0xff]
        %v3575 = vld [vmem:[%s2 + $0x340] sm:$0xff]
        %v3576 = vld [vmem:[%s2 + $0x348] sm:$0xff]
        %v3577 = vld [vmem:[%s2 + $0x350] sm:$0xff]
        %v3578 = vld [vmem:[%s2 + $0x358] sm:$0xff]
        %v3579 = vld [vmem:[%s2 + $0x360] sm:$0xff]
        %v3580 = vld [vmem:[%s2 + $0x368] sm:$0xff]
        %v3581 = vld [vmem:[%s2 + $0x370] sm:$0xff]
        %v3582 = vld [vmem:[%s2 + $0x378] sm:$0xff]
        %v3583 = vld [vmem:[%s2 + $0x380] sm:$0xff]
        %v3584 = vld [vmem:[%s2 + $0x388] sm:$0xff]
        %v3585 = vld [vmem:[%s2 + $0x390] sm:$0xff]
        %v3586 = vld [vmem:[%s2 + $0x398] sm:$0xff]
        %v3587 = vld [vmem:[%s2 + $0x3a0] sm:$0xff]
        %v3588 = vld [vmem:[%s2 + $0x3a8] sm:$0xff]
        %v3589 = vld [vmem:[%s2 + $0x3b0] sm:$0xff]
        %v3590 = vld [vmem:[%s2 + $0x3b8] sm:$0xff]
        %v3591 = vld [vmem:[%s2 + $0x3c0] sm:$0xff]
        %v3592 = vld [vmem:[%s2 + $0x3c8] sm:$0xff]
        %v3593 = vld [vmem:[%s2 + $0x3d0] sm:$0xff]
        %v3594 = vld [vmem:[%s2 + $0x3d8] sm:$0xff]
        %v3595 = vld [vmem:[%s2 + $0x3e0] sm:$0xff]
        %v3596 = vld [vmem:[%s2 + $0x3e8] sm:$0xff]
        %v3597 = vld [vmem:[%s2 + $0x3f0] sm:$0xff]
        %v3598 = vld [vmem:[%s2 + $0x3f8] sm:$0xff]
        %3600 = vset.pattern.permute.xlu0 0
        %3601 = vperm.xlu0 %3600, %v3567
        %v3602 = vpop.permute.xlu0 %3601
        %3605 = vset.pattern.permute.xlu0 0
        %3606 = vperm.xlu0 %3605, %v3568
        %v3607 = vpop.permute.xlu0 %3606
        %3610 = vset.pattern.permute.xlu0 0
        %3611 = vperm.xlu0 %3610, %v3569
        %v3612 = vpop.permute.xlu0 %3611
        %3615 = vset.pattern.permute.xlu0 0
        %3616 = vperm.xlu0 %3615, %v3570
        %v3617 = vpop.permute.xlu0 %3616
        %3620 = vset.pattern.permute.xlu0 0
        %3621 = vperm.xlu0 %3620, %v3571
        %v3622 = vpop.permute.xlu0 %3621
        %3625 = vset.pattern.permute.xlu0 0
        %3626 = vperm.xlu0 %3625, %v3572
        %v3627 = vpop.permute.xlu0 %3626
        %3630 = vset.pattern.permute.xlu0 0
        %3631 = vperm.xlu0 %3630, %v3573
        %v3632 = vpop.permute.xlu0 %3631
        %3635 = vset.pattern.permute.xlu0 0
        %3636 = vperm.xlu0 %3635, %v3574
        %v3637 = vpop.permute.xlu0 %3636
        %3640 = vset.pattern.permute.xlu0 0
        %3641 = vperm.xlu0 %3640, %v3575
        %v3642 = vpop.permute.xlu0 %3641
        %3645 = vset.pattern.permute.xlu0 0
        %3646 = vperm.xlu0 %3645, %v3576
        %v3647 = vpop.permute.xlu0 %3646
        %3650 = vset.pattern.permute.xlu0 0
        %3651 = vperm.xlu0 %3650, %v3577
        %v3652 = vpop.permute.xlu0 %3651
        %3655 = vset.pattern.permute.xlu0 0
        %3656 = vperm.xlu0 %3655, %v3578
        %v3657 = vpop.permute.xlu0 %3656
        %3660 = vset.pattern.permute.xlu0 0
        %3661 = vperm.xlu0 %3660, %v3579
        %v3662 = vpop.permute.xlu0 %3661
        %3665 = vset.pattern.permute.xlu0 0
        %3666 = vperm.xlu0 %3665, %v3580
        %v3667 = vpop.permute.xlu0 %3666
        %3670 = vset.pattern.permute.xlu0 0
        %3671 = vperm.xlu0 %3670, %v3581
        %v3672 = vpop.permute.xlu0 %3671
        %3675 = vset.pattern.permute.xlu0 0
        %3676 = vperm.xlu0 %3675, %v3582
        %v3677 = vpop.permute.xlu0 %3676
        %3680 = vset.pattern.permute.xlu0 0
        %3681 = vperm.xlu0 %3680, %v3583
        %v3682 = vpop.permute.xlu0 %3681
        %3685 = vset.pattern.permute.xlu0 0
        %3686 = vperm.xlu0 %3685, %v3584
        %v3687 = vpop.permute.xlu0 %3686
        %3690 = vset.pattern.permute.xlu0 0
        %3691 = vperm.xlu0 %3690, %v3585
        %v3692 = vpop.permute.xlu0 %3691
        %3695 = vset.pattern.permute.xlu0 0
        %3696 = vperm.xlu0 %3695, %v3586
        %v3697 = vpop.permute.xlu0 %3696
        %3700 = vset.pattern.permute.xlu0 0
        %3701 = vperm.xlu0 %3700, %v3587
        %v3702 = vpop.permute.xlu0 %3701
        %3705 = vset.pattern.permute.xlu0 0
        %3706 = vperm.xlu0 %3705, %v3588
        %v3707 = vpop.permute.xlu0 %3706
        %3710 = vset.pattern.permute.xlu0 0
        %3711 = vperm.xlu0 %3710, %v3589
        %v3712 = vpop.permute.xlu0 %3711
        %3715 = vset.pattern.permute.xlu0 0
        %3716 = vperm.xlu0 %3715, %v3590
        %v3717 = vpop.permute.xlu0 %3716
        %3720 = vset.pattern.permute.xlu0 0
        %3721 = vperm.xlu0 %3720, %v3591
        %v3722 = vpop.permute.xlu0 %3721
        %3725 = vset.pattern.permute.xlu0 0
        %3726 = vperm.xlu0 %3725, %v3592
        %v3727 = vpop.permute.xlu0 %3726
        %3730 = vset.pattern.permute.xlu0 0
        %3731 = vperm.xlu0 %3730, %v3593
        %v3732 = vpop.permute.xlu0 %3731
        %3735 = vset.pattern.permute.xlu0 0
        %3736 = vperm.xlu0 %3735, %v3594
        %v3737 = vpop.permute.xlu0 %3736
        %3740 = vset.pattern.permute.xlu0 0
        %3741 = vperm.xlu0 %3740, %v3595
        %v3742 = vpop.permute.xlu0 %3741
        %3745 = vset.pattern.permute.xlu0 0
        %3746 = vperm.xlu0 %3745, %v3596
        %v3747 = vpop.permute.xlu0 %3746
        %3750 = vset.pattern.permute.xlu0 0
        %3751 = vperm.xlu0 %3750, %v3597
        %v3752 = vpop.permute.xlu0 %3751
        %3755 = vset.pattern.permute.xlu0 0
        %3756 = vperm.xlu0 %3755, %v3598
        %v3757 = vpop.permute.xlu0 %3756
        %v3791 = vunpack.c.l.b16 %v3535
        %v3792 = vunpack.c.h.b16 %v3535
        %v3793 = vunpack.c.l.b16 %v3536
        %v3794 = vunpack.c.h.b16 %v3536
        %v3795 = vunpack.c.l.b16 %v3537
        %v3796 = vunpack.c.h.b16 %v3537
        %v3797 = vunpack.c.l.b16 %v3538
        %v3798 = vunpack.c.h.b16 %v3538
        %v3799 = vunpack.c.l.b16 %v3539
        %v3800 = vunpack.c.h.b16 %v3539
        %v3801 = vunpack.c.l.b16 %v3540
        %v3802 = vunpack.c.h.b16 %v3540
        %v3803 = vunpack.c.l.b16 %v3541
        %v3804 = vunpack.c.h.b16 %v3541
        %v3805 = vunpack.c.l.b16 %v3542
        %v3806 = vunpack.c.h.b16 %v3542
        %v3807 = vunpack.c.l.b16 %v3543
        %v3808 = vunpack.c.h.b16 %v3543
        %v3809 = vunpack.c.l.b16 %v3544
        %v3810 = vunpack.c.h.b16 %v3544
        %v3811 = vunpack.c.l.b16 %v3545
        %v3812 = vunpack.c.h.b16 %v3545
        %v3813 = vunpack.c.l.b16 %v3546
        %v3814 = vunpack.c.h.b16 %v3546
        %v3815 = vunpack.c.l.b16 %v3547
        %v3816 = vunpack.c.h.b16 %v3547
        %v3817 = vunpack.c.l.b16 %v3548
        %v3818 = vunpack.c.h.b16 %v3548
        %v3819 = vunpack.c.l.b16 %v3549
        %v3820 = vunpack.c.h.b16 %v3549
        %v3821 = vunpack.c.l.b16 %v3550
        %v3822 = vunpack.c.h.b16 %v3550
        %v3823 = vunpack.c.l.b16 %v3551
        %v3824 = vunpack.c.h.b16 %v3551
        %v3825 = vunpack.c.l.b16 %v3552
        %v3826 = vunpack.c.h.b16 %v3552
        %v3827 = vunpack.c.l.b16 %v3553
        %v3828 = vunpack.c.h.b16 %v3553
        %v3829 = vunpack.c.l.b16 %v3554
        %v3830 = vunpack.c.h.b16 %v3554
        %v3831 = vunpack.c.l.b16 %v3555
        %v3832 = vunpack.c.h.b16 %v3555
        %v3833 = vunpack.c.l.b16 %v3556
        %v3834 = vunpack.c.h.b16 %v3556
        %v3835 = vunpack.c.l.b16 %v3557
        %v3836 = vunpack.c.h.b16 %v3557
        %v3837 = vunpack.c.l.b16 %v3558
        %v3838 = vunpack.c.h.b16 %v3558
        %v3839 = vunpack.c.l.b16 %v3559
        %v3840 = vunpack.c.h.b16 %v3559
        %v3841 = vunpack.c.l.b16 %v3560
        %v3842 = vunpack.c.h.b16 %v3560
        %v3843 = vunpack.c.l.b16 %v3561
        %v3844 = vunpack.c.h.b16 %v3561
        %v3845 = vunpack.c.l.b16 %v3562
        %v3846 = vunpack.c.h.b16 %v3562
        %v3847 = vunpack.c.l.b16 %v3563
        %v3848 = vunpack.c.h.b16 %v3563
        %v3849 = vunpack.c.l.b16 %v3564
        %v3850 = vunpack.c.h.b16 %v3564
        %v3851 = vunpack.c.l.b16 %v3565
        %v3852 = vunpack.c.h.b16 %v3565
        %v3853 = vunpack.c.l.b16 %v3566
        %v3854 = vunpack.c.h.b16 %v3566
        %v3855 = vpack.c.b16 %v3793, %v3791
        %v3856 = vpack.c.b16 %v3794, %v3792
        %v3857 = vpack.c.b16 %v3797, %v3795
        %v3858 = vpack.c.b16 %v3798, %v3796
        %v3859 = vpack.c.b16 %v3801, %v3799
        %v3860 = vpack.c.b16 %v3802, %v3800
        %v3861 = vpack.c.b16 %v3805, %v3803
        %v3862 = vpack.c.b16 %v3806, %v3804
        %v3863 = vpack.c.b16 %v3809, %v3807
        %v3864 = vpack.c.b16 %v3810, %v3808
        %v3865 = vpack.c.b16 %v3813, %v3811
        %v3866 = vpack.c.b16 %v3814, %v3812
        %v3867 = vpack.c.b16 %v3817, %v3815
        %v3868 = vpack.c.b16 %v3818, %v3816
        %v3869 = vpack.c.b16 %v3821, %v3819
        %v3870 = vpack.c.b16 %v3822, %v3820
        %v3871 = vpack.c.b16 %v3825, %v3823
        %v3872 = vpack.c.b16 %v3826, %v3824
        %v3873 = vpack.c.b16 %v3829, %v3827
        %v3874 = vpack.c.b16 %v3830, %v3828
        %v3875 = vpack.c.b16 %v3833, %v3831
        %v3876 = vpack.c.b16 %v3834, %v3832
        %v3877 = vpack.c.b16 %v3837, %v3835
        %v3878 = vpack.c.b16 %v3838, %v3836
        %v3879 = vpack.c.b16 %v3841, %v3839
        %v3880 = vpack.c.b16 %v3842, %v3840
        %v3881 = vpack.c.b16 %v3845, %v3843
        %v3882 = vpack.c.b16 %v3846, %v3844
        %v3883 = vpack.c.b16 %v3849, %v3847
        %v3884 = vpack.c.b16 %v3850, %v3848
        %v3885 = vpack.c.b16 %v3853, %v3851
        %v3886 = vpack.c.b16 %v3854, %v3852
        %3919 = vmatpush.bf16.msra.mxu0 %v362
        %3920 = vmatpush.bf16.msra.mxu0 %v361
        %3921 = vmatpush.bf16.msra.mxu0 %v360
        %3922 = vmatpush.bf16.msra.mxu0 %v359
        %3923 = vmatpush.bf16.msra.mxu0 %v358
        %3924 = vmatpush.bf16.msra.mxu0 %v357
        %3925 = vmatpush.bf16.msra.mxu0 %v356
        %3926 = vmatpush.bf16.msra.mxu0 %v355
        %3927 = vmatmul.bf16.gmra.mxu0 %v3855
        %v3928 = vpop.f32.mrf.mxu0
        %v3929 = vadd.f32 %v3602, %v3928
        %v3930 = vpop.f32.mrf.mxu0
        %v3931 = vadd.f32 %v3607, %v3930
        %3932 = vmatmul.bf16.gmra.mxu0 %v3857
        %v3933 = vpop.f32.mrf.mxu0
        %v3934 = vadd.f32 %v3612, %v3933
        %v3935 = vpop.f32.mrf.mxu0
        %v3936 = vadd.f32 %v3617, %v3935
        %3937 = vmatmul.bf16.gmra.mxu0 %v3859
        %v3938 = vpop.f32.mrf.mxu0
        %v3939 = vadd.f32 %v3622, %v3938
        %v3940 = vpop.f32.mrf.mxu0
        %v3941 = vadd.f32 %v3627, %v3940
        %3942 = vmatmul.bf16.gmra.mxu0 %v3861
        %v3943 = vpop.f32.mrf.mxu0
        %v3944 = vadd.f32 %v3632, %v3943
        %v3945 = vpop.f32.mrf.mxu0
        %v3946 = vadd.f32 %v3637, %v3945
        %3947 = vmatmul.bf16.gmra.mxu0 %v3863
        %v3948 = vpop.f32.mrf.mxu0
        %v3949 = vadd.f32 %v3642, %v3948
        %v3950 = vpop.f32.mrf.mxu0
        %v3951 = vadd.f32 %v3647, %v3950
        %3952 = vmatmul.bf16.gmra.mxu0 %v3865
        %v3953 = vpop.f32.mrf.mxu0
        %v3954 = vadd.f32 %v3652, %v3953
        %v3955 = vpop.f32.mrf.mxu0
        %v3956 = vadd.f32 %v3657, %v3955
        %3957 = vmatmul.bf16.gmra.mxu0 %v3867
        %v3958 = vpop.f32.mrf.mxu0
        %v3959 = vadd.f32 %v3662, %v3958
        %v3960 = vpop.f32.mrf.mxu0
        %v3961 = vadd.f32 %v3667, %v3960
        %3962 = vmatmul.bf16.gmra.mxu0 %v3869
        %v3963 = vpop.f32.mrf.mxu0
        %v3964 = vadd.f32 %v3672, %v3963
        %v3965 = vpop.f32.mrf.mxu0
        %v3966 = vadd.f32 %v3677, %v3965
        %3967 = vmatmul.bf16.gmra.mxu0 %v3871
        %v3968 = vpop.f32.mrf.mxu0
        %v3969 = vadd.f32 %v3682, %v3968
        %v3970 = vpop.f32.mrf.mxu0
        %v3971 = vadd.f32 %v3687, %v3970
        %3972 = vmatmul.bf16.gmra.mxu0 %v3873
        %v3973 = vpop.f32.mrf.mxu0
        %v3974 = vadd.f32 %v3692, %v3973
        %v3975 = vpop.f32.mrf.mxu0
        %v3976 = vadd.f32 %v3697, %v3975
        %3977 = vmatmul.bf16.gmra.mxu0 %v3875
        %v3978 = vpop.f32.mrf.mxu0
        %v3979 = vadd.f32 %v3702, %v3978
        %v3980 = vpop.f32.mrf.mxu0
        %v3981 = vadd.f32 %v3707, %v3980
        %3982 = vmatmul.bf16.gmra.mxu0 %v3877
        %v3983 = vpop.f32.mrf.mxu0
        %v3984 = vadd.f32 %v3712, %v3983
        %v3985 = vpop.f32.mrf.mxu0
        %v3986 = vadd.f32 %v3717, %v3985
        %3987 = vmatmul.bf16.gmra.mxu0 %v3879
        %v3988 = vpop.f32.mrf.mxu0
        %v3989 = vadd.f32 %v3722, %v3988
        %v3990 = vpop.f32.mrf.mxu0
        %v3991 = vadd.f32 %v3727, %v3990
        %3992 = vmatmul.bf16.gmra.mxu0 %v3881
        %v3993 = vpop.f32.mrf.mxu0
        %v3994 = vadd.f32 %v3732, %v3993
        %v3995 = vpop.f32.mrf.mxu0
        %v3996 = vadd.f32 %v3737, %v3995
        %3997 = vmatmul.bf16.gmra.mxu0 %v3883
        %v3998 = vpop.f32.mrf.mxu0
        %v3999 = vadd.f32 %v3742, %v3998
        %v4000 = vpop.f32.mrf.mxu0
        %v4001 = vadd.f32 %v3747, %v4000
        %4002 = vmatmul.bf16.gmra.mxu0 %v3885
        %v4003 = vpop.f32.mrf.mxu0
        %v4004 = vadd.f32 %v3752, %v4003
        %v4005 = vpop.f32.mrf.mxu0
        %v4006 = vadd.f32 %v3757, %v4005
        %4007 = vdwg.mxu0
        %4008 = vmatpush.bf16.msra.mxu0 %v370
        %4009 = vmatpush.bf16.msra.mxu0 %v369
        %4010 = vmatpush.bf16.msra.mxu0 %v368
        %4011 = vmatpush.bf16.msra.mxu0 %v367
        %4012 = vmatpush.bf16.msra.mxu0 %v366
        %4013 = vmatpush.bf16.msra.mxu0 %v365
        %4014 = vmatpush.bf16.msra.mxu0 %v364
        %4015 = vmatpush.bf16.msra.mxu0 %v363
        %4016 = vmatmul.bf16.gmra.mxu0 %v3856
        %v4017 = vpop.f32.mrf.mxu0
        %v4018 = vadd.f32 %v3929, %v4017
        %v4019 = vpop.f32.mrf.mxu0
        %v4020 = vadd.f32 %v3931, %v4019
        %4021 = vmatmul.bf16.gmra.mxu0 %v3858
        %v4022 = vpop.f32.mrf.mxu0
        %v4023 = vadd.f32 %v3934, %v4022
        %v4024 = vpop.f32.mrf.mxu0
        %v4025 = vadd.f32 %v3936, %v4024
        %4026 = vmatmul.bf16.gmra.mxu0 %v3860
        %v4027 = vpop.f32.mrf.mxu0
        %v4028 = vadd.f32 %v3939, %v4027
        %v4029 = vpop.f32.mrf.mxu0
        %v4030 = vadd.f32 %v3941, %v4029
        %4031 = vmatmul.bf16.gmra.mxu0 %v3862
        %v4032 = vpop.f32.mrf.mxu0
        %v4033 = vadd.f32 %v3944, %v4032
        %v4034 = vpop.f32.mrf.mxu0
        %v4035 = vadd.f32 %v3946, %v4034
        %4036 = vmatmul.bf16.gmra.mxu0 %v3864
        %v4037 = vpop.f32.mrf.mxu0
        %v4038 = vadd.f32 %v3949, %v4037
        %v4039 = vpop.f32.mrf.mxu0
        %v4040 = vadd.f32 %v3951, %v4039
        %4041 = vmatmul.bf16.gmra.mxu0 %v3866
        %v4042 = vpop.f32.mrf.mxu0
        %v4043 = vadd.f32 %v3954, %v4042
        %v4044 = vpop.f32.mrf.mxu0
        %v4045 = vadd.f32 %v3956, %v4044
        %4046 = vmatmul.bf16.gmra.mxu0 %v3868
        %v4047 = vpop.f32.mrf.mxu0
        %v4048 = vadd.f32 %v3959, %v4047
        %v4049 = vpop.f32.mrf.mxu0
        %v4050 = vadd.f32 %v3961, %v4049
        %4051 = vmatmul.bf16.gmra.mxu0 %v3870
        %v4052 = vpop.f32.mrf.mxu0
        %v4053 = vadd.f32 %v3964, %v4052
        %v4054 = vpop.f32.mrf.mxu0
        %v4055 = vadd.f32 %v3966, %v4054
        %4056 = vmatmul.bf16.gmra.mxu0 %v3872
        %v4057 = vpop.f32.mrf.mxu0
        %v4058 = vadd.f32 %v3969, %v4057
        %v4059 = vpop.f32.mrf.mxu0
        %v4060 = vadd.f32 %v3971, %v4059
        %4061 = vmatmul.bf16.gmra.mxu0 %v3874
        %v4062 = vpop.f32.mrf.mxu0
        %v4063 = vadd.f32 %v3974, %v4062
        %v4064 = vpop.f32.mrf.mxu0
        %v4065 = vadd.f32 %v3976, %v4064
        %4066 = vmatmul.bf16.gmra.mxu0 %v3876
        %v4067 = vpop.f32.mrf.mxu0
        %v4068 = vadd.f32 %v3979, %v4067
        %v4069 = vpop.f32.mrf.mxu0
        %v4070 = vadd.f32 %v3981, %v4069
        %4071 = vmatmul.bf16.gmra.mxu0 %v3878
        %v4072 = vpop.f32.mrf.mxu0
        %v4073 = vadd.f32 %v3984, %v4072
        %v4074 = vpop.f32.mrf.mxu0
        %v4075 = vadd.f32 %v3986, %v4074
        %4076 = vmatmul.bf16.gmra.mxu0 %v3880
        %v4077 = vpop.f32.mrf.mxu0
        %v4078 = vadd.f32 %v3989, %v4077
        %v4079 = vpop.f32.mrf.mxu0
        %v4080 = vadd.f32 %v3991, %v4079
        %4081 = vmatmul.bf16.gmra.mxu0 %v3882
        %v4082 = vpop.f32.mrf.mxu0
        %v4083 = vadd.f32 %v3994, %v4082
        %v4084 = vpop.f32.mrf.mxu0
        %v4085 = vadd.f32 %v3996, %v4084
        %4086 = vmatmul.bf16.gmra.mxu0 %v3884
        %v4087 = vpop.f32.mrf.mxu0
        %v4088 = vadd.f32 %v3999, %v4087
        %v4089 = vpop.f32.mrf.mxu0
        %v4090 = vadd.f32 %v4001, %v4089
        %4091 = vmatmul.bf16.gmra.mxu0 %v3886
        %v4092 = vpop.f32.mrf.mxu0
        %v4093 = vadd.f32 %v4004, %v4092
        %v4094 = vpop.f32.mrf.mxu0
        %v4095 = vadd.f32 %v4006, %v4094
        %4096 = vdwg.mxu0
        %v4097 = vld [vmem:[%s285 + $0x300] sm:$0xff]
        %v4098 = vld [vmem:[%s285 + $0x308] sm:$0xff]
        %v4099 = vld [vmem:[%s285 + $0x310] sm:$0xff]
        %v4100 = vld [vmem:[%s285 + $0x318] sm:$0xff]
        %v4101 = vld [vmem:[%s285 + $0x320] sm:$0xff]
        %v4102 = vld [vmem:[%s285 + $0x328] sm:$0xff]
        %v4103 = vld [vmem:[%s285 + $0x330] sm:$0xff]
        %v4104 = vld [vmem:[%s285 + $0x338] sm:$0xff]
        %v4105 = vld [vmem:[%s285 + $0x340] sm:$0xff]
        %v4106 = vld [vmem:[%s285 + $0x348] sm:$0xff]
        %v4107 = vld [vmem:[%s285 + $0x350] sm:$0xff]
        %v4108 = vld [vmem:[%s285 + $0x358] sm:$0xff]
        %v4109 = vld [vmem:[%s285 + $0x360] sm:$0xff]
        %v4110 = vld [vmem:[%s285 + $0x368] sm:$0xff]
        %v4111 = vld [vmem:[%s285 + $0x370] sm:$0xff]
        %v4112 = vld [vmem:[%s285 + $0x378] sm:$0xff]
        %v4113 = vld [vmem:[%s285 + $0x380] sm:$0xff]
        %v4114 = vld [vmem:[%s285 + $0x388] sm:$0xff]
        %v4115 = vld [vmem:[%s285 + $0x390] sm:$0xff]
        %v4116 = vld [vmem:[%s285 + $0x398] sm:$0xff]
        %v4117 = vld [vmem:[%s285 + $0x3a0] sm:$0xff]
        %v4118 = vld [vmem:[%s285 + $0x3a8] sm:$0xff]
        %v4119 = vld [vmem:[%s285 + $0x3b0] sm:$0xff]
        %v4120 = vld [vmem:[%s285 + $0x3b8] sm:$0xff]
        %v4121 = vld [vmem:[%s285 + $0x3c0] sm:$0xff]
        %v4122 = vld [vmem:[%s285 + $0x3c8] sm:$0xff]
        %v4123 = vld [vmem:[%s285 + $0x3d0] sm:$0xff]
        %v4124 = vld [vmem:[%s285 + $0x3d8] sm:$0xff]
        %v4125 = vld [vmem:[%s285 + $0x3e0] sm:$0xff]
        %v4126 = vld [vmem:[%s285 + $0x3e8] sm:$0xff]
        %v4127 = vld [vmem:[%s285 + $0x3f0] sm:$0xff]
        %v4128 = vld [vmem:[%s285 + $0x3f8] sm:$0xff]
        %v4129 = vadd.f32 %v4018, %v4097
        %v4130 = vadd.f32 %v4020, %v4098
        %v4131 = vadd.f32 %v4023, %v4099
        %v4132 = vadd.f32 %v4025, %v4100
        %v4133 = vadd.f32 %v4028, %v4101
        %v4134 = vadd.f32 %v4030, %v4102
        %v4135 = vadd.f32 %v4033, %v4103
        %v4136 = vadd.f32 %v4035, %v4104
        %v4137 = vadd.f32 %v4038, %v4105
        %v4138 = vadd.f32 %v4040, %v4106
        %v4139 = vadd.f32 %v4043, %v4107
        %v4140 = vadd.f32 %v4045, %v4108
        %v4141 = vadd.f32 %v4048, %v4109
        %v4142 = vadd.f32 %v4050, %v4110
        %v4143 = vadd.f32 %v4053, %v4111
        %v4144 = vadd.f32 %v4055, %v4112
        %v4145 = vadd.f32 %v4058, %v4113
        %v4146 = vadd.f32 %v4060, %v4114
        %v4147 = vadd.f32 %v4063, %v4115
        %v4148 = vadd.f32 %v4065, %v4116
        %v4149 = vadd.f32 %v4068, %v4117
        %v4150 = vadd.f32 %v4070, %v4118
        %v4151 = vadd.f32 %v4073, %v4119
        %v4152 = vadd.f32 %v4075, %v4120
        %v4153 = vadd.f32 %v4078, %v4121
        %v4154 = vadd.f32 %v4080, %v4122
        %v4155 = vadd.f32 %v4083, %v4123
        %v4156 = vadd.f32 %v4085, %v4124
        %v4157 = vadd.f32 %v4088, %v4125
        %v4158 = vadd.f32 %v4090, %v4126
        %v4159 = vadd.f32 %v4093, %v4127
        %v4160 = vadd.f32 %v4095, %v4128
        %v4161 = vmax.f32 %v4129, 0.0
        %v4162 = vmax.f32 %v4130, 0.0
        %v4163 = vmax.f32 %v4131, 0.0
        %v4164 = vmax.f32 %v4132, 0.0
        %v4165 = vmax.f32 %v4133, 0.0
        %v4166 = vmax.f32 %v4134, 0.0
        %v4167 = vmax.f32 %v4135, 0.0
        %v4168 = vmax.f32 %v4136, 0.0
        %v4169 = vmax.f32 %v4137, 0.0
        %v4170 = vmax.f32 %v4138, 0.0
        %v4171 = vmax.f32 %v4139, 0.0
        %v4172 = vmax.f32 %v4140, 0.0
        %v4173 = vmax.f32 %v4141, 0.0
        %v4174 = vmax.f32 %v4142, 0.0
        %v4175 = vmax.f32 %v4143, 0.0
        %v4176 = vmax.f32 %v4144, 0.0
        %v4177 = vmax.f32 %v4145, 0.0
        %v4178 = vmax.f32 %v4146, 0.0
        %v4179 = vmax.f32 %v4147, 0.0
        %v4180 = vmax.f32 %v4148, 0.0
        %v4181 = vmax.f32 %v4149, 0.0
        %v4182 = vmax.f32 %v4150, 0.0
        %v4183 = vmax.f32 %v4151, 0.0
        %v4184 = vmax.f32 %v4152, 0.0
        %v4185 = vmax.f32 %v4153, 0.0
        %v4186 = vmax.f32 %v4154, 0.0
        %v4187 = vmax.f32 %v4155, 0.0
        %v4188 = vmax.f32 %v4156, 0.0
        %v4189 = vmax.f32 %v4157, 0.0
        %v4190 = vmax.f32 %v4158, 0.0
        %v4191 = vmax.f32 %v4159, 0.0
        %v4192 = vmax.f32 %v4160, 0.0
        %v4193 = vld [vmem:[#allocation7 + $0x18] sm:$0xff]
        %v4194 = vld [vmem:[#allocation7 + $0x38] sm:$0xff]
        %v4195 = vld [vmem:[#allocation7 + $0x58] sm:$0xff]
        %v4196 = vld [vmem:[#allocation7 + $0x78] sm:$0xff]
        %v4197 = vld [vmem:[#allocation7 + $0x98] sm:$0xff]
        %v4198 = vld [vmem:[#allocation7 + $0xb8] sm:$0xff]
        %v4199 = vld [vmem:[#allocation7 + $0xd8] sm:$0xff]
        %v4200 = vld [vmem:[#allocation7 + $0xf8] sm:$0xff]
        %v4201 = vld [vmem:[#allocation7 + $0x118] sm:$0xff]
        %v4202 = vld [vmem:[#allocation7 + $0x138] sm:$0xff]
        %v4203 = vld [vmem:[#allocation7 + $0x158] sm:$0xff]
        %v4204 = vld [vmem:[#allocation7 + $0x178] sm:$0xff]
        %v4205 = vld [vmem:[#allocation7 + $0x198] sm:$0xff]
        %v4206 = vld [vmem:[#allocation7 + $0x1b8] sm:$0xff]
        %v4207 = vld [vmem:[#allocation7 + $0x1d8] sm:$0xff]
        %v4208 = vld [vmem:[#allocation7 + $0x1f8] sm:$0xff]
        %v4209 = vld [vmem:[#allocation7 + $0x218] sm:$0xff]
        %v4210 = vld [vmem:[#allocation7 + $0x238] sm:$0xff]
        %v4211 = vld [vmem:[#allocation7 + $0x258] sm:$0xff]
        %v4212 = vld [vmem:[#allocation7 + $0x278] sm:$0xff]
        %v4213 = vld [vmem:[#allocation7 + $0x298] sm:$0xff]
        %v4214 = vld [vmem:[#allocation7 + $0x2b8] sm:$0xff]
        %v4215 = vld [vmem:[#allocation7 + $0x2d8] sm:$0xff]
        %v4216 = vld [vmem:[#allocation7 + $0x2f8] sm:$0xff]
        %v4217 = vld [vmem:[#allocation7 + $0x318] sm:$0xff]
        %v4218 = vld [vmem:[#allocation7 + $0x338] sm:$0xff]
        %v4219 = vld [vmem:[#allocation7 + $0x358] sm:$0xff]
        %v4220 = vld [vmem:[#allocation7 + $0x378] sm:$0xff]
        %v4221 = vld [vmem:[#allocation7 + $0x398] sm:$0xff]
        %v4222 = vld [vmem:[#allocation7 + $0x3b8] sm:$0xff]
        %v4223 = vld [vmem:[#allocation7 + $0x3d8] sm:$0xff]
        %v4224 = vld [vmem:[#allocation7 + $0x3f8] sm:$0xff]
        %v4225 = vpack.c.bf16 %v4162, %v4161
        %v4226 = vpack.c.bf16 %v4164, %v4163
        %v4227 = vpack.c.bf16 %v4166, %v4165
        %v4228 = vpack.c.bf16 %v4168, %v4167
        %v4229 = vpack.c.bf16 %v4170, %v4169
        %v4230 = vpack.c.bf16 %v4172, %v4171
        %v4231 = vpack.c.bf16 %v4174, %v4173
        %v4232 = vpack.c.bf16 %v4176, %v4175
        %v4233 = vpack.c.bf16 %v4178, %v4177
        %v4234 = vpack.c.bf16 %v4180, %v4179
        %v4235 = vpack.c.bf16 %v4182, %v4181
        %v4236 = vpack.c.bf16 %v4184, %v4183
        %v4237 = vpack.c.bf16 %v4186, %v4185
        %v4238 = vpack.c.bf16 %v4188, %v4187
        %v4239 = vpack.c.bf16 %v4190, %v4189
        %v4240 = vpack.c.bf16 %v4192, %v4191
        %v4273 = vunpack.c.l.b16 %v4193
        %v4274 = vunpack.c.h.b16 %v4193
        %v4275 = vunpack.c.l.b16 %v4194
        %v4276 = vunpack.c.h.b16 %v4194
        %v4277 = vunpack.c.l.b16 %v4195
        %v4278 = vunpack.c.h.b16 %v4195
        %v4279 = vunpack.c.l.b16 %v4196
        %v4280 = vunpack.c.h.b16 %v4196
        %v4281 = vunpack.c.l.b16 %v4197
        %v4282 = vunpack.c.h.b16 %v4197
        %v4283 = vunpack.c.l.b16 %v4198
        %v4284 = vunpack.c.h.b16 %v4198
        %v4285 = vunpack.c.l.b16 %v4199
        %v4286 = vunpack.c.h.b16 %v4199
        %v4287 = vunpack.c.l.b16 %v4200
        %v4288 = vunpack.c.h.b16 %v4200
        %v4289 = vunpack.c.l.b16 %v4201
        %v4290 = vunpack.c.h.b16 %v4201
        %v4291 = vunpack.c.l.b16 %v4202
        %v4292 = vunpack.c.h.b16 %v4202
        %v4293 = vunpack.c.l.b16 %v4203
        %v4294 = vunpack.c.h.b16 %v4203
        %v4295 = vunpack.c.l.b16 %v4204
        %v4296 = vunpack.c.h.b16 %v4204
        %v4297 = vunpack.c.l.b16 %v4205
        %v4298 = vunpack.c.h.b16 %v4205
        %v4299 = vunpack.c.l.b16 %v4206
        %v4300 = vunpack.c.h.b16 %v4206
        %v4301 = vunpack.c.l.b16 %v4207
        %v4302 = vunpack.c.h.b16 %v4207
        %v4303 = vunpack.c.l.b16 %v4208
        %v4304 = vunpack.c.h.b16 %v4208
        %v4305 = vunpack.c.l.b16 %v4209
        %v4306 = vunpack.c.h.b16 %v4209
        %v4307 = vunpack.c.l.b16 %v4210
        %v4308 = vunpack.c.h.b16 %v4210
        %v4309 = vunpack.c.l.b16 %v4211
        %v4310 = vunpack.c.h.b16 %v4211
        %v4311 = vunpack.c.l.b16 %v4212
        %v4312 = vunpack.c.h.b16 %v4212
        %v4313 = vunpack.c.l.b16 %v4213
        %v4314 = vunpack.c.h.b16 %v4213
        %v4315 = vunpack.c.l.b16 %v4214
        %v4316 = vunpack.c.h.b16 %v4214
        %v4317 = vunpack.c.l.b16 %v4215
        %v4318 = vunpack.c.h.b16 %v4215
        %v4319 = vunpack.c.l.b16 %v4216
        %v4320 = vunpack.c.h.b16 %v4216
        %v4321 = vunpack.c.l.b16 %v4217
        %v4322 = vunpack.c.h.b16 %v4217
        %v4323 = vunpack.c.l.b16 %v4218
        %v4324 = vunpack.c.h.b16 %v4218
        %v4325 = vunpack.c.l.b16 %v4219
        %v4326 = vunpack.c.h.b16 %v4219
        %v4327 = vunpack.c.l.b16 %v4220
        %v4328 = vunpack.c.h.b16 %v4220
        %v4329 = vunpack.c.l.b16 %v4221
        %v4330 = vunpack.c.h.b16 %v4221
        %v4331 = vunpack.c.l.b16 %v4222
        %v4332 = vunpack.c.h.b16 %v4222
        %v4333 = vunpack.c.l.b16 %v4223
        %v4334 = vunpack.c.h.b16 %v4223
        %v4335 = vunpack.c.l.b16 %v4224
        %v4336 = vunpack.c.h.b16 %v4224
        %v4337 = vpack.c.b16 %v4275, %v4273
        %v4338 = vpack.c.b16 %v4276, %v4274
        %v4339 = vpack.c.b16 %v4279, %v4277
        %v4340 = vpack.c.b16 %v4280, %v4278
        %v4341 = vpack.c.b16 %v4283, %v4281
        %v4342 = vpack.c.b16 %v4284, %v4282
        %v4343 = vpack.c.b16 %v4287, %v4285
        %v4344 = vpack.c.b16 %v4288, %v4286
        %v4345 = vpack.c.b16 %v4291, %v4289
        %v4346 = vpack.c.b16 %v4292, %v4290
        %v4347 = vpack.c.b16 %v4295, %v4293
        %v4348 = vpack.c.b16 %v4296, %v4294
        %v4349 = vpack.c.b16 %v4299, %v4297
        %v4350 = vpack.c.b16 %v4300, %v4298
        %v4351 = vpack.c.b16 %v4303, %v4301
        %v4352 = vpack.c.b16 %v4304, %v4302
        %v4353 = vpack.c.b16 %v4307, %v4305
        %v4354 = vpack.c.b16 %v4308, %v4306
        %v4355 = vpack.c.b16 %v4311, %v4309
        %v4356 = vpack.c.b16 %v4312, %v4310
        %v4357 = vpack.c.b16 %v4315, %v4313
        %v4358 = vpack.c.b16 %v4316, %v4314
        %v4359 = vpack.c.b16 %v4319, %v4317
        %v4360 = vpack.c.b16 %v4320, %v4318
        %v4361 = vpack.c.b16 %v4323, %v4321
        %v4362 = vpack.c.b16 %v4324, %v4322
        %v4363 = vpack.c.b16 %v4327, %v4325
        %v4364 = vpack.c.b16 %v4328, %v4326
        %v4365 = vpack.c.b16 %v4331, %v4329
        %v4366 = vpack.c.b16 %v4332, %v4330
        %v4367 = vpack.c.b16 %v4335, %v4333
        %v4368 = vpack.c.b16 %v4336, %v4334
        %4401 = vmatpush.bf16.msra.mxu0 %v4232
        %4402 = vmatpush.bf16.msra.mxu0 %v4231
        %4403 = vmatpush.bf16.msra.mxu0 %v4230
        %4404 = vmatpush.bf16.msra.mxu0 %v4229
        %4405 = vmatpush.bf16.msra.mxu0 %v4228
        %4406 = vmatpush.bf16.msra.mxu0 %v4227
        %4407 = vmatpush.bf16.msra.mxu0 %v4226
        %4408 = vmatpush.bf16.msra.mxu0 %v4225
        %4409 = vmatmul.bf16.gmra.mxu0 %v4337
        %v4410 = vpop.f32.mrf.mxu0
        %v4411 = vadd.f32 0.0, %v4410
        %v4412 = vpop.f32.mrf.mxu0
        %v4413 = vadd.f32 0.0, %v4412
        %4414 = vmatmul.bf16.gmra.mxu0 %v4339
        %v4415 = vpop.f32.mrf.mxu0
        %v4416 = vadd.f32 0.0, %v4415
        %v4417 = vpop.f32.mrf.mxu0
        %v4418 = vadd.f32 0.0, %v4417
        %4419 = vmatmul.bf16.gmra.mxu0 %v4341
        %v4420 = vpop.f32.mrf.mxu0
        %v4421 = vadd.f32 0.0, %v4420
        %v4422 = vpop.f32.mrf.mxu0
        %v4423 = vadd.f32 0.0, %v4422
        %4424 = vmatmul.bf16.gmra.mxu0 %v4343
        %v4425 = vpop.f32.mrf.mxu0
        %v4426 = vadd.f32 0.0, %v4425
        %v4427 = vpop.f32.mrf.mxu0
        %v4428 = vadd.f32 0.0, %v4427
        %4429 = vmatmul.bf16.gmra.mxu0 %v4345
        %v4430 = vpop.f32.mrf.mxu0
        %v4431 = vadd.f32 0.0, %v4430
        %v4432 = vpop.f32.mrf.mxu0
        %v4433 = vadd.f32 0.0, %v4432
        %4434 = vmatmul.bf16.gmra.mxu0 %v4347
        %v4435 = vpop.f32.mrf.mxu0
        %v4436 = vadd.f32 0.0, %v4435
        %v4437 = vpop.f32.mrf.mxu0
        %v4438 = vadd.f32 0.0, %v4437
        %4439 = vmatmul.bf16.gmra.mxu0 %v4349
        %v4440 = vpop.f32.mrf.mxu0
        %v4441 = vadd.f32 0.0, %v4440
        %v4442 = vpop.f32.mrf.mxu0
        %v4443 = vadd.f32 0.0, %v4442
        %4444 = vmatmul.bf16.gmra.mxu0 %v4351
        %v4445 = vpop.f32.mrf.mxu0
        %v4446 = vadd.f32 0.0, %v4445
        %v4447 = vpop.f32.mrf.mxu0
        %v4448 = vadd.f32 0.0, %v4447
        %4449 = vmatmul.bf16.gmra.mxu0 %v4353
        %v4450 = vpop.f32.mrf.mxu0
        %v4451 = vadd.f32 0.0, %v4450
        %v4452 = vpop.f32.mrf.mxu0
        %v4453 = vadd.f32 0.0, %v4452
        %4454 = vmatmul.bf16.gmra.mxu0 %v4355
        %v4455 = vpop.f32.mrf.mxu0
        %v4456 = vadd.f32 0.0, %v4455
        %v4457 = vpop.f32.mrf.mxu0
        %v4458 = vadd.f32 0.0, %v4457
        %4459 = vmatmul.bf16.gmra.mxu0 %v4357
        %v4460 = vpop.f32.mrf.mxu0
        %v4461 = vadd.f32 0.0, %v4460
        %v4462 = vpop.f32.mrf.mxu0
        %v4463 = vadd.f32 0.0, %v4462
        %4464 = vmatmul.bf16.gmra.mxu0 %v4359
        %v4465 = vpop.f32.mrf.mxu0
        %v4466 = vadd.f32 0.0, %v4465
        %v4467 = vpop.f32.mrf.mxu0
        %v4468 = vadd.f32 0.0, %v4467
        %4469 = vmatmul.bf16.gmra.mxu0 %v4361
        %v4470 = vpop.f32.mrf.mxu0
        %v4471 = vadd.f32 0.0, %v4470
        %v4472 = vpop.f32.mrf.mxu0
        %v4473 = vadd.f32 0.0, %v4472
        %4474 = vmatmul.bf16.gmra.mxu0 %v4363
        %v4475 = vpop.f32.mrf.mxu0
        %v4476 = vadd.f32 0.0, %v4475
        %v4477 = vpop.f32.mrf.mxu0
        %v4478 = vadd.f32 0.0, %v4477
        %4479 = vmatmul.bf16.gmra.mxu0 %v4365
        %v4480 = vpop.f32.mrf.mxu0
        %v4481 = vadd.f32 0.0, %v4480
        %v4482 = vpop.f32.mrf.mxu0
        %v4483 = vadd.f32 0.0, %v4482
        %4484 = vmatmul.bf16.gmra.mxu0 %v4367
        %v4485 = vpop.f32.mrf.mxu0
        %v4486 = vadd.f32 0.0, %v4485
        %v4487 = vpop.f32.mrf.mxu0
        %v4488 = vadd.f32 0.0, %v4487
        %4489 = vdwg.mxu0
        %4490 = vmatpush.bf16.msra.mxu0 %v4240
        %4491 = vmatpush.bf16.msra.mxu0 %v4239
        %4492 = vmatpush.bf16.msra.mxu0 %v4238
        %4493 = vmatpush.bf16.msra.mxu0 %v4237
        %4494 = vmatpush.bf16.msra.mxu0 %v4236
        %4495 = vmatpush.bf16.msra.mxu0 %v4235
        %4496 = vmatpush.bf16.msra.mxu0 %v4234
        %4497 = vmatpush.bf16.msra.mxu0 %v4233
        %4498 = vmatmul.bf16.gmra.mxu0 %v4338
        %v4499 = vpop.f32.mrf.mxu0
        %v4500 = vadd.f32 %v4411, %v4499
        %v4501 = vpop.f32.mrf.mxu0
        %v4502 = vadd.f32 %v4413, %v4501
        %4503 = vmatmul.bf16.gmra.mxu0 %v4340
        %v4504 = vpop.f32.mrf.mxu0
        %v4505 = vadd.f32 %v4416, %v4504
        %v4506 = vpop.f32.mrf.mxu0
        %v4507 = vadd.f32 %v4418, %v4506
        %4508 = vmatmul.bf16.gmra.mxu0 %v4342
        %v4509 = vpop.f32.mrf.mxu0
        %v4510 = vadd.f32 %v4421, %v4509
        %v4511 = vpop.f32.mrf.mxu0
        %v4512 = vadd.f32 %v4423, %v4511
        %4513 = vmatmul.bf16.gmra.mxu0 %v4344
        %v4514 = vpop.f32.mrf.mxu0
        %v4515 = vadd.f32 %v4426, %v4514
        %v4516 = vpop.f32.mrf.mxu0
        %v4517 = vadd.f32 %v4428, %v4516
        %4518 = vmatmul.bf16.gmra.mxu0 %v4346
        %v4519 = vpop.f32.mrf.mxu0
        %v4520 = vadd.f32 %v4431, %v4519
        %v4521 = vpop.f32.mrf.mxu0
        %v4522 = vadd.f32 %v4433, %v4521
        %4523 = vmatmul.bf16.gmra.mxu0 %v4348
        %v4524 = vpop.f32.mrf.mxu0
        %v4525 = vadd.f32 %v4436, %v4524
        %v4526 = vpop.f32.mrf.mxu0
        %v4527 = vadd.f32 %v4438, %v4526
        %4528 = vmatmul.bf16.gmra.mxu0 %v4350
        %v4529 = vpop.f32.mrf.mxu0
        %v4530 = vadd.f32 %v4441, %v4529
        %v4531 = vpop.f32.mrf.mxu0
        %v4532 = vadd.f32 %v4443, %v4531
        %4533 = vmatmul.bf16.gmra.mxu0 %v4352
        %v4534 = vpop.f32.mrf.mxu0
        %v4535 = vadd.f32 %v4446, %v4534
        %v4536 = vpop.f32.mrf.mxu0
        %v4537 = vadd.f32 %v4448, %v4536
        %4538 = vmatmul.bf16.gmra.mxu0 %v4354
        %v4539 = vpop.f32.mrf.mxu0
        %v4540 = vadd.f32 %v4451, %v4539
        %v4541 = vpop.f32.mrf.mxu0
        %v4542 = vadd.f32 %v4453, %v4541
        %4543 = vmatmul.bf16.gmra.mxu0 %v4356
        %v4544 = vpop.f32.mrf.mxu0
        %v4545 = vadd.f32 %v4456, %v4544
        %v4546 = vpop.f32.mrf.mxu0
        %v4547 = vadd.f32 %v4458, %v4546
        %4548 = vmatmul.bf16.gmra.mxu0 %v4358
        %v4549 = vpop.f32.mrf.mxu0
        %v4550 = vadd.f32 %v4461, %v4549
        %v4551 = vpop.f32.mrf.mxu0
        %v4552 = vadd.f32 %v4463, %v4551
        %4553 = vmatmul.bf16.gmra.mxu0 %v4360
        %v4554 = vpop.f32.mrf.mxu0
        %v4555 = vadd.f32 %v4466, %v4554
        %v4556 = vpop.f32.mrf.mxu0
        %v4557 = vadd.f32 %v4468, %v4556
        %4558 = vmatmul.bf16.gmra.mxu0 %v4362
        %v4559 = vpop.f32.mrf.mxu0
        %v4560 = vadd.f32 %v4471, %v4559
        %v4561 = vpop.f32.mrf.mxu0
        %v4562 = vadd.f32 %v4473, %v4561
        %4563 = vmatmul.bf16.gmra.mxu0 %v4364
        %v4564 = vpop.f32.mrf.mxu0
        %v4565 = vadd.f32 %v4476, %v4564
        %v4566 = vpop.f32.mrf.mxu0
        %v4567 = vadd.f32 %v4478, %v4566
        %4568 = vmatmul.bf16.gmra.mxu0 %v4366
        %v4569 = vpop.f32.mrf.mxu0
        %v4570 = vadd.f32 %v4481, %v4569
        %v4571 = vpop.f32.mrf.mxu0
        %v4572 = vadd.f32 %v4483, %v4571
        %4573 = vmatmul.bf16.gmra.mxu0 %v4368
        %v4574 = vpop.f32.mrf.mxu0
        %v4575 = vadd.f32 %v4486, %v4574
        %v4576 = vpop.f32.mrf.mxu0
        %v4577 = vadd.f32 %v4488, %v4576
        %4578 = vdwg.mxu0
        %v4579 = vadd.f32 %v3503, %v4500
        %v4580 = vadd.f32 %v3504, %v4502
        %v4581 = vadd.f32 %v3505, %v4505
        %v4582 = vadd.f32 %v3506, %v4507
        %v4583 = vadd.f32 %v3507, %v4510
        %v4584 = vadd.f32 %v3508, %v4512
        %v4585 = vadd.f32 %v3509, %v4515
        %v4586 = vadd.f32 %v3510, %v4517
        %v4587 = vadd.f32 %v3511, %v4520
        %v4588 = vadd.f32 %v3512, %v4522
        %v4589 = vadd.f32 %v3513, %v4525
        %v4590 = vadd.f32 %v3514, %v4527
        %v4591 = vadd.f32 %v3515, %v4530
        %v4592 = vadd.f32 %v3516, %v4532
        %v4593 = vadd.f32 %v3517, %v4535
        %v4594 = vadd.f32 %v3518, %v4537
        %v4595 = vadd.f32 %v3519, %v4540
        %v4596 = vadd.f32 %v3520, %v4542
        %v4597 = vadd.f32 %v3521, %v4545
        %v4598 = vadd.f32 %v3522, %v4547
        %v4599 = vadd.f32 %v3523, %v4550
        %v4600 = vadd.f32 %v3524, %v4552
        %v4601 = vadd.f32 %v3525, %v4555
        %v4602 = vadd.f32 %v3526, %v4557
        %v4603 = vadd.f32 %v3527, %v4560
        %v4604 = vadd.f32 %v3528, %v4562
        %v4605 = vadd.f32 %v3529, %v4565
        %v4606 = vadd.f32 %v3530, %v4567
        %v4607 = vadd.f32 %v3531, %v4570
        %v4608 = vadd.f32 %v3532, %v4572
        %v4609 = vadd.f32 %v3533, %v4575
        %v4610 = vadd.f32 %v3534, %v4577
        %4611 = vst [vmem:[%s322] sm:$0xff] %v4579
        %4612 = vst [vmem:[%s322 + $0x8] sm:$0xff] %v4580
        %4613 = vst [vmem:[%s322 + $0x10] sm:$0xff] %v4581
        %4614 = vst [vmem:[%s322 + $0x18] sm:$0xff] %v4582
        %4615 = vst [vmem:[%s322 + $0x20] sm:$0xff] %v4583
        %4616 = vst [vmem:[%s322 + $0x28] sm:$0xff] %v4584
        %4617 = vst [vmem:[%s322 + $0x30] sm:$0xff] %v4585
        %4618 = vst [vmem:[%s322 + $0x38] sm:$0xff] %v4586
        %4619 = vst [vmem:[%s322 + $0x40] sm:$0xff] %v4587
        %4620 = vst [vmem:[%s322 + $0x48] sm:$0xff] %v4588
        %4621 = vst [vmem:[%s322 + $0x50] sm:$0xff] %v4589
        %4622 = vst [vmem:[%s322 + $0x58] sm:$0xff] %v4590
        %4623 = vst [vmem:[%s322 + $0x60] sm:$0xff] %v4591
        %4624 = vst [vmem:[%s322 + $0x68] sm:$0xff] %v4592
        %4625 = vst [vmem:[%s322 + $0x70] sm:$0xff] %v4593
        %4626 = vst [vmem:[%s322 + $0x78] sm:$0xff] %v4594
        %4627 = vst [vmem:[%s322 + $0x80] sm:$0xff] %v4595
        %4628 = vst [vmem:[%s322 + $0x88] sm:$0xff] %v4596
        %4629 = vst [vmem:[%s322 + $0x90] sm:$0xff] %v4597
        %4630 = vst [vmem:[%s322 + $0x98] sm:$0xff] %v4598
        %4631 = vst [vmem:[%s322 + $0xa0] sm:$0xff] %v4599
        %4632 = vst [vmem:[%s322 + $0xa8] sm:$0xff] %v4600
        %4633 = vst [vmem:[%s322 + $0xb0] sm:$0xff] %v4601
        %4634 = vst [vmem:[%s322 + $0xb8] sm:$0xff] %v4602
        %4635 = vst [vmem:[%s322 + $0xc0] sm:$0xff] %v4603
        %4636 = vst [vmem:[%s322 + $0xc8] sm:$0xff] %v4604
        %4637 = vst [vmem:[%s322 + $0xd0] sm:$0xff] %v4605
        %4638 = vst [vmem:[%s322 + $0xd8] sm:$0xff] %v4606
        %4639 = vst [vmem:[%s322 + $0xe0] sm:$0xff] %v4607
        %4640 = vst [vmem:[%s322 + $0xe8] sm:$0xff] %v4608
        %4641 = vst [vmem:[%s322 + $0xf0] sm:$0xff] %v4609
        %4642 = vst [vmem:[%s322 + $0xf8] sm:$0xff] %v4610
        %s4643 = sand.u32 %s166, 1
        %s4644 = scalar_lea.sflag [#allocation4], %s4643
        %s4645 = sand.u32 %s166, 1
        %s4646 = smul.addr %s4645, 256
        %s4647 = scalar_lea.vmem [#allocation8], %s4646
        // Predicated region
        $region53: #{tpu_custom_call.1} parent=39 // pred_check
          %p4648 = pneg %p176
        $region54: #{tpu_custom_call.1} parent=39 // pred_check_branch
          %4650 = sbr.rel (%p4648) target = $region56
        $region55: #{tpu_custom_call.1} parent=39 // pred_region
          %4652 = vsyncadd %s4644, 0
          %s4653 = smul.addr %s29, 64
          %s4654 = sadd.s32 %s30, %s4653
          %s4655 = smul.addr %s4654, 8
          %s4656 = scalar_lea.hbm %s5, %s4655
          %s4657 = sshll.u32 %s4647, 4
          %s4658 = int_to_ptr.vmem [resolvable:$true] %s4657
          %s4659 = sshll.u32 %s4656, 4
          %s4660 = int_to_ptr.hbm [resolvable:$true] %s4659
          %4665 = dma.vmem_to_hbm [thread:$0]  %s4658, 4096, %s4660, %s4644, 128, 256, 8
        $region56: #{tpu_custom_call.1} parent=39 // pred_fallthru
          _
      $region40: #{tpu_custom_call.1} parent=5 // pred_fallthru
        _
      %p4666 = scmp.le.s32.totalorder 2, %s20
      // Predicated region
      $region57: #{tpu_custom_call.1} parent=5 // pred_check
        %p4667 = pneg %p4666
      $region58: #{tpu_custom_call.1} parent=5 // pred_check_branch
        %4669 = sbr.rel (%p4667) target = $region60
      $region59: #{tpu_custom_call.1} parent=5 // pred_region
        %s4670 = ssub.s32 %s20, 2
        // Predicated region
        $region61: #{tpu_custom_call.1} parent=59 // pred_check
          %p4671 = pneg %p182
        $region62: #{tpu_custom_call.1} parent=59 // pred_check_branch
          %4673 = sbr.rel (%p4671) target = $region64
        $region63: #{tpu_custom_call.1} parent=59 // pred_region
          %s4674 = sand.u32 %s167, 1
          %s4675 = scalar_lea.sflag [#allocation4], %s4674
          %s4676 = sand.u32 %s167, 1
          %s4677 = smul.addr %s4676, 256
          %s4678 = scalar_lea.vmem [#allocation8], %s4677
          %4680 = dma.done %s4675, 4096
        $region64: #{tpu_custom_call.1} parent=59 // pred_fallthru
          _
      $region60: #{tpu_custom_call.1} parent=5 // pred_fallthru
        _
    $region6: #{tpu_custom_call.1} parent=1 // loop_footer
      %s24 = sadd.s32 1, %s20
    $region7: #{tpu_custom_call.1} parent=1 // loop_footer_branch
      %19 = sbr.rel target = $region3
    $region8: #{tpu_custom_call.1} parent=1 // loop_exit
      _
    %4681 = vsyncpa [#allocation3], 1
    %s4682 = scalar_lea.sflag [#allocation3], 1
    %4683 = vsyncpa %s4682, 1
    %4684 = vsyncpa [#allocation6], 1
    %s4685 = scalar_lea.sflag [#allocation6], 1
    %4686 = vsyncpa %s4685, 1
    %4687 = vsyncpa [#allocation4], 1
    %s4688 = scalar_lea.sflag [#allocation4], 1
    %4689 = vsyncpa %s4688, 1

</llo_original>
